<compile_context>
chip_gen: v5e
topology: v5e:2x2
jax: 0.10.0
libtpu: 0.0.40
codegen_flags: <defaults>
</compile_context>

<pallas_src>
import numpy as np
import jax
import jax.numpy as jnp
from jax.experimental import pallas as pl
from jax.experimental.pallas import tpu as pltpu


def _freq_bands(N_freqs, logscale):
    if logscale:
        freqs = 2.0 ** np.linspace(0.0, N_freqs - 1, N_freqs)
    else:
        freqs = np.linspace(1.0, 2.0 ** (N_freqs - 1), N_freqs)
    return tuple(float(f) for f in freqs)


def _build_projection(freq_bands, in_channels, k_padded):
    """Build the (Kp, OUT) scale-folded replication matrix and the (1, OUT) phase row.

    Output column layout (group-major, channel-minor), matching torch.cat:
        [ x | sin(f0 x) | cos(f0 x) | sin(f1 x) | cos(f1 x) | ... ]
    S[c, j] = freq_of_group(j) if (j % C) == c else 0, so  x @ S  replicates the C
    channels across all groups and applies the per-frequency scale in one MXU matmul.
    cos columns get a +pi/2 phase (cos(t) == sin(t + pi/2)).
    """
    C = in_channels
    G = 2 * len(freq_bands) + 1
    OUT = C * G

    S = np.zeros((k_padded, OUT), dtype=np.float32)
    phase = np.zeros((1, OUT), dtype=np.float32)
    eye = np.eye(C, dtype=np.float32)

    S[:C, :C] = eye                                  # identity group: scale 1, phase 0
    for i, f in enumerate(freq_bands):
        s0 = C * (1 + 2 * i)                         # sin(f_i * x) group
        c0 = C * (2 + 2 * i)                         # cos(f_i * x) group
        S[:C, s0:s0 + C] = f * eye
        S[:C, c0:c0 + C] = f * eye
        phase[:, c0:c0 + C] = np.float32(np.pi / 2.0)
    return S, phase


def _make_embedding_kernel(in_channels):
    """Kernel factory.  Only python scalars are closed over (no captured arrays)."""
    C = in_channels

    def kernel(s_ref, phase_ref, x_ref, o_ref):
        x = x_ref[...].astype(jnp.float32)                     # (tb, Kp)
        # MXU does the C -> OUT replication *and* the frequency scaling in one matmul.
        # Each output column has exactly one nonzero term in the K reduction, so the
        # f32 result is numerically equivalent to a plain multiply.
        arg = jnp.dot(x, s_ref[...], preferred_element_type=jnp.float32)  # (tb, OUT)
        arg = arg + phase_ref[...]                             # +pi/2 on cos columns
        col = jax.lax.broadcasted_iota(jnp.int32, arg.shape, 1)
        # Identity columns have scale 1 / phase 0, so `arg` there is just x.
        out = jnp.where(col < C, arg, jnp.sin(arg))            # one transcendental pass
        o_ref[...] = out.astype(o_ref.dtype)

    return kernel


def _pick_block_b(B, requested, min_steps=4):
    """Batch-tile picker.

    Keeps at least `min_steps` grid steps when the batch is big enough (restores
    DMA/compute overlap and lets v7x's two TensorCores split the parallel grid),
    caps the tile at 8192 rows (128-lane-padded buffers stay << v7x's 64 MiB VMEM),
    and keeps multi-step tiles 8-row aligned for the (8, 128) constraint.
    """
    bb = int(min(int(requested), B))
    if B > 256:
        per_step = max(256, (B // min_steps) // 8 * 8)
        bb = min(bb, per_step)
    bb = min(bb, 8192)
    if bb < B:
        bb = max(8, (bb // 8) * 8)
    return max(bb, 1)


def embedding_forward(x, N_freqs, logscale=True, block_b=4096, out_dtype=None):
    """Pallas equivalent of Embedding.forward.

    x: (B, C) float array.  Returns (B, C * (2*N_freqs + 1)).
    out_dtype: pass jnp.bfloat16 to halve output write traffic on write-bound chips.
    """
    B, C = x.shape
    freqs = _freq_bands(N_freqs, logscale)
    OUT = C * (2 * N_freqs + 1)
    out_dtype = x.dtype if out_dtype is None else out_dtype

    # Pad channels to a multiple of 8 (sublane-aligned MXU K); zero rows in S keep
    # the math identical.  Costs nothing in VMEM (tile is 128-lane padded anyway).
    Kp = ((C + 7) // 8) * 8
    S_np, phase_np = _build_projection(freqs, C, Kp)
    S = jnp.asarray(S_np)
    phase = jnp.asarray(phase_np)

    block_b = _pick_block_b(B, block_b)
    grid_b = pl.cdiv(B, block_b)
    Bp = grid_b * block_b

    # Pad ragged batches to whole tiles and channels to Kp (sliced off / zero-masked).
    if Bp != B or Kp != C:
        xp = jnp.pad(x, ((0, Bp - B), (0, Kp - C)))
    else:
        xp = x

    cost = pl.CostEstimate(
        flops=int(2 * Bp * Kp * OUT + 2 * Bp * OUT),
        transcendentals=int(Bp * OUT),
        bytes_accessed=int(Bp * Kp * np.dtype(x.dtype).itemsize
                           + Bp * OUT * np.dtype(out_dtype).itemsize),
    )

    out = pl.pallas_call(
        _make_embedding_kernel(C),
        out_shape=jax.ShapeDtypeStruct((Bp, OUT), out_dtype),
        grid=(grid_b,),
        in_specs=[
            pl.BlockSpec((Kp, OUT), lambda i: (0, 0)),        # S (tiny, resident)
            pl.BlockSpec((1, OUT), lambda i: (0, 0)),         # phase row
            pl.BlockSpec((block_b, Kp), lambda i: (i, 0)),    # x batch tile
        ],
        out_specs=pl.BlockSpec((block_b, OUT), lambda i: (i, 0)),
        compiler_params=pltpu.CompilerParams(
            dimension_semantics=("parallel",),
            vmem_limit_bytes=32 * 1024 * 1024,
        ),
        cost_estimate=cost,
    )(S, phase, xp)
    return out if Bp == B else out[:B]


def embedding_reference(x, N_freqs, logscale=True):
    """Pure-JAX reference mirroring the PyTorch module (true sin/cos)."""
    freqs = _freq_bands(N_freqs, logscale)
    out = [x]
    for f in freqs:
        out.append(jnp.sin(f * x))
        out.append(jnp.cos(f * x))
    return jnp.concatenate(out, axis=-1)


if __name__ == "__main__":
    key = jax.random.PRNGKey(0)

    # NeRF-typical usage: xyz coordinates in [-1, 1], C=3, N_freqs=10
    # -> out_channels = 3 * (2*10 + 1) = 63.
    B, C, N_freqs = 1000, 3, 10
    x = jax.random.uniform(key, (B, C), jnp.float32, minval=-1.0, maxval=1.0)

    # Multi-tile + ragged path (1000 rows, 256-row tiles -> grid of 4, padded).
    out = embedding_forward(x, N_freqs, logscale=True, block_b=256)
    out = jax.block_until_ready(out)
    ref = embedding_reference(x, N_freqs, logscale=True)
    assert out.shape == (B, C * (2 * N_freqs + 1)), out.shape
    # cos is evaluated as sin(t + pi/2); for |t| up to ~512 the f32 rounding of
    # the pi/2 add bounds the difference vs. a direct cos at ~3e-5 absolute.
    np.testing.assert_allclose(np.asarray(out), np.asarray(ref),
                               rtol=1e-5, atol=2e-4)

    # logscale=False branch with the default tile picker (still >= 4 grid steps).
    out2 = jax.block_until_ready(embedding_forward(x, 4, logscale=False))
    ref2 = embedding_reference(x, 4, logscale=False)
    assert out2.shape == (B, C * (2 * 4 + 1)), out2.shape
    np.testing.assert_allclose(np.asarray(out2), np.asarray(ref2),
                               rtol=1e-5, atol=2e-4)

    print("KERNEL_OK")
</pallas_src>

<mosaic_0001>
module attributes {stable_mosaic.version = 11 : i64} {
  func.func @kernel(%arg0: i32, %arg1: memref<8x63xf32, #tpu.memory_space<vmem>>, %arg2: memref<1x63xf32, #tpu.memory_space<vmem>>, %arg3: memref<256x8xf32, #tpu.memory_space<vmem>>, %arg4: memref<256x63xf32, #tpu.memory_space<vmem>>) attributes {dimension_semantics = [#tpu.dimension_semantics<parallel>], iteration_bounds = array<i64: 4>, scalar_prefetch = 0 : i64, scratch_operands = 0 : i64, tpu.core_type = #tpu.core_type<tc>, window_params = [{pipeline_mode = #tpu.pipeline_mode<synchronous>, transform_indices = @transform_0, window_bounds = array<i64: 8, 63>}, {pipeline_mode = #tpu.pipeline_mode<synchronous>, transform_indices = @transform_1, window_bounds = array<i64: 1, 63>}, {transform_indices = @transform_2, window_bounds = array<i64: 256, 8>}, {transform_indices = @transform_3, window_bounds = array<i64: 256, 63>}]} {
    %c0 = arith.constant 0 : index
    %c0_0 = arith.constant 0 : index
    %0 = vector.load %arg3[%c0, %c0_0] : memref<256x8xf32, #tpu.memory_space<vmem>>, vector<256x8xf32>
    %c0_1 = arith.constant 0 : index
    %c0_2 = arith.constant 0 : index
    %1 = vector.load %arg1[%c0_1, %c0_2] : memref<8x63xf32, #tpu.memory_space<vmem>>, vector<8x63xf32>
    %cst = arith.constant dense<0.000000e+00> : vector<256x63xf32>
    %2 = tpu.matmul %0, %1, %cst {dimension_numbers = #tpu.dot_dimension_numbers<[1], [0], [0], [1], [0, 0, 1, 1], [], []>} : vector<256x8xf32>, vector<8x63xf32>, vector<256x63xf32> -> vector<256x63xf32>
    %c0_3 = arith.constant 0 : index
    %c0_4 = arith.constant 0 : index
    %3 = vector.load %arg2[%c0_3, %c0_4] : memref<1x63xf32, #tpu.memory_space<vmem>>, vector<1x63xf32>
    %4 = vector.broadcast %3 : vector<1x63xf32> to vector<256x63xf32>
    %5 = arith.addf %2, %4 : vector<256x63xf32>
    %6 = tpu.iota {dimensions = array<i32: 1>} : vector<256x63xi32>
    %c3_i32 = arith.constant 3 : i32
    %7 = vector.broadcast %c3_i32 : i32 to vector<256x63xi32>
    %8 = arith.cmpi slt, %6, %7 : vector<256x63xi32>
    %9 = math.sin %5 : vector<256x63xf32>
    %10 = arith.select %8, %5, %9 : vector<256x63xi1>, vector<256x63xf32>
    %c0_5 = arith.constant 0 : index
    %c0_6 = arith.constant 0 : index
    %11 = vector.load %arg4[%c0_5, %c0_6] : memref<256x63xf32, #tpu.memory_space<vmem>>, vector<256x63xf32>
    tpu.vector_store %arg4[%c0_5, %c0_6], %10 {strides = array<i32>} : memref<256x63xf32, #tpu.memory_space<vmem>>, vector<256x63xf32>,
    return
  }
  func.func @transform_0(%arg0: i32) -> (i32, i32) {
    %c0_i32 = arith.constant 0 : i32
    %c0_i32_0 = arith.constant 0 : i32
    %c0_i32_1 = arith.constant 0 : i32
    return %c0_i32, %c0_i32_0 : i32, i32
  }
  func.func @transform_1(%arg0: i32) -> (i32, i32) {
    %c0_i32 = arith.constant 0 : i32
    %c0_i32_0 = arith.constant 0 : i32
    %c0_i32_1 = arith.constant 0 : i32
    return %c0_i32, %c0_i32_0 : i32, i32
  }
  func.func @transform_2(%arg0: i32) -> (i32, i32) {
    %c0_i32 = arith.constant 0 : i32
    %c0_i32_0 = arith.constant 0 : i32
    return %arg0, %c0_i32 : i32, i32
  }
  func.func @transform_3(%arg0: i32) -> (i32, i32) {
    %c0_i32 = arith.constant 0 : i32
    %c0_i32_0 = arith.constant 0 : i32
    return %arg0, %c0_i32 : i32, i32
  }
}

</mosaic_0001>

<llo_original>
// kernel: tpu_custom_call.1
$region0: #{tpu_custom_call.1}
  #allocation0 [shape = 'u32[]', space=smem, size = 0x4, offset = 0x4, fixed_abs, tag = 'smem constant byte address 0x4 - core index']
  #allocation1 [shape = 'u32[72,128]{1,0:T(1,128)}', space=vmem, size = 0x9000, scoped, tag = 'internal scratch']
  %s0 = inlined_call_operand.vmem [shape: f32[8,63], index: 0, kind: input, shape index: {}]
  %s1 = inlined_call_operand.vmem [shape: f32[1,63], index: 1, kind: input, shape index: {}]
  %s2 = inlined_call_operand.vmem [shape: f32[1024,8], index: 2, kind: input, shape index: {}]
  %s3 = inlined_call_operand.vmem [shape: f32[1024,63], index: 3, kind: output, shape index: {}]
  %s4 = sld [smem:[#allocation0]]
  $region45: #{tpu_custom_call.1} parent=0
    _
  %s6 = ssub.s32 1, %s4
  %s7 = scalar_select 0, %s6, %s4
  loop: start=0, step=1, limit=6
  $region2: #{tpu_custom_call.1} parent=0 // loop_pre_header
    _
  $region3: #{tpu_custom_call.1} parent=0 // loop_header
    %s9 = sphi 0, %s13
    %p10 = scmp.ge.s32.totalorder %s9, 6
    %s17 = sphi 0, %s17
    %s19 = sphi 0, %s17
    %s20 = sphi 0, %s19
    %s34 = sphi 0, %s20
    %s38 = sphi 0, %s38
    %s40 = sphi 0, %s38
    %s41 = sphi 0, %s40
    %s55 = sphi 0, %s41
    %s61 = sphi 0, %s63
    %s64 = sphi 0, %s61
    %s65 = sphi 0, %s64
    %s81 = sphi 0, %s65
    %s87 = sphi 0, %s89
    %s90 = sphi 0, %s87
    %s91 = sphi 0, %s90
    %s107 = sphi 0, %s91
  $region4: #{tpu_custom_call.1} parent=0 // loop_header_branch
    %12 = sbr.rel (%p10) target = $region8
  $region5: #{tpu_custom_call.1} parent=0 // loop_body
    %s14 = ssub.s32 %s9, 1
    %s15 = ssub.s32 %s9, 2
    %s16 = sadd.s32 %s9, 1
    %s18 = sadd.s32 %s17, 1
    %p21 = scmp.eq.s32.totalorder %s9, 3
    %p22 = scmp.ne.s32.totalorder %s17, %s19
    %p23 = scmp.eq.s32.totalorder %s9, 0
    %p24 = por %p22, %p23
    %p25 = scmp.ne.s32.totalorder %s17, %s19
    %p26 = scmp.eq.s32.totalorder %s14, 3
    %p27 = por %p25, %p26
    %p28 = scmp.ne.s32.totalorder %s19, %s20
    %p29 = scmp.eq.s32.totalorder %s14, 0
    %p30 = por %p28, %p29
    %p31 = scmp.ne.s32.totalorder %s19, %s20
    %p32 = scmp.eq.s32.totalorder %s15, 3
    %p33 = por %p31, %p32
    %p35 = scmp.ne.s32.totalorder %s20, %s34
    %p36 = scmp.eq.s32.totalorder %s15, 0
    %p37 = por %p35, %p36
    %s39 = sadd.s32 %s38, 1
    %p42 = scmp.eq.s32.totalorder %s9, 3
    %p43 = scmp.ne.s32.totalorder %s38, %s40
    %p44 = scmp.eq.s32.totalorder %s9, 0
    %p45 = por %p43, %p44
    %p46 = scmp.ne.s32.totalorder %s38, %s40
    %p47 = scmp.eq.s32.totalorder %s14, 3
    %p48 = por %p46, %p47
    %p49 = scmp.ne.s32.totalorder %s40, %s41
    %p50 = scmp.eq.s32.totalorder %s14, 0
    %p51 = por %p49, %p50
    %p52 = scmp.ne.s32.totalorder %s40, %s41
    %p53 = scmp.eq.s32.totalorder %s15, 3
    %p54 = por %p52, %p53
    %p56 = scmp.ne.s32.totalorder %s41, %s55
    %p57 = scmp.eq.s32.totalorder %s15, 0
    %p58 = por %p56, %p57
    %s59 = ssub.s32 %s9, %s16
    %p60 = scmp.eq.s32.totalorder %s59, 0
    %s62 = sadd.s32 %s61, 1
    %s63 = scalar_select %p60, %s61, %s62
    %p66 = pneg %p60
    %p67 = scmp.eq.s32.totalorder %s9, 3
    %p68 = por %p66, %p67
    %p69 = scmp.ne.s32.totalorder %s61, %s64
    %p70 = scmp.eq.s32.totalorder %s9, 0
    %p71 = por %p69, %p70
    %p72 = scmp.ne.s32.totalorder %s61, %s64
    %p73 = scmp.eq.s32.totalorder %s14, 3
    %p74 = por %p72, %p73
    %p75 = scmp.ne.s32.totalorder %s64, %s65
    %p76 = scmp.eq.s32.totalorder %s14, 0
    %p77 = por %p75, %p76
    %p78 = scmp.ne.s32.totalorder %s64, %s65
    %p79 = scmp.eq.s32.totalorder %s15, 3
    %p80 = por %p78, %p79
    %p82 = scmp.ne.s32.totalorder %s65, %s81
    %p83 = scmp.eq.s32.totalorder %s15, 0
    %p84 = por %p82, %p83
    %s85 = ssub.s32 %s9, %s16
    %p86 = scmp.eq.s32.totalorder %s85, 0
    %s88 = sadd.s32 %s87, 1
    %s89 = scalar_select %p86, %s87, %s88
    %p92 = pneg %p86
    %p93 = scmp.eq.s32.totalorder %s9, 3
    %p94 = por %p92, %p93
    %p95 = scmp.ne.s32.totalorder %s87, %s90
    %p96 = scmp.eq.s32.totalorder %s9, 0
    %p97 = por %p95, %p96
    %p98 = scmp.ne.s32.totalorder %s87, %s90
    %p99 = scmp.eq.s32.totalorder %s14, 3
    %p100 = por %p98, %p99
    %p101 = scmp.ne.s32.totalorder %s90, %s91
    %p102 = scmp.eq.s32.totalorder %s14, 0
    %p103 = por %p101, %p102
    %p104 = scmp.ne.s32.totalorder %s90, %s91
    %p105 = scmp.eq.s32.totalorder %s15, 3
    %p106 = por %p104, %p105
    %p108 = scmp.ne.s32.totalorder %s91, %s107
    %p109 = scmp.eq.s32.totalorder %s15, 0
    %p110 = por %p108, %p109
    %p111 = scmp.le.s32.totalorder 1, %s9
    %p112 = scmp.lt.s32.totalorder %s9, 5
    %p113 = pnand %p111, %p112
    %p114 = pneg %p113
    // Predicated region
    $region9: #{tpu_custom_call.1} parent=5 // pred_check
      _
    $region10: #{tpu_custom_call.1} parent=5 // pred_check_branch
      %116 = sbr.rel (%p113) target = $region12
    $region11: #{tpu_custom_call.1} parent=5 // pred_region
      %s117 = ssub.s32 %s9, 1
      // Predicated region
      $region13: #{tpu_custom_call.1} parent=11 // pred_check
        %p118 = pneg %p30
      $region14: #{tpu_custom_call.1} parent=11 // pred_check_branch
        %120 = sbr.rel (%p118) target = $region16
      $region15: #{tpu_custom_call.1} parent=11 // pred_region
        _
      $region16: #{tpu_custom_call.1} parent=11 // pred_fallthru
        _
      // Predicated region
      $region17: #{tpu_custom_call.1} parent=11 // pred_check
        %p121 = pneg %p51
      $region18: #{tpu_custom_call.1} parent=11 // pred_check_branch
        %123 = sbr.rel (%p121) target = $region20
      $region19: #{tpu_custom_call.1} parent=11 // pred_region
        _
      $region20: #{tpu_custom_call.1} parent=11 // pred_fallthru
        _
    $region12: #{tpu_custom_call.1} parent=5 // pred_fallthru
      _
    %p124 = scmp.lt.s32.totalorder %s9, 4
    // Predicated region
    $region21: #{tpu_custom_call.1} parent=5 // pred_check
      %p125 = pneg %p124
    $region22: #{tpu_custom_call.1} parent=5 // pred_check_branch
      %127 = sbr.rel (%p125) target = $region24
    $region23: #{tpu_custom_call.1} parent=5 // pred_region
      // Predicated region
      $region25: #{tpu_custom_call.1} parent=23 // pred_check
        %p128 = pneg %p71
      $region26: #{tpu_custom_call.1} parent=23 // pred_check_branch
        %130 = sbr.rel (%p128) target = $region28
      $region27: #{tpu_custom_call.1} parent=23 // pred_region
        %s131 = smul.u32 32, %s9
        %p132 = scmp.lt.s32.totalorder %s131, 127
        %s133 = scalar_select %p132, %s131, 127
        %s134 = smul.addr %s133, 8
        %s135 = scalar_lea.vmem %s2, %s134
        %s136 = smul.u32 32, %s9
      $region28: #{tpu_custom_call.1} parent=23 // pred_fallthru
        _
    $region24: #{tpu_custom_call.1} parent=5 // pred_fallthru
      _
    %p137 = scmp.le.s32.totalorder 1, %s9
    %p138 = scmp.lt.s32.totalorder %s9, 5
    %p139 = pnand %p137, %p138
    %p140 = pneg %p139
    // Predicated region
    $region29: #{tpu_custom_call.1} parent=5 // pred_check
      _
    $region30: #{tpu_custom_call.1} parent=5 // pred_check_branch
      %142 = sbr.rel (%p139) target = $region32
    $region31: #{tpu_custom_call.1} parent=5 // pred_region
      %s143 = ssub.s32 %s9, 1
      %p144 = pneg %p30
      %p145 = pneg %p27
      %p146 = pneg %p51
      %p147 = pneg %p48
      %s148 = smul.u32 32, %s14
      %p149 = scmp.lt.s32.totalorder %s148, 127
      %s150 = scalar_select %p149, %s148, 127
      %s151 = smul.addr %s150, 8
      %s152 = scalar_lea.vmem %s2, %s151
      %p153 = pneg %p77
      %p154 = pneg %p74
      %p155 = pneg %p103
      %p156 = pneg %p100
      %s157 = smul.u32 32, %s14
      %p158 = scmp.lt.s32.totalorder %s157, 127
      %s159 = scalar_select %p158, %s157, 127
      %s160 = smul.addr %s159, 8
      %s161 = scalar_lea.vmem %s3, %s160
      %s162 = smul.u32 32, %s14
      %p163 = scmp.lt.s32.totalorder %s162, 127
      %s164 = scalar_select %p163, %s162, 127
      %s165 = smul.addr %s164, 8
      %s166 = scalar_lea.vmem %s2, %s165
      %s167 = smul.u32 32, %s14
      %s168 = smul.u32 32, %s14
      %p169 = scmp.lt.s32.totalorder %s168, 127
      %s170 = scalar_select %p169, %s168, 127
      %s171 = smul.addr %s170, 8
      %s172 = scalar_lea.vmem %s3, %s171
      %s173 = smul.u32 32, %s14
      %v174 = vld [vmem:[%s166] sm:$0xff]
      %v175 = vld [vmem:[%s166 + $0x8] sm:$0xff]
      %v176 = vld [vmem:[%s166 + $0x10] sm:$0xff]
      %v177 = vld [vmem:[%s166 + $0x18] sm:$0xff]
      %v178 = vld [vmem:[%s166 + $0x20] sm:$0xff]
      %v179 = vld [vmem:[%s166 + $0x28] sm:$0xff]
      %v180 = vld [vmem:[%s166 + $0x30] sm:$0xff]
      %v181 = vld [vmem:[%s166 + $0x38] sm:$0xff]
      %v182 = vld [vmem:[%s166 + $0x40] sm:$0xff]
      %v183 = vld [vmem:[%s166 + $0x48] sm:$0xff]
      %v184 = vld [vmem:[%s166 + $0x50] sm:$0xff]
      %v185 = vld [vmem:[%s166 + $0x58] sm:$0xff]
      %v186 = vld [vmem:[%s166 + $0x60] sm:$0xff]
      %v187 = vld [vmem:[%s166 + $0x68] sm:$0xff]
      %v188 = vld [vmem:[%s166 + $0x70] sm:$0xff]
      %v189 = vld [vmem:[%s166 + $0x78] sm:$0xff]
      %v190 = vld [vmem:[%s166 + $0x80] sm:$0xff]
      %v191 = vld [vmem:[%s166 + $0x88] sm:$0xff]
      %v192 = vld [vmem:[%s166 + $0x90] sm:$0xff]
      %v193 = vld [vmem:[%s166 + $0x98] sm:$0xff]
      %v194 = vld [vmem:[%s166 + $0xa0] sm:$0xff]
      %v195 = vld [vmem:[%s166 + $0xa8] sm:$0xff]
      %v196 = vld [vmem:[%s166 + $0xb0] sm:$0xff]
      %v197 = vld [vmem:[%s166 + $0xb8] sm:$0xff]
      %v198 = vld [vmem:[%s166 + $0xc0] sm:$0xff]
      %v199 = vld [vmem:[%s166 + $0xc8] sm:$0xff]
      %v200 = vld [vmem:[%s166 + $0xd0] sm:$0xff]
      %v201 = vld [vmem:[%s166 + $0xd8] sm:$0xff]
      %v202 = vld [vmem:[%s166 + $0xe0] sm:$0xff]
      %v203 = vld [vmem:[%s166 + $0xe8] sm:$0xff]
      %v204 = vld [vmem:[%s166 + $0xf0] sm:$0xff]
      %v205 = vld [vmem:[%s166 + $0xf8] sm:$0xff]
      %v206 = vld [vmem:[%s0] sm:$0xff]
      %v207 = vld [vmem:[%s1] sm:$0x1]
      %v209 = vperm.slane %v207, 0
      %vm211 = vcmask 64512
      %v213 = vsel %vm211, %v174, 0
      %v216 = vsel %vm211, %v175, 0
      %v219 = vsel %vm211, %v176, 0
      %v222 = vsel %vm211, %v177, 0
      %v225 = vsel %vm211, %v178, 0
      %v228 = vsel %vm211, %v179, 0
      %v231 = vsel %vm211, %v180, 0
      %v234 = vsel %vm211, %v181, 0
      %v237 = vsel %vm211, %v182, 0
      %v240 = vsel %vm211, %v183, 0
      %v243 = vsel %vm211, %v184, 0
      %v246 = vsel %vm211, %v185, 0
      %v249 = vsel %vm211, %v186, 0
      %v252 = vsel %vm211, %v187, 0
      %v255 = vsel %vm211, %v188, 0
      %v258 = vsel %vm211, %v189, 0
      %v261 = vsel %vm211, %v190, 0
      %v264 = vsel %vm211, %v191, 0
      %v267 = vsel %vm211, %v192, 0
      %v270 = vsel %vm211, %v193, 0
      %v273 = vsel %vm211, %v194, 0
      %v276 = vsel %vm211, %v195, 0
      %v279 = vsel %vm211, %v196, 0
      %v282 = vsel %vm211, %v197, 0
      %v285 = vsel %vm211, %v198, 0
      %v288 = vsel %vm211, %v199, 0
      %v291 = vsel %vm211, %v200, 0
      %v294 = vsel %vm211, %v201, 0
      %v297 = vsel %vm211, %v202, 0
      %v300 = vsel %vm211, %v203, 0
      %v303 = vsel %vm211, %v204, 0
      %v306 = vsel %vm211, %v205, 0
      %308 = vmatpush.msra.mxu0 0.0
      %309 = vmatpush.msra.mxu0 0.0
      %310 = vmatpush.msra.mxu0 0.0
      %311 = vmatpush.msra.mxu0 0.0
      %312 = vmatpush.msra.mxu0 0.0
      %313 = vmatpush.msra.mxu0 0.0
      %314 = vmatpush.msra.mxu0 0.0
      %315 = vmatpush.msra.mxu0 0.0
      %316 = vmatpush.msra.mxu0 0.0
      %317 = vmatpush.msra.mxu0 0.0
      %318 = vmatpush.msra.mxu0 0.0
      %319 = vmatpush.msra.mxu0 0.0
      %320 = vmatpush.msra.mxu0 0.0
      %321 = vmatpush.msra.mxu0 0.0
      %322 = vmatpush.msra.mxu0 0.0
      %323 = vmatpush.msra.mxu0 %v206
      %324 = vmatmul.f32.gmra.mxu0 %v213
      %v325 = vpop.f32.mrf.mxu0
      %v326 = vadd.f32 %v209, %v325
      %327 = vmatmul.f32.gmra.mxu0 %v216
      %v328 = vpop.f32.mrf.mxu0
      %v329 = vadd.f32 %v209, %v328
      %330 = vmatmul.f32.gmra.mxu0 %v219
      %v331 = vpop.f32.mrf.mxu0
      %v332 = vadd.f32 %v209, %v331
      %333 = vmatmul.f32.gmra.mxu0 %v222
      %v334 = vpop.f32.mrf.mxu0
      %v335 = vadd.f32 %v209, %v334
      %336 = vmatmul.f32.gmra.mxu0 %v225
      %v337 = vpop.f32.mrf.mxu0
      %v338 = vadd.f32 %v209, %v337
      %339 = vmatmul.f32.gmra.mxu0 %v228
      %v340 = vpop.f32.mrf.mxu0
      %v341 = vadd.f32 %v209, %v340
      %342 = vmatmul.f32.gmra.mxu0 %v231
      %v343 = vpop.f32.mrf.mxu0
      %v344 = vadd.f32 %v209, %v343
      %345 = vmatmul.f32.gmra.mxu0 %v234
      %v346 = vpop.f32.mrf.mxu0
      %v347 = vadd.f32 %v209, %v346
      %348 = vmatmul.f32.gmra.mxu0 %v237
      %v349 = vpop.f32.mrf.mxu0
      %v350 = vadd.f32 %v209, %v349
      %351 = vmatmul.f32.gmra.mxu0 %v240
      %v352 = vpop.f32.mrf.mxu0
      %v353 = vadd.f32 %v209, %v352
      %354 = vmatmul.f32.gmra.mxu0 %v243
      %v355 = vpop.f32.mrf.mxu0
      %v356 = vadd.f32 %v209, %v355
      %357 = vmatmul.f32.gmra.mxu0 %v246
      %v358 = vpop.f32.mrf.mxu0
      %v359 = vadd.f32 %v209, %v358
      %360 = vmatmul.f32.gmra.mxu0 %v249
      %v361 = vpop.f32.mrf.mxu0
      %v362 = vadd.f32 %v209, %v361
      %363 = vmatmul.f32.gmra.mxu0 %v252
      %v364 = vpop.f32.mrf.mxu0
      %v365 = vadd.f32 %v209, %v364
      %366 = vmatmul.f32.gmra.mxu0 %v255
      %v367 = vpop.f32.mrf.mxu0
      %v368 = vadd.f32 %v209, %v367
      %369 = vmatmul.f32.gmra.mxu0 %v258
      %v370 = vpop.f32.mrf.mxu0
      %v371 = vadd.f32 %v209, %v370
      %372 = vmatmul.f32.gmra.mxu0 %v261
      %v373 = vpop.f32.mrf.mxu0
      %v374 = vadd.f32 %v209, %v373
      %375 = vmatmul.f32.gmra.mxu0 %v264
      %v376 = vpop.f32.mrf.mxu0
      %v377 = vadd.f32 %v209, %v376
      %378 = vmatmul.f32.gmra.mxu0 %v267
      %v379 = vpop.f32.mrf.mxu0
      %v380 = vadd.f32 %v209, %v379
      %381 = vmatmul.f32.gmra.mxu0 %v270
      %v382 = vpop.f32.mrf.mxu0
      %v383 = vadd.f32 %v209, %v382
      %384 = vmatmul.f32.gmra.mxu0 %v273
      %v385 = vpop.f32.mrf.mxu0
      %v386 = vadd.f32 %v209, %v385
      %387 = vmatmul.f32.gmra.mxu0 %v276
      %v388 = vpop.f32.mrf.mxu0
      %v389 = vadd.f32 %v209, %v388
      %390 = vmatmul.f32.gmra.mxu0 %v279
      %v391 = vpop.f32.mrf.mxu0
      %v392 = vadd.f32 %v209, %v391
      %393 = vmatmul.f32.gmra.mxu0 %v282
      %v394 = vpop.f32.mrf.mxu0
      %v395 = vadd.f32 %v209, %v394
      %396 = vmatmul.f32.gmra.mxu0 %v285
      %v397 = vpop.f32.mrf.mxu0
      %v398 = vadd.f32 %v209, %v397
      %399 = vmatmul.f32.gmra.mxu0 %v288
      %v400 = vpop.f32.mrf.mxu0
      %v401 = vadd.f32 %v209, %v400
      %402 = vmatmul.f32.gmra.mxu0 %v291
      %v403 = vpop.f32.mrf.mxu0
      %v404 = vadd.f32 %v209, %v403
      %405 = vmatmul.f32.gmra.mxu0 %v294
      %v406 = vpop.f32.mrf.mxu0
      %v407 = vadd.f32 %v209, %v406
      %408 = vmatmul.f32.gmra.mxu0 %v297
      %v409 = vpop.f32.mrf.mxu0
      %v410 = vadd.f32 %v209, %v409
      %411 = vmatmul.f32.gmra.mxu0 %v300
      %v412 = vpop.f32.mrf.mxu0
      %v413 = vadd.f32 %v209, %v412
      %414 = vmatmul.f32.gmra.mxu0 %v303
      %v415 = vpop.f32.mrf.mxu0
      %v416 = vadd.f32 %v209, %v415
      %417 = vmatmul.f32.gmra.mxu0 %v306
      %v418 = vpop.f32.mrf.mxu0
      %v419 = vadd.f32 %v209, %v418
      %420 = vdwg.mxu0
      %v421 = vlaneseq
      %v422 = vand.u32 %v421, 127
      %vm423 = vcmp.lt.s32.totalorder %v422, 3
      %v424 = vand.u32 2147483647, %v326
      %vm425 = vcmp.le.f32.partialorder %v424, 0.7853982
      %vm426 = vcmp.lt.s32.totalorder %v326, 0
      %v427 = vand.u32 %v326, 2139095040
      %v428 = vshrl.u32 %v427, 23
      %v429 = vsub.s32 %v428, 127
      %v430 = vand.u32 2147483647, %v326
      %v431 = vand.u32 %v430, 8388607
      %v432 = vor.u32 %v431, 8388608
      %v433 = vsub.s32 0, %v432
      %v434 = vadd.s32 %v429, 1
      %vm435 = vcmp.gt.s32.totalorder %v434, 0
      %v436 = vsel %vm435, %v434, 0
      %v437 = vshrl.u32 %v436, 5
      %v438 = vand.u32 %v436, 31
      %v439 = vsub.s32 32, %v438
      %v440 = vshrl.u32 683565275, %v439
      %v441 = vshll.u32 683565275, %v438
      %v442 = vshrl.u32 2475754826, %v439
      %v443 = vor.u32 %v441, %v442
      %v444 = vshll.u32 2475754826, %v438
      %v445 = vshrl.u32 2131351028, %v439
      %v446 = vor.u32 %v444, %v445
      %v447 = vshll.u32 2131351028, %v438
      %v448 = vshrl.u32 2102212464, %v439
      %v449 = vor.u32 %v447, %v448
      %v450 = vshll.u32 2102212464, %v438
      %v451 = vshrl.u32 920167782, %v439
      %v452 = vor.u32 %v450, %v451
      %v453 = vshll.u32 920167782, %v438
      %v454 = vshrl.u32 1326507024, %v439
      %v455 = vor.u32 %v453, %v454
      %vm456 = vcmp.lt.s32.totalorder %v437, 1
      %vm457 = vcmp.lt.s32.totalorder %v437, 2
      %vm458 = vcmp.lt.s32.totalorder %v437, 3
      %vm459 = vcmp.lt.s32.totalorder %v437, 4
      %v460 = vsel %vm456, %v440, %v443
      %v461 = vsel %vm459, %v449, 2102212464
      %v462 = vsel %vm458, %v446, %v461
      %v463 = vsel %vm457, %v460, %v462
      %v464 = vsel %vm456, %v443, %v446
      %v465 = vsel %vm459, %v452, 920167782
      %v466 = vsel %vm458, %v449, %v465
      %v467 = vsel %vm457, %v464, %v466
      %v468 = vsel %vm456, %v446, %v449
      %v469 = vsel %vm459, %v455, 1326507024
      %v470 = vsel %vm458, %v452, %v469
      %v471 = vsel %vm457, %v468, %v470
      %v472 = vshll.u32 %v432, 8
      %v473 = vand.u32 %v472, 65535
      %v474 = vshrl.u32 %v472, 16
      %v475 = vand.u32 %v471, 65535
      %v476 = vshrl.u32 %v471, 16
      %v477 = vmul.u32 %v473, %v475
      %v478 = vmul.u32 %v473, %v476
      %v479 = vmul.u32 %v474, %v475
      %v480 = vmul.u32 %v474, %v476
      %v481 = vshll.u32 %v478, 16
      %v482 = vshrl.u32 %v478, 16
      %v483 = vshll.u32 %v479, 16
      %v484 = vshrl.u32 %v479, 16
      %vm485 = vc.u32 %v477, %v481
      %v486 = vsel %vm485, 1, 0
      %v487 = vadd.s32 %v477, %v481
      %v488 = vadd.s32 %v480, %v486
      %vm489 = vc.u32 %v487, %v483
      %v490 = vsel %vm489, 1, 0
      %v491 = vadd.s32 %v487, %v483
      %v492 = vadd.s32 %v488, %v490
      %v493 = vadd.s32 %v492, %v482
      %v494 = vadd.s32 %v493, %v484
      %v495 = vand.u32 %v472, 65535
      %v496 = vshrl.u32 %v472, 16
      %v497 = vand.u32 %v467, 65535
      %v498 = vshrl.u32 %v467, 16
      %v499 = vmul.u32 %v495, %v497
      %v500 = vmul.u32 %v495, %v498
      %v501 = vmul.u32 %v496, %v497
      %v502 = vmul.u32 %v496, %v498
      %v503 = vshll.u32 %v500, 16
      %v504 = vshrl.u32 %v500, 16
      %v505 = vshll.u32 %v501, 16
      %v506 = vshrl.u32 %v501, 16
      %vm507 = vc.u32 %v499, %v503
      %v508 = vsel %vm507, 1, 0
      %v509 = vadd.s32 %v499, %v503
      %v510 = vadd.s32 %v502, %v508
      %vm511 = vc.u32 %v509, %v505
      %v512 = vsel %vm511, 1, 0
      %v513 = vadd.s32 %v509, %v505
      %v514 = vadd.s32 %v510, %v512
      %v515 = vadd.s32 %v514, %v504
      %v516 = vadd.s32 %v515, %v506
      %v517 = vmul.u32 %v472, %v463
      %v518 = vadd.s32 %v494, %v513
      %vm519 = vc.u32 %v494, %v513
      %v520 = vadd.s32 %v516, 1
      %v521 = vsel %vm519, %v520, %v516
      %v522 = vadd.s32 %v517, %v521
      %v523 = vadd.s32 %v522, 536870912
      %v524 = vshrl.u32 %v523, 30
      %v525 = vshll.u32 %v524, 30
      %v526 = vsub.s32 %v522, %v525
      %vm527 = vcmp.lt.s32.totalorder %v526, 0
      %v528 = vsub.s32 0, %v526
      %v529 = vsel %vm527, %v528, %v526
      %v530 = vclz %v529
      %v531 = vsub.s32 %v530, 2
      %vm532 = vcmp.gt.s32.totalorder 0, %v531
      %v533 = vsel %vm532, 0, %v531
      %v534 = vsub.s32 32, %v533
      %v535 = vshll.u32 %v526, %v533
      %v536 = vshrl.u32 %v518, %v534
      %v537 = vor.u32 %v535, %v536
      %v538 = vsub.s32 4294967266, %v533
      %v539 = vadd.s32 %v538, 127
      %v540 = vshll.u32 %v539, 23
      %v541 = vor.u32 4788187, %v540
      %v542 = vand.u32 2147483647, %v541
      %v544 = vcvt.s32.f32 %v537
      %v545 = vmul.f32 %v544, %v542
      %v546 = vxor.u32 %v545, 2147483648
      %v547 = vsel %vm426, %v546, %v545
      %v548 = vsub.s32 4, %v524
      %v549 = vsel %vm426, %v548, %v524
      %v550 = vsel %vm425, %v326, %v547
      %v551 = vsel %vm425, 0, %v549
      %v552 = vmul.f32 %v550, %v550
      %v553 = vmul.f32 %v552, -0.001358992
      %v554 = vadd.f32 %v553, 0.041655596
      %v555 = vmul.f32 %v552, %v554
      %v556 = vadd.f32 %v555, -0.4999988
      %v557 = vmul.f32 %v552, %v556
      %v558 = vadd.f32 1.0, %v557
      %v559 = vmul.f32 %v550, %v550
      %v560 = vmul.f32 %v559, -0.00019511016
      %v561 = vadd.f32 %v560, 0.008332121
      %v562 = vmul.f32 %v559, %v561
      %v563 = vadd.f32 %v562, -0.16666654
      %v564 = vmul.f32 %v559, %v563
      %v565 = vadd.f32 %v564, 1.0
      %v566 = vmul.f32 %v565, %v550
      %vm567 = vweird.f32 %v326
      %v568 = vadd.s32 %v551, 3
      %v569 = vand.u32 %v568, 3
      %vm570 = vcmp.lt.s32.totalorder %v569, 2
      %vm571 = vcmp.eq.s32.totalorder %v569, 0
      %v572 = vxor.u32 %v566, 2147483648
      %v573 = vsel %vm571, %v558, %v572
      %vm574 = vcmp.eq.s32.totalorder %v569, 2
      %v575 = vxor.u32 %v558, 2147483648
      %v576 = vsel %vm574, %v575, %v566
      %v577 = vsel %vm570, %v573, %v576
      %v578 = vsel %vm567, nan, %v577
      %v579 = vand.u32 2147483647, %v329
      %vm580 = vcmp.le.f32.partialorder %v579, 0.7853982
      %vm581 = vcmp.lt.s32.totalorder %v329, 0
      %v582 = vand.u32 %v329, 2139095040
      %v583 = vshrl.u32 %v582, 23
      %v584 = vsub.s32 %v583, 127
      %v585 = vand.u32 2147483647, %v329
      %v586 = vand.u32 %v585, 8388607
      %v587 = vor.u32 %v586, 8388608
      %v588 = vsub.s32 0, %v587
      %v589 = vadd.s32 %v584, 1
      %vm590 = vcmp.gt.s32.totalorder %v589, 0
      %v591 = vsel %vm590, %v589, 0
      %v592 = vshrl.u32 %v591, 5
      %v593 = vand.u32 %v591, 31
      %v594 = vsub.s32 32, %v593
      %v595 = vshrl.u32 683565275, %v594
      %v596 = vshll.u32 683565275, %v593
      %v597 = vshrl.u32 2475754826, %v594
      %v598 = vor.u32 %v596, %v597
      %v599 = vshll.u32 2475754826, %v593
      %v600 = vshrl.u32 2131351028, %v594
      %v601 = vor.u32 %v599, %v600
      %v602 = vshll.u32 2131351028, %v593
      %v603 = vshrl.u32 2102212464, %v594
      %v604 = vor.u32 %v602, %v603
      %v605 = vshll.u32 2102212464, %v593
      %v606 = vshrl.u32 920167782, %v594
      %v607 = vor.u32 %v605, %v606
      %v608 = vshll.u32 920167782, %v593
      %v609 = vshrl.u32 1326507024, %v594
      %v610 = vor.u32 %v608, %v609
      %vm611 = vcmp.lt.s32.totalorder %v592, 1
      %vm612 = vcmp.lt.s32.totalorder %v592, 2
      %vm613 = vcmp.lt.s32.totalorder %v592, 3
      %vm614 = vcmp.lt.s32.totalorder %v592, 4
      %v615 = vsel %vm611, %v595, %v598
      %v616 = vsel %vm614, %v604, 2102212464
      %v617 = vsel %vm613, %v601, %v616
      %v618 = vsel %vm612, %v615, %v617
      %v619 = vsel %vm611, %v598, %v601
      %v620 = vsel %vm614, %v607, 920167782
      %v621 = vsel %vm613, %v604, %v620
      %v622 = vsel %vm612, %v619, %v621
      %v623 = vsel %vm611, %v601, %v604
      %v624 = vsel %vm614, %v610, 1326507024
      %v625 = vsel %vm613, %v607, %v624
      %v626 = vsel %vm612, %v623, %v625
      %v627 = vshll.u32 %v587, 8
      %v628 = vand.u32 %v627, 65535
      %v629 = vshrl.u32 %v627, 16
      %v630 = vand.u32 %v626, 65535
      %v631 = vshrl.u32 %v626, 16
      %v632 = vmul.u32 %v628, %v630
      %v633 = vmul.u32 %v628, %v631
      %v634 = vmul.u32 %v629, %v630
      %v635 = vmul.u32 %v629, %v631
      %v636 = vshll.u32 %v633, 16
      %v637 = vshrl.u32 %v633, 16
      %v638 = vshll.u32 %v634, 16
      %v639 = vshrl.u32 %v634, 16
      %vm640 = vc.u32 %v632, %v636
      %v641 = vsel %vm640, 1, 0
      %v642 = vadd.s32 %v632, %v636
      %v643 = vadd.s32 %v635, %v641
      %vm644 = vc.u32 %v642, %v638
      %v645 = vsel %vm644, 1, 0
      %v646 = vadd.s32 %v642, %v638
      %v647 = vadd.s32 %v643, %v645
      %v648 = vadd.s32 %v647, %v637
      %v649 = vadd.s32 %v648, %v639
      %v650 = vand.u32 %v627, 65535
      %v651 = vshrl.u32 %v627, 16
      %v652 = vand.u32 %v622, 65535
      %v653 = vshrl.u32 %v622, 16
      %v654 = vmul.u32 %v650, %v652
      %v655 = vmul.u32 %v650, %v653
      %v656 = vmul.u32 %v651, %v652
      %v657 = vmul.u32 %v651, %v653
      %v658 = vshll.u32 %v655, 16
      %v659 = vshrl.u32 %v655, 16
      %v660 = vshll.u32 %v656, 16
      %v661 = vshrl.u32 %v656, 16
      %vm662 = vc.u32 %v654, %v658
      %v663 = vsel %vm662, 1, 0
      %v664 = vadd.s32 %v654, %v658
      %v665 = vadd.s32 %v657, %v663
      %vm666 = vc.u32 %v664, %v660
      %v667 = vsel %vm666, 1, 0
      %v668 = vadd.s32 %v664, %v660
      %v669 = vadd.s32 %v665, %v667
      %v670 = vadd.s32 %v669, %v659
      %v671 = vadd.s32 %v670, %v661
      %v672 = vmul.u32 %v627, %v618
      %v673 = vadd.s32 %v649, %v668
      %vm674 = vc.u32 %v649, %v668
      %v675 = vadd.s32 %v671, 1
      %v676 = vsel %vm674, %v675, %v671
      %v677 = vadd.s32 %v672, %v676
      %v678 = vadd.s32 %v677, 536870912
      %v679 = vshrl.u32 %v678, 30
      %v680 = vshll.u32 %v679, 30
      %v681 = vsub.s32 %v677, %v680
      %vm682 = vcmp.lt.s32.totalorder %v681, 0
      %v683 = vsub.s32 0, %v681
      %v684 = vsel %vm682, %v683, %v681
      %v685 = vclz %v684
      %v686 = vsub.s32 %v685, 2
      %vm687 = vcmp.gt.s32.totalorder 0, %v686
      %v688 = vsel %vm687, 0, %v686
      %v689 = vsub.s32 32, %v688
      %v690 = vshll.u32 %v681, %v688
      %v691 = vshrl.u32 %v673, %v689
      %v692 = vor.u32 %v690, %v691
      %v693 = vsub.s32 4294967266, %v688
      %v694 = vadd.s32 %v693, 127
      %v695 = vshll.u32 %v694, 23
      %v696 = vor.u32 4788187, %v695
      %v697 = vand.u32 2147483647, %v696
      %v699 = vcvt.s32.f32 %v692
      %v700 = vmul.f32 %v699, %v697
      %v701 = vxor.u32 %v700, 2147483648
      %v702 = vsel %vm581, %v701, %v700
      %v703 = vsub.s32 4, %v679
      %v704 = vsel %vm581, %v703, %v679
      %v705 = vsel %vm580, %v329, %v702
      %v706 = vsel %vm580, 0, %v704
      %v707 = vmul.f32 %v705, %v705
      %v708 = vmul.f32 %v707, -0.001358992
      %v709 = vadd.f32 %v708, 0.041655596
      %v710 = vmul.f32 %v707, %v709
      %v711 = vadd.f32 %v710, -0.4999988
      %v712 = vmul.f32 %v707, %v711
      %v713 = vadd.f32 1.0, %v712
      %v714 = vmul.f32 %v705, %v705
      %v715 = vmul.f32 %v714, -0.00019511016
      %v716 = vadd.f32 %v715, 0.008332121
      %v717 = vmul.f32 %v714, %v716
      %v718 = vadd.f32 %v717, -0.16666654
      %v719 = vmul.f32 %v714, %v718
      %v720 = vadd.f32 %v719, 1.0
      %v721 = vmul.f32 %v720, %v705
      %vm722 = vweird.f32 %v329
      %v723 = vadd.s32 %v706, 3
      %v724 = vand.u32 %v723, 3
      %vm725 = vcmp.lt.s32.totalorder %v724, 2
      %vm726 = vcmp.eq.s32.totalorder %v724, 0
      %v727 = vxor.u32 %v721, 2147483648
      %v728 = vsel %vm726, %v713, %v727
      %vm729 = vcmp.eq.s32.totalorder %v724, 2
      %v730 = vxor.u32 %v713, 2147483648
      %v731 = vsel %vm729, %v730, %v721
      %v732 = vsel %vm725, %v728, %v731
      %v733 = vsel %vm722, nan, %v732
      %v734 = vand.u32 2147483647, %v332
      %vm735 = vcmp.le.f32.partialorder %v734, 0.7853982
      %vm736 = vcmp.lt.s32.totalorder %v332, 0
      %v737 = vand.u32 %v332, 2139095040
      %v738 = vshrl.u32 %v737, 23
      %v739 = vsub.s32 %v738, 127
      %v740 = vand.u32 2147483647, %v332
      %v741 = vand.u32 %v740, 8388607
      %v742 = vor.u32 %v741, 8388608
      %v743 = vsub.s32 0, %v742
      %v744 = vadd.s32 %v739, 1
      %vm745 = vcmp.gt.s32.totalorder %v744, 0
      %v746 = vsel %vm745, %v744, 0
      %v747 = vshrl.u32 %v746, 5
      %v748 = vand.u32 %v746, 31
      %v749 = vsub.s32 32, %v748
      %v750 = vshrl.u32 683565275, %v749
      %v751 = vshll.u32 683565275, %v748
      %v752 = vshrl.u32 2475754826, %v749
      %v753 = vor.u32 %v751, %v752
      %v754 = vshll.u32 2475754826, %v748
      %v755 = vshrl.u32 2131351028, %v749
      %v756 = vor.u32 %v754, %v755
      %v757 = vshll.u32 2131351028, %v748
      %v758 = vshrl.u32 2102212464, %v749
      %v759 = vor.u32 %v757, %v758
      %v760 = vshll.u32 2102212464, %v748
      %v761 = vshrl.u32 920167782, %v749
      %v762 = vor.u32 %v760, %v761
      %v763 = vshll.u32 920167782, %v748
      %v764 = vshrl.u32 1326507024, %v749
      %v765 = vor.u32 %v763, %v764
      %vm766 = vcmp.lt.s32.totalorder %v747, 1
      %vm767 = vcmp.lt.s32.totalorder %v747, 2
      %vm768 = vcmp.lt.s32.totalorder %v747, 3
      %vm769 = vcmp.lt.s32.totalorder %v747, 4
      %v770 = vsel %vm766, %v750, %v753
      %v771 = vsel %vm769, %v759, 2102212464
      %v772 = vsel %vm768, %v756, %v771
      %v773 = vsel %vm767, %v770, %v772
      %v774 = vsel %vm766, %v753, %v756
      %v775 = vsel %vm769, %v762, 920167782
      %v776 = vsel %vm768, %v759, %v775
      %v777 = vsel %vm767, %v774, %v776
      %v778 = vsel %vm766, %v756, %v759
      %v779 = vsel %vm769, %v765, 1326507024
      %v780 = vsel %vm768, %v762, %v779
      %v781 = vsel %vm767, %v778, %v780
      %v782 = vshll.u32 %v742, 8
      %v783 = vand.u32 %v782, 65535
      %v784 = vshrl.u32 %v782, 16
      %v785 = vand.u32 %v781, 65535
      %v786 = vshrl.u32 %v781, 16
      %v787 = vmul.u32 %v783, %v785
      %v788 = vmul.u32 %v783, %v786
      %v789 = vmul.u32 %v784, %v785
      %v790 = vmul.u32 %v784, %v786
      %v791 = vshll.u32 %v788, 16
      %v792 = vshrl.u32 %v788, 16
      %v793 = vshll.u32 %v789, 16
      %v794 = vshrl.u32 %v789, 16
      %vm795 = vc.u32 %v787, %v791
      %v796 = vsel %vm795, 1, 0
      %v797 = vadd.s32 %v787, %v791
      %v798 = vadd.s32 %v790, %v796
      %vm799 = vc.u32 %v797, %v793
      %v800 = vsel %vm799, 1, 0
      %v801 = vadd.s32 %v797, %v793
      %v802 = vadd.s32 %v798, %v800
      %v803 = vadd.s32 %v802, %v792
      %v804 = vadd.s32 %v803, %v794
      %v805 = vand.u32 %v782, 65535
      %v806 = vshrl.u32 %v782, 16
      %v807 = vand.u32 %v777, 65535
      %v808 = vshrl.u32 %v777, 16
      %v809 = vmul.u32 %v805, %v807
      %v810 = vmul.u32 %v805, %v808
      %v811 = vmul.u32 %v806, %v807
      %v812 = vmul.u32 %v806, %v808
      %v813 = vshll.u32 %v810, 16
      %v814 = vshrl.u32 %v810, 16
      %v815 = vshll.u32 %v811, 16
      %v816 = vshrl.u32 %v811, 16
      %vm817 = vc.u32 %v809, %v813
      %v818 = vsel %vm817, 1, 0
      %v819 = vadd.s32 %v809, %v813
      %v820 = vadd.s32 %v812, %v818
      %vm821 = vc.u32 %v819, %v815
      %v822 = vsel %vm821, 1, 0
      %v823 = vadd.s32 %v819, %v815
      %v824 = vadd.s32 %v820, %v822
      %v825 = vadd.s32 %v824, %v814
      %v826 = vadd.s32 %v825, %v816
      %v827 = vmul.u32 %v782, %v773
      %v828 = vadd.s32 %v804, %v823
      %vm829 = vc.u32 %v804, %v823
      %v830 = vadd.s32 %v826, 1
      %v831 = vsel %vm829, %v830, %v826
      %v832 = vadd.s32 %v827, %v831
      %v833 = vadd.s32 %v832, 536870912
      %v834 = vshrl.u32 %v833, 30
      %v835 = vshll.u32 %v834, 30
      %v836 = vsub.s32 %v832, %v835
      %vm837 = vcmp.lt.s32.totalorder %v836, 0
      %v838 = vsub.s32 0, %v836
      %v839 = vsel %vm837, %v838, %v836
      %v840 = vclz %v839
      %v841 = vsub.s32 %v840, 2
      %vm842 = vcmp.gt.s32.totalorder 0, %v841
      %v843 = vsel %vm842, 0, %v841
      %v844 = vsub.s32 32, %v843
      %v845 = vshll.u32 %v836, %v843
      %v846 = vshrl.u32 %v828, %v844
      %v847 = vor.u32 %v845, %v846
      %v848 = vsub.s32 4294967266, %v843
      %v849 = vadd.s32 %v848, 127
      %v850 = vshll.u32 %v849, 23
      %v851 = vor.u32 4788187, %v850
      %v852 = vand.u32 2147483647, %v851
      %v854 = vcvt.s32.f32 %v847
      %v855 = vmul.f32 %v854, %v852
      %v856 = vxor.u32 %v855, 2147483648
      %v857 = vsel %vm736, %v856, %v855
      %v858 = vsub.s32 4, %v834
      %v859 = vsel %vm736, %v858, %v834
      %v860 = vsel %vm735, %v332, %v857
      %v861 = vsel %vm735, 0, %v859
      %v862 = vmul.f32 %v860, %v860
      %v863 = vmul.f32 %v862, -0.001358992
      %v864 = vadd.f32 %v863, 0.041655596
      %v865 = vmul.f32 %v862, %v864
      %v866 = vadd.f32 %v865, -0.4999988
      %v867 = vmul.f32 %v862, %v866
      %v868 = vadd.f32 1.0, %v867
      %v869 = vmul.f32 %v860, %v860
      %v870 = vmul.f32 %v869, -0.00019511016
      %v871 = vadd.f32 %v870, 0.008332121
      %v872 = vmul.f32 %v869, %v871
      %v873 = vadd.f32 %v872, -0.16666654
      %v874 = vmul.f32 %v869, %v873
      %v875 = vadd.f32 %v874, 1.0
      %v876 = vmul.f32 %v875, %v860
      %vm877 = vweird.f32 %v332
      %v878 = vadd.s32 %v861, 3
      %v879 = vand.u32 %v878, 3
      %vm880 = vcmp.lt.s32.totalorder %v879, 2
      %vm881 = vcmp.eq.s32.totalorder %v879, 0
      %v882 = vxor.u32 %v876, 2147483648
      %v883 = vsel %vm881, %v868, %v882
      %vm884 = vcmp.eq.s32.totalorder %v879, 2
      %v885 = vxor.u32 %v868, 2147483648
      %v886 = vsel %vm884, %v885, %v876
      %v887 = vsel %vm880, %v883, %v886
      %v888 = vsel %vm877, nan, %v887
      %v889 = vand.u32 2147483647, %v335
      %vm890 = vcmp.le.f32.partialorder %v889, 0.7853982
      %vm891 = vcmp.lt.s32.totalorder %v335, 0
      %v892 = vand.u32 %v335, 2139095040
      %v893 = vshrl.u32 %v892, 23
      %v894 = vsub.s32 %v893, 127
      %v895 = vand.u32 2147483647, %v335
      %v896 = vand.u32 %v895, 8388607
      %v897 = vor.u32 %v896, 8388608
      %v898 = vsub.s32 0, %v897
      %v899 = vadd.s32 %v894, 1
      %vm900 = vcmp.gt.s32.totalorder %v899, 0
      %v901 = vsel %vm900, %v899, 0
      %v902 = vshrl.u32 %v901, 5
      %v903 = vand.u32 %v901, 31
      %v904 = vsub.s32 32, %v903
      %v905 = vshrl.u32 683565275, %v904
      %v906 = vshll.u32 683565275, %v903
      %v907 = vshrl.u32 2475754826, %v904
      %v908 = vor.u32 %v906, %v907
      %v909 = vshll.u32 2475754826, %v903
      %v910 = vshrl.u32 2131351028, %v904
      %v911 = vor.u32 %v909, %v910
      %v912 = vshll.u32 2131351028, %v903
      %v913 = vshrl.u32 2102212464, %v904
      %v914 = vor.u32 %v912, %v913
      %v915 = vshll.u32 2102212464, %v903
      %v916 = vshrl.u32 920167782, %v904
      %v917 = vor.u32 %v915, %v916
      %v918 = vshll.u32 920167782, %v903
      %v919 = vshrl.u32 1326507024, %v904
      %v920 = vor.u32 %v918, %v919
      %vm921 = vcmp.lt.s32.totalorder %v902, 1
      %vm922 = vcmp.lt.s32.totalorder %v902, 2
      %vm923 = vcmp.lt.s32.totalorder %v902, 3
      %vm924 = vcmp.lt.s32.totalorder %v902, 4
      %v925 = vsel %vm921, %v905, %v908
      %v926 = vsel %vm924, %v914, 2102212464
      %v927 = vsel %vm923, %v911, %v926
      %v928 = vsel %vm922, %v925, %v927
      %v929 = vsel %vm921, %v908, %v911
      %v930 = vsel %vm924, %v917, 920167782
      %v931 = vsel %vm923, %v914, %v930
      %v932 = vsel %vm922, %v929, %v931
      %v933 = vsel %vm921, %v911, %v914
      %v934 = vsel %vm924, %v920, 1326507024
      %v935 = vsel %vm923, %v917, %v934
      %v936 = vsel %vm922, %v933, %v935
      %v937 = vshll.u32 %v897, 8
      %v938 = vand.u32 %v937, 65535
      %v939 = vshrl.u32 %v937, 16
      %v940 = vand.u32 %v936, 65535
      %v941 = vshrl.u32 %v936, 16
      %v942 = vmul.u32 %v938, %v940
      %v943 = vmul.u32 %v938, %v941
      %v944 = vmul.u32 %v939, %v940
      %v945 = vmul.u32 %v939, %v941
      %v946 = vshll.u32 %v943, 16
      %v947 = vshrl.u32 %v943, 16
      %v948 = vshll.u32 %v944, 16
      %v949 = vshrl.u32 %v944, 16
      %vm950 = vc.u32 %v942, %v946
      %v951 = vsel %vm950, 1, 0
      %v952 = vadd.s32 %v942, %v946
      %v953 = vadd.s32 %v945, %v951
      %vm954 = vc.u32 %v952, %v948
      %v955 = vsel %vm954, 1, 0
      %v956 = vadd.s32 %v952, %v948
      %v957 = vadd.s32 %v953, %v955
      %v958 = vadd.s32 %v957, %v947
      %v959 = vadd.s32 %v958, %v949
      %v960 = vand.u32 %v937, 65535
      %v961 = vshrl.u32 %v937, 16
      %v962 = vand.u32 %v932, 65535
      %v963 = vshrl.u32 %v932, 16
      %v964 = vmul.u32 %v960, %v962
      %v965 = vmul.u32 %v960, %v963
      %v966 = vmul.u32 %v961, %v962
      %v967 = vmul.u32 %v961, %v963
      %v968 = vshll.u32 %v965, 16
      %v969 = vshrl.u32 %v965, 16
      %v970 = vshll.u32 %v966, 16
      %v971 = vshrl.u32 %v966, 16
      %vm972 = vc.u32 %v964, %v968
      %v973 = vsel %vm972, 1, 0
      %v974 = vadd.s32 %v964, %v968
      %v975 = vadd.s32 %v967, %v973
      %vm976 = vc.u32 %v974, %v970
      %v977 = vsel %vm976, 1, 0
      %v978 = vadd.s32 %v974, %v970
      %v979 = vadd.s32 %v975, %v977
      %v980 = vadd.s32 %v979, %v969
      %v981 = vadd.s32 %v980, %v971
      %v982 = vmul.u32 %v937, %v928
      %v983 = vadd.s32 %v959, %v978
      %vm984 = vc.u32 %v959, %v978
      %v985 = vadd.s32 %v981, 1
      %v986 = vsel %vm984, %v985, %v981
      %v987 = vadd.s32 %v982, %v986
      %v988 = vadd.s32 %v987, 536870912
      %v989 = vshrl.u32 %v988, 30
      %v990 = vshll.u32 %v989, 30
      %v991 = vsub.s32 %v987, %v990
      %vm992 = vcmp.lt.s32.totalorder %v991, 0
      %v993 = vsub.s32 0, %v991
      %v994 = vsel %vm992, %v993, %v991
      %v995 = vclz %v994
      %v996 = vsub.s32 %v995, 2
      %vm997 = vcmp.gt.s32.totalorder 0, %v996
      %v998 = vsel %vm997, 0, %v996
      %v999 = vsub.s32 32, %v998
      %v1000 = vshll.u32 %v991, %v998
      %v1001 = vshrl.u32 %v983, %v999
      %v1002 = vor.u32 %v1000, %v1001
      %v1003 = vsub.s32 4294967266, %v998
      %v1004 = vadd.s32 %v1003, 127
      %v1005 = vshll.u32 %v1004, 23
      %v1006 = vor.u32 4788187, %v1005
      %v1007 = vand.u32 2147483647, %v1006
      %v1009 = vcvt.s32.f32 %v1002
      %v1010 = vmul.f32 %v1009, %v1007
      %v1011 = vxor.u32 %v1010, 2147483648
      %v1012 = vsel %vm891, %v1011, %v1010
      %v1013 = vsub.s32 4, %v989
      %v1014 = vsel %vm891, %v1013, %v989
      %v1015 = vsel %vm890, %v335, %v1012
      %v1016 = vsel %vm890, 0, %v1014
      %v1017 = vmul.f32 %v1015, %v1015
      %v1018 = vmul.f32 %v1017, -0.001358992
      %v1019 = vadd.f32 %v1018, 0.041655596
      %v1020 = vmul.f32 %v1017, %v1019
      %v1021 = vadd.f32 %v1020, -0.4999988
      %v1022 = vmul.f32 %v1017, %v1021
      %v1023 = vadd.f32 1.0, %v1022
      %v1024 = vmul.f32 %v1015, %v1015
      %v1025 = vmul.f32 %v1024, -0.00019511016
      %v1026 = vadd.f32 %v1025, 0.008332121
      %v1027 = vmul.f32 %v1024, %v1026
      %v1028 = vadd.f32 %v1027, -0.16666654
      %v1029 = vmul.f32 %v1024, %v1028
      %v1030 = vadd.f32 %v1029, 1.0
      %v1031 = vmul.f32 %v1030, %v1015
      %vm1032 = vweird.f32 %v335
      %v1033 = vadd.s32 %v1016, 3
      %v1034 = vand.u32 %v1033, 3
      %vm1035 = vcmp.lt.s32.totalorder %v1034, 2
      %vm1036 = vcmp.eq.s32.totalorder %v1034, 0
      %v1037 = vxor.u32 %v1031, 2147483648
      %v1038 = vsel %vm1036, %v1023, %v1037
      %vm1039 = vcmp.eq.s32.totalorder %v1034, 2
      %v1040 = vxor.u32 %v1023, 2147483648
      %v1041 = vsel %vm1039, %v1040, %v1031
      %v1042 = vsel %vm1035, %v1038, %v1041
      %v1043 = vsel %vm1032, nan, %v1042
      %v1044 = vand.u32 2147483647, %v338
      %vm1045 = vcmp.le.f32.partialorder %v1044, 0.7853982
      %vm1046 = vcmp.lt.s32.totalorder %v338, 0
      %v1047 = vand.u32 %v338, 2139095040
      %v1048 = vshrl.u32 %v1047, 23
      %v1049 = vsub.s32 %v1048, 127
      %v1050 = vand.u32 2147483647, %v338
      %v1051 = vand.u32 %v1050, 8388607
      %v1052 = vor.u32 %v1051, 8388608
      %v1053 = vsub.s32 0, %v1052
      %v1054 = vadd.s32 %v1049, 1
      %vm1055 = vcmp.gt.s32.totalorder %v1054, 0
      %v1056 = vsel %vm1055, %v1054, 0
      %v1057 = vshrl.u32 %v1056, 5
      %v1058 = vand.u32 %v1056, 31
      %v1059 = vsub.s32 32, %v1058
      %v1060 = vshrl.u32 683565275, %v1059
      %v1061 = vshll.u32 683565275, %v1058
      %v1062 = vshrl.u32 2475754826, %v1059
      %v1063 = vor.u32 %v1061, %v1062
      %v1064 = vshll.u32 2475754826, %v1058
      %v1065 = vshrl.u32 2131351028, %v1059
      %v1066 = vor.u32 %v1064, %v1065
      %v1067 = vshll.u32 2131351028, %v1058
      %v1068 = vshrl.u32 2102212464, %v1059
      %v1069 = vor.u32 %v1067, %v1068
      %v1070 = vshll.u32 2102212464, %v1058
      %v1071 = vshrl.u32 920167782, %v1059
      %v1072 = vor.u32 %v1070, %v1071
      %v1073 = vshll.u32 920167782, %v1058
      %v1074 = vshrl.u32 1326507024, %v1059
      %v1075 = vor.u32 %v1073, %v1074
      %vm1076 = vcmp.lt.s32.totalorder %v1057, 1
      %vm1077 = vcmp.lt.s32.totalorder %v1057, 2
      %vm1078 = vcmp.lt.s32.totalorder %v1057, 3
      %vm1079 = vcmp.lt.s32.totalorder %v1057, 4
      %v1080 = vsel %vm1076, %v1060, %v1063
      %v1081 = vsel %vm1079, %v1069, 2102212464
      %v1082 = vsel %vm1078, %v1066, %v1081
      %v1083 = vsel %vm1077, %v1080, %v1082
      %v1084 = vsel %vm1076, %v1063, %v1066
      %v1085 = vsel %vm1079, %v1072, 920167782
      %v1086 = vsel %vm1078, %v1069, %v1085
      %v1087 = vsel %vm1077, %v1084, %v1086
      %v1088 = vsel %vm1076, %v1066, %v1069
      %v1089 = vsel %vm1079, %v1075, 1326507024
      %v1090 = vsel %vm1078, %v1072, %v1089
      %v1091 = vsel %vm1077, %v1088, %v1090
      %v1092 = vshll.u32 %v1052, 8
      %v1093 = vand.u32 %v1092, 65535
      %v1094 = vshrl.u32 %v1092, 16
      %v1095 = vand.u32 %v1091, 65535
      %v1096 = vshrl.u32 %v1091, 16
      %v1097 = vmul.u32 %v1093, %v1095
      %v1098 = vmul.u32 %v1093, %v1096
      %v1099 = vmul.u32 %v1094, %v1095
      %v1100 = vmul.u32 %v1094, %v1096
      %v1101 = vshll.u32 %v1098, 16
      %v1102 = vshrl.u32 %v1098, 16
      %v1103 = vshll.u32 %v1099, 16
      %v1104 = vshrl.u32 %v1099, 16
      %vm1105 = vc.u32 %v1097, %v1101
      %v1106 = vsel %vm1105, 1, 0
      %v1107 = vadd.s32 %v1097, %v1101
      %v1108 = vadd.s32 %v1100, %v1106
      %vm1109 = vc.u32 %v1107, %v1103
      %v1110 = vsel %vm1109, 1, 0
      %v1111 = vadd.s32 %v1107, %v1103
      %v1112 = vadd.s32 %v1108, %v1110
      %v1113 = vadd.s32 %v1112, %v1102
      %v1114 = vadd.s32 %v1113, %v1104
      %v1115 = vand.u32 %v1092, 65535
      %v1116 = vshrl.u32 %v1092, 16
      %v1117 = vand.u32 %v1087, 65535
      %v1118 = vshrl.u32 %v1087, 16
      %v1119 = vmul.u32 %v1115, %v1117
      %v1120 = vmul.u32 %v1115, %v1118
      %v1121 = vmul.u32 %v1116, %v1117
      %v1122 = vmul.u32 %v1116, %v1118
      %v1123 = vshll.u32 %v1120, 16
      %v1124 = vshrl.u32 %v1120, 16
      %v1125 = vshll.u32 %v1121, 16
      %v1126 = vshrl.u32 %v1121, 16
      %vm1127 = vc.u32 %v1119, %v1123
      %v1128 = vsel %vm1127, 1, 0
      %v1129 = vadd.s32 %v1119, %v1123
      %v1130 = vadd.s32 %v1122, %v1128
      %vm1131 = vc.u32 %v1129, %v1125
      %v1132 = vsel %vm1131, 1, 0
      %v1133 = vadd.s32 %v1129, %v1125
      %v1134 = vadd.s32 %v1130, %v1132
      %v1135 = vadd.s32 %v1134, %v1124
      %v1136 = vadd.s32 %v1135, %v1126
      %v1137 = vmul.u32 %v1092, %v1083
      %v1138 = vadd.s32 %v1114, %v1133
      %vm1139 = vc.u32 %v1114, %v1133
      %v1140 = vadd.s32 %v1136, 1
      %v1141 = vsel %vm1139, %v1140, %v1136
      %v1142 = vadd.s32 %v1137, %v1141
      %v1143 = vadd.s32 %v1142, 536870912
      %v1144 = vshrl.u32 %v1143, 30
      %v1145 = vshll.u32 %v1144, 30
      %v1146 = vsub.s32 %v1142, %v1145
      %vm1147 = vcmp.lt.s32.totalorder %v1146, 0
      %v1148 = vsub.s32 0, %v1146
      %v1149 = vsel %vm1147, %v1148, %v1146
      %v1150 = vclz %v1149
      %v1151 = vsub.s32 %v1150, 2
      %vm1152 = vcmp.gt.s32.totalorder 0, %v1151
      %v1153 = vsel %vm1152, 0, %v1151
      %v1154 = vsub.s32 32, %v1153
      %v1155 = vshll.u32 %v1146, %v1153
      %v1156 = vshrl.u32 %v1138, %v1154
      %v1157 = vor.u32 %v1155, %v1156
      %v1158 = vsub.s32 4294967266, %v1153
      %v1159 = vadd.s32 %v1158, 127
      %v1160 = vshll.u32 %v1159, 23
      %v1161 = vor.u32 4788187, %v1160
      %v1162 = vand.u32 2147483647, %v1161
      %v1164 = vcvt.s32.f32 %v1157
      %v1165 = vmul.f32 %v1164, %v1162
      %v1166 = vxor.u32 %v1165, 2147483648
      %v1167 = vsel %vm1046, %v1166, %v1165
      %v1168 = vsub.s32 4, %v1144
      %v1169 = vsel %vm1046, %v1168, %v1144
      %v1170 = vsel %vm1045, %v338, %v1167
      %v1171 = vsel %vm1045, 0, %v1169
      %v1172 = vmul.f32 %v1170, %v1170
      %v1173 = vmul.f32 %v1172, -0.001358992
      %v1174 = vadd.f32 %v1173, 0.041655596
      %v1175 = vmul.f32 %v1172, %v1174
      %v1176 = vadd.f32 %v1175, -0.4999988
      %v1177 = vmul.f32 %v1172, %v1176
      %v1178 = vadd.f32 1.0, %v1177
      %v1179 = vmul.f32 %v1170, %v1170
      %v1180 = vmul.f32 %v1179, -0.00019511016
      %v1181 = vadd.f32 %v1180, 0.008332121
      %v1182 = vmul.f32 %v1179, %v1181
      %v1183 = vadd.f32 %v1182, -0.16666654
      %v1184 = vmul.f32 %v1179, %v1183
      %v1185 = vadd.f32 %v1184, 1.0
      %v1186 = vmul.f32 %v1185, %v1170
      %vm1187 = vweird.f32 %v338
      %v1188 = vadd.s32 %v1171, 3
      %v1189 = vand.u32 %v1188, 3
      %vm1190 = vcmp.lt.s32.totalorder %v1189, 2
      %vm1191 = vcmp.eq.s32.totalorder %v1189, 0
      %v1192 = vxor.u32 %v1186, 2147483648
      %v1193 = vsel %vm1191, %v1178, %v1192
      %vm1194 = vcmp.eq.s32.totalorder %v1189, 2
      %v1195 = vxor.u32 %v1178, 2147483648
      %v1196 = vsel %vm1194, %v1195, %v1186
      %v1197 = vsel %vm1190, %v1193, %v1196
      %v1198 = vsel %vm1187, nan, %v1197
      %v1199 = vand.u32 2147483647, %v341
      %vm1200 = vcmp.le.f32.partialorder %v1199, 0.7853982
      %vm1201 = vcmp.lt.s32.totalorder %v341, 0
      %v1202 = vand.u32 %v341, 2139095040
      %v1203 = vshrl.u32 %v1202, 23
      %v1204 = vsub.s32 %v1203, 127
      %v1205 = vand.u32 2147483647, %v341
      %v1206 = vand.u32 %v1205, 8388607
      %v1207 = vor.u32 %v1206, 8388608
      %v1208 = vsub.s32 0, %v1207
      %v1209 = vadd.s32 %v1204, 1
      %vm1210 = vcmp.gt.s32.totalorder %v1209, 0
      %v1211 = vsel %vm1210, %v1209, 0
      %v1212 = vshrl.u32 %v1211, 5
      %v1213 = vand.u32 %v1211, 31
      %v1214 = vsub.s32 32, %v1213
      %v1215 = vshrl.u32 683565275, %v1214
      %v1216 = vshll.u32 683565275, %v1213
      %v1217 = vshrl.u32 2475754826, %v1214
      %v1218 = vor.u32 %v1216, %v1217
      %v1219 = vshll.u32 2475754826, %v1213
      %v1220 = vshrl.u32 2131351028, %v1214
      %v1221 = vor.u32 %v1219, %v1220
      %v1222 = vshll.u32 2131351028, %v1213
      %v1223 = vshrl.u32 2102212464, %v1214
      %v1224 = vor.u32 %v1222, %v1223
      %v1225 = vshll.u32 2102212464, %v1213
      %v1226 = vshrl.u32 920167782, %v1214
      %v1227 = vor.u32 %v1225, %v1226
      %v1228 = vshll.u32 920167782, %v1213
      %v1229 = vshrl.u32 1326507024, %v1214
      %v1230 = vor.u32 %v1228, %v1229
      %vm1231 = vcmp.lt.s32.totalorder %v1212, 1
      %vm1232 = vcmp.lt.s32.totalorder %v1212, 2
      %vm1233 = vcmp.lt.s32.totalorder %v1212, 3
      %vm1234 = vcmp.lt.s32.totalorder %v1212, 4
      %v1235 = vsel %vm1231, %v1215, %v1218
      %v1236 = vsel %vm1234, %v1224, 2102212464
      %v1237 = vsel %vm1233, %v1221, %v1236
      %v1238 = vsel %vm1232, %v1235, %v1237
      %v1239 = vsel %vm1231, %v1218, %v1221
      %v1240 = vsel %vm1234, %v1227, 920167782
      %v1241 = vsel %vm1233, %v1224, %v1240
      %v1242 = vsel %vm1232, %v1239, %v1241
      %v1243 = vsel %vm1231, %v1221, %v1224
      %v1244 = vsel %vm1234, %v1230, 1326507024
      %v1245 = vsel %vm1233, %v1227, %v1244
      %v1246 = vsel %vm1232, %v1243, %v1245
      %v1247 = vshll.u32 %v1207, 8
      %v1248 = vand.u32 %v1247, 65535
      %v1249 = vshrl.u32 %v1247, 16
      %v1250 = vand.u32 %v1246, 65535
      %v1251 = vshrl.u32 %v1246, 16
      %v1252 = vmul.u32 %v1248, %v1250
      %v1253 = vmul.u32 %v1248, %v1251
      %v1254 = vmul.u32 %v1249, %v1250
      %v1255 = vmul.u32 %v1249, %v1251
      %v1256 = vshll.u32 %v1253, 16
      %v1257 = vshrl.u32 %v1253, 16
      %v1258 = vshll.u32 %v1254, 16
      %v1259 = vshrl.u32 %v1254, 16
      %vm1260 = vc.u32 %v1252, %v1256
      %v1261 = vsel %vm1260, 1, 0
      %v1262 = vadd.s32 %v1252, %v1256
      %v1263 = vadd.s32 %v1255, %v1261
      %vm1264 = vc.u32 %v1262, %v1258
      %v1265 = vsel %vm1264, 1, 0
      %v1266 = vadd.s32 %v1262, %v1258
      %v1267 = vadd.s32 %v1263, %v1265
      %v1268 = vadd.s32 %v1267, %v1257
      %v1269 = vadd.s32 %v1268, %v1259
      %v1270 = vand.u32 %v1247, 65535
      %v1271 = vshrl.u32 %v1247, 16
      %v1272 = vand.u32 %v1242, 65535
      %v1273 = vshrl.u32 %v1242, 16
      %v1274 = vmul.u32 %v1270, %v1272
      %v1275 = vmul.u32 %v1270, %v1273
      %v1276 = vmul.u32 %v1271, %v1272
      %v1277 = vmul.u32 %v1271, %v1273
      %v1278 = vshll.u32 %v1275, 16
      %v1279 = vshrl.u32 %v1275, 16
      %v1280 = vshll.u32 %v1276, 16
      %v1281 = vshrl.u32 %v1276, 16
      %vm1282 = vc.u32 %v1274, %v1278
      %v1283 = vsel %vm1282, 1, 0
      %v1284 = vadd.s32 %v1274, %v1278
      %v1285 = vadd.s32 %v1277, %v1283
      %vm1286 = vc.u32 %v1284, %v1280
      %v1287 = vsel %vm1286, 1, 0
      %v1288 = vadd.s32 %v1284, %v1280
      %v1289 = vadd.s32 %v1285, %v1287
      %v1290 = vadd.s32 %v1289, %v1279
      %v1291 = vadd.s32 %v1290, %v1281
      %v1292 = vmul.u32 %v1247, %v1238
      %v1293 = vadd.s32 %v1269, %v1288
      %vm1294 = vc.u32 %v1269, %v1288
      %v1295 = vadd.s32 %v1291, 1
      %v1296 = vsel %vm1294, %v1295, %v1291
      %v1297 = vadd.s32 %v1292, %v1296
      %v1298 = vadd.s32 %v1297, 536870912
      %v1299 = vshrl.u32 %v1298, 30
      %v1300 = vshll.u32 %v1299, 30
      %v1301 = vsub.s32 %v1297, %v1300
      %vm1302 = vcmp.lt.s32.totalorder %v1301, 0
      %v1303 = vsub.s32 0, %v1301
      %v1304 = vsel %vm1302, %v1303, %v1301
      %v1305 = vclz %v1304
      %v1306 = vsub.s32 %v1305, 2
      %vm1307 = vcmp.gt.s32.totalorder 0, %v1306
      %v1308 = vsel %vm1307, 0, %v1306
      %v1309 = vsub.s32 32, %v1308
      %v1310 = vshll.u32 %v1301, %v1308
      %v1311 = vshrl.u32 %v1293, %v1309
      %v1312 = vor.u32 %v1310, %v1311
      %v1313 = vsub.s32 4294967266, %v1308
      %v1314 = vadd.s32 %v1313, 127
      %v1315 = vshll.u32 %v1314, 23
      %v1316 = vor.u32 4788187, %v1315
      %v1317 = vand.u32 2147483647, %v1316
      %v1319 = vcvt.s32.f32 %v1312
      %v1320 = vmul.f32 %v1319, %v1317
      %v1321 = vxor.u32 %v1320, 2147483648
      %v1322 = vsel %vm1201, %v1321, %v1320
      %v1323 = vsub.s32 4, %v1299
      %v1324 = vsel %vm1201, %v1323, %v1299
      %v1325 = vsel %vm1200, %v341, %v1322
      %v1326 = vsel %vm1200, 0, %v1324
      %v1327 = vmul.f32 %v1325, %v1325
      %v1328 = vmul.f32 %v1327, -0.001358992
      %v1329 = vadd.f32 %v1328, 0.041655596
      %v1330 = vmul.f32 %v1327, %v1329
      %v1331 = vadd.f32 %v1330, -0.4999988
      %v1332 = vmul.f32 %v1327, %v1331
      %v1333 = vadd.f32 1.0, %v1332
      %v1334 = vmul.f32 %v1325, %v1325
      %v1335 = vmul.f32 %v1334, -0.00019511016
      %v1336 = vadd.f32 %v1335, 0.008332121
      %v1337 = vmul.f32 %v1334, %v1336
      %v1338 = vadd.f32 %v1337, -0.16666654
      %v1339 = vmul.f32 %v1334, %v1338
      %v1340 = vadd.f32 %v1339, 1.0
      %v1341 = vmul.f32 %v1340, %v1325
      %vm1342 = vweird.f32 %v341
      %v1343 = vadd.s32 %v1326, 3
      %v1344 = vand.u32 %v1343, 3
      %vm1345 = vcmp.lt.s32.totalorder %v1344, 2
      %vm1346 = vcmp.eq.s32.totalorder %v1344, 0
      %v1347 = vxor.u32 %v1341, 2147483648
      %v1348 = vsel %vm1346, %v1333, %v1347
      %vm1349 = vcmp.eq.s32.totalorder %v1344, 2
      %v1350 = vxor.u32 %v1333, 2147483648
      %v1351 = vsel %vm1349, %v1350, %v1341
      %v1352 = vsel %vm1345, %v1348, %v1351
      %v1353 = vsel %vm1342, nan, %v1352
      %v1354 = vand.u32 2147483647, %v344
      %vm1355 = vcmp.le.f32.partialorder %v1354, 0.7853982
      %vm1356 = vcmp.lt.s32.totalorder %v344, 0
      %v1357 = vand.u32 %v344, 2139095040
      %v1358 = vshrl.u32 %v1357, 23
      %v1359 = vsub.s32 %v1358, 127
      %v1360 = vand.u32 2147483647, %v344
      %v1361 = vand.u32 %v1360, 8388607
      %v1362 = vor.u32 %v1361, 8388608
      %v1363 = vsub.s32 0, %v1362
      %v1364 = vadd.s32 %v1359, 1
      %vm1365 = vcmp.gt.s32.totalorder %v1364, 0
      %v1366 = vsel %vm1365, %v1364, 0
      %v1367 = vshrl.u32 %v1366, 5
      %v1368 = vand.u32 %v1366, 31
      %v1369 = vsub.s32 32, %v1368
      %v1370 = vshrl.u32 683565275, %v1369
      %v1371 = vshll.u32 683565275, %v1368
      %v1372 = vshrl.u32 2475754826, %v1369
      %v1373 = vor.u32 %v1371, %v1372
      %v1374 = vshll.u32 2475754826, %v1368
      %v1375 = vshrl.u32 2131351028, %v1369
      %v1376 = vor.u32 %v1374, %v1375
      %v1377 = vshll.u32 2131351028, %v1368
      %v1378 = vshrl.u32 2102212464, %v1369
      %v1379 = vor.u32 %v1377, %v1378
      %v1380 = vshll.u32 2102212464, %v1368
      %v1381 = vshrl.u32 920167782, %v1369
      %v1382 = vor.u32 %v1380, %v1381
      %v1383 = vshll.u32 920167782, %v1368
      %v1384 = vshrl.u32 1326507024, %v1369
      %v1385 = vor.u32 %v1383, %v1384
      %vm1386 = vcmp.lt.s32.totalorder %v1367, 1
      %vm1387 = vcmp.lt.s32.totalorder %v1367, 2
      %vm1388 = vcmp.lt.s32.totalorder %v1367, 3
      %vm1389 = vcmp.lt.s32.totalorder %v1367, 4
      %v1390 = vsel %vm1386, %v1370, %v1373
      %v1391 = vsel %vm1389, %v1379, 2102212464
      %v1392 = vsel %vm1388, %v1376, %v1391
      %v1393 = vsel %vm1387, %v1390, %v1392
      %v1394 = vsel %vm1386, %v1373, %v1376
      %v1395 = vsel %vm1389, %v1382, 920167782
      %v1396 = vsel %vm1388, %v1379, %v1395
      %v1397 = vsel %vm1387, %v1394, %v1396
      %v1398 = vsel %vm1386, %v1376, %v1379
      %v1399 = vsel %vm1389, %v1385, 1326507024
      %v1400 = vsel %vm1388, %v1382, %v1399
      %v1401 = vsel %vm1387, %v1398, %v1400
      %v1402 = vshll.u32 %v1362, 8
      %v1403 = vand.u32 %v1402, 65535
      %v1404 = vshrl.u32 %v1402, 16
      %v1405 = vand.u32 %v1401, 65535
      %v1406 = vshrl.u32 %v1401, 16
      %v1407 = vmul.u32 %v1403, %v1405
      %v1408 = vmul.u32 %v1403, %v1406
      %v1409 = vmul.u32 %v1404, %v1405
      %v1410 = vmul.u32 %v1404, %v1406
      %v1411 = vshll.u32 %v1408, 16
      %v1412 = vshrl.u32 %v1408, 16
      %v1413 = vshll.u32 %v1409, 16
      %v1414 = vshrl.u32 %v1409, 16
      %vm1415 = vc.u32 %v1407, %v1411
      %v1416 = vsel %vm1415, 1, 0
      %v1417 = vadd.s32 %v1407, %v1411
      %v1418 = vadd.s32 %v1410, %v1416
      %vm1419 = vc.u32 %v1417, %v1413
      %v1420 = vsel %vm1419, 1, 0
      %v1421 = vadd.s32 %v1417, %v1413
      %v1422 = vadd.s32 %v1418, %v1420
      %v1423 = vadd.s32 %v1422, %v1412
      %v1424 = vadd.s32 %v1423, %v1414
      %v1425 = vand.u32 %v1402, 65535
      %v1426 = vshrl.u32 %v1402, 16
      %v1427 = vand.u32 %v1397, 65535
      %v1428 = vshrl.u32 %v1397, 16
      %v1429 = vmul.u32 %v1425, %v1427
      %v1430 = vmul.u32 %v1425, %v1428
      %v1431 = vmul.u32 %v1426, %v1427
      %v1432 = vmul.u32 %v1426, %v1428
      %v1433 = vshll.u32 %v1430, 16
      %v1434 = vshrl.u32 %v1430, 16
      %v1435 = vshll.u32 %v1431, 16
      %v1436 = vshrl.u32 %v1431, 16
      %vm1437 = vc.u32 %v1429, %v1433
      %v1438 = vsel %vm1437, 1, 0
      %v1439 = vadd.s32 %v1429, %v1433
      %v1440 = vadd.s32 %v1432, %v1438
      %vm1441 = vc.u32 %v1439, %v1435
      %v1442 = vsel %vm1441, 1, 0
      %v1443 = vadd.s32 %v1439, %v1435
      %v1444 = vadd.s32 %v1440, %v1442
      %v1445 = vadd.s32 %v1444, %v1434
      %v1446 = vadd.s32 %v1445, %v1436
      %v1447 = vmul.u32 %v1402, %v1393
      %v1448 = vadd.s32 %v1424, %v1443
      %vm1449 = vc.u32 %v1424, %v1443
      %v1450 = vadd.s32 %v1446, 1
      %v1451 = vsel %vm1449, %v1450, %v1446
      %v1452 = vadd.s32 %v1447, %v1451
      %v1453 = vadd.s32 %v1452, 536870912
      %v1454 = vshrl.u32 %v1453, 30
      %v1455 = vshll.u32 %v1454, 30
      %v1456 = vsub.s32 %v1452, %v1455
      %vm1457 = vcmp.lt.s32.totalorder %v1456, 0
      %v1458 = vsub.s32 0, %v1456
      %v1459 = vsel %vm1457, %v1458, %v1456
      %v1460 = vclz %v1459
      %v1461 = vsub.s32 %v1460, 2
      %vm1462 = vcmp.gt.s32.totalorder 0, %v1461
      %v1463 = vsel %vm1462, 0, %v1461
      %v1464 = vsub.s32 32, %v1463
      %v1465 = vshll.u32 %v1456, %v1463
      %v1466 = vshrl.u32 %v1448, %v1464
      %v1467 = vor.u32 %v1465, %v1466
      %v1468 = vsub.s32 4294967266, %v1463
      %v1469 = vadd.s32 %v1468, 127
      %v1470 = vshll.u32 %v1469, 23
      %v1471 = vor.u32 4788187, %v1470
      %v1472 = vand.u32 2147483647, %v1471
      %v1474 = vcvt.s32.f32 %v1467
      %v1475 = vmul.f32 %v1474, %v1472
      %v1476 = vxor.u32 %v1475, 2147483648
      %v1477 = vsel %vm1356, %v1476, %v1475
      %v1478 = vsub.s32 4, %v1454
      %v1479 = vsel %vm1356, %v1478, %v1454
      %v1480 = vsel %vm1355, %v344, %v1477
      %v1481 = vsel %vm1355, 0, %v1479
      %v1482 = vmul.f32 %v1480, %v1480
      %v1483 = vmul.f32 %v1482, -0.001358992
      %v1484 = vadd.f32 %v1483, 0.041655596
      %v1485 = vmul.f32 %v1482, %v1484
      %v1486 = vadd.f32 %v1485, -0.4999988
      %v1487 = vmul.f32 %v1482, %v1486
      %v1488 = vadd.f32 1.0, %v1487
      %v1489 = vmul.f32 %v1480, %v1480
      %v1490 = vmul.f32 %v1489, -0.00019511016
      %v1491 = vadd.f32 %v1490, 0.008332121
      %v1492 = vmul.f32 %v1489, %v1491
      %v1493 = vadd.f32 %v1492, -0.16666654
      %v1494 = vmul.f32 %v1489, %v1493
      %v1495 = vadd.f32 %v1494, 1.0
      %v1496 = vmul.f32 %v1495, %v1480
      %vm1497 = vweird.f32 %v344
      %v1498 = vadd.s32 %v1481, 3
      %v1499 = vand.u32 %v1498, 3
      %vm1500 = vcmp.lt.s32.totalorder %v1499, 2
      %vm1501 = vcmp.eq.s32.totalorder %v1499, 0
      %v1502 = vxor.u32 %v1496, 2147483648
      %v1503 = vsel %vm1501, %v1488, %v1502
      %vm1504 = vcmp.eq.s32.totalorder %v1499, 2
      %v1505 = vxor.u32 %v1488, 2147483648
      %v1506 = vsel %vm1504, %v1505, %v1496
      %v1507 = vsel %vm1500, %v1503, %v1506
      %v1508 = vsel %vm1497, nan, %v1507
      %v1509 = vand.u32 2147483647, %v347
      %vm1510 = vcmp.le.f32.partialorder %v1509, 0.7853982
      %vm1511 = vcmp.lt.s32.totalorder %v347, 0
      %v1512 = vand.u32 %v347, 2139095040
      %v1513 = vshrl.u32 %v1512, 23
      %v1514 = vsub.s32 %v1513, 127
      %v1515 = vand.u32 2147483647, %v347
      %v1516 = vand.u32 %v1515, 8388607
      %v1517 = vor.u32 %v1516, 8388608
      %v1518 = vsub.s32 0, %v1517
      %v1519 = vadd.s32 %v1514, 1
      %vm1520 = vcmp.gt.s32.totalorder %v1519, 0
      %v1521 = vsel %vm1520, %v1519, 0
      %v1522 = vshrl.u32 %v1521, 5
      %v1523 = vand.u32 %v1521, 31
      %v1524 = vsub.s32 32, %v1523
      %v1525 = vshrl.u32 683565275, %v1524
      %v1526 = vshll.u32 683565275, %v1523
      %v1527 = vshrl.u32 2475754826, %v1524
      %v1528 = vor.u32 %v1526, %v1527
      %v1529 = vshll.u32 2475754826, %v1523
      %v1530 = vshrl.u32 2131351028, %v1524
      %v1531 = vor.u32 %v1529, %v1530
      %v1532 = vshll.u32 2131351028, %v1523
      %v1533 = vshrl.u32 2102212464, %v1524
      %v1534 = vor.u32 %v1532, %v1533
      %v1535 = vshll.u32 2102212464, %v1523
      %v1536 = vshrl.u32 920167782, %v1524
      %v1537 = vor.u32 %v1535, %v1536
      %v1538 = vshll.u32 920167782, %v1523
      %v1539 = vshrl.u32 1326507024, %v1524
      %v1540 = vor.u32 %v1538, %v1539
      %vm1541 = vcmp.lt.s32.totalorder %v1522, 1
      %vm1542 = vcmp.lt.s32.totalorder %v1522, 2
      %vm1543 = vcmp.lt.s32.totalorder %v1522, 3
      %vm1544 = vcmp.lt.s32.totalorder %v1522, 4
      %v1545 = vsel %vm1541, %v1525, %v1528
      %v1546 = vsel %vm1544, %v1534, 2102212464
      %v1547 = vsel %vm1543, %v1531, %v1546
      %v1548 = vsel %vm1542, %v1545, %v1547
      %v1549 = vsel %vm1541, %v1528, %v1531
      %v1550 = vsel %vm1544, %v1537, 920167782
      %v1551 = vsel %vm1543, %v1534, %v1550
      %v1552 = vsel %vm1542, %v1549, %v1551
      %v1553 = vsel %vm1541, %v1531, %v1534
      %v1554 = vsel %vm1544, %v1540, 1326507024
      %v1555 = vsel %vm1543, %v1537, %v1554
      %v1556 = vsel %vm1542, %v1553, %v1555
      %v1557 = vshll.u32 %v1517, 8
      %v1558 = vand.u32 %v1557, 65535
      %v1559 = vshrl.u32 %v1557, 16
      %v1560 = vand.u32 %v1556, 65535
      %v1561 = vshrl.u32 %v1556, 16
      %v1562 = vmul.u32 %v1558, %v1560
      %v1563 = vmul.u32 %v1558, %v1561
      %v1564 = vmul.u32 %v1559, %v1560
      %v1565 = vmul.u32 %v1559, %v1561
      %v1566 = vshll.u32 %v1563, 16
      %v1567 = vshrl.u32 %v1563, 16
      %v1568 = vshll.u32 %v1564, 16
      %v1569 = vshrl.u32 %v1564, 16
      %vm1570 = vc.u32 %v1562, %v1566
      %v1571 = vsel %vm1570, 1, 0
      %v1572 = vadd.s32 %v1562, %v1566
      %v1573 = vadd.s32 %v1565, %v1571
      %vm1574 = vc.u32 %v1572, %v1568
      %v1575 = vsel %vm1574, 1, 0
      %v1576 = vadd.s32 %v1572, %v1568
      %v1577 = vadd.s32 %v1573, %v1575
      %v1578 = vadd.s32 %v1577, %v1567
      %v1579 = vadd.s32 %v1578, %v1569
      %v1580 = vand.u32 %v1557, 65535
      %v1581 = vshrl.u32 %v1557, 16
      %v1582 = vand.u32 %v1552, 65535
      %v1583 = vshrl.u32 %v1552, 16
      %v1584 = vmul.u32 %v1580, %v1582
      %v1585 = vmul.u32 %v1580, %v1583
      %v1586 = vmul.u32 %v1581, %v1582
      %v1587 = vmul.u32 %v1581, %v1583
      %v1588 = vshll.u32 %v1585, 16
      %v1589 = vshrl.u32 %v1585, 16
      %v1590 = vshll.u32 %v1586, 16
      %v1591 = vshrl.u32 %v1586, 16
      %vm1592 = vc.u32 %v1584, %v1588
      %v1593 = vsel %vm1592, 1, 0
      %v1594 = vadd.s32 %v1584, %v1588
      %v1595 = vadd.s32 %v1587, %v1593
      %vm1596 = vc.u32 %v1594, %v1590
      %v1597 = vsel %vm1596, 1, 0
      %v1598 = vadd.s32 %v1594, %v1590
      %v1599 = vadd.s32 %v1595, %v1597
      %v1600 = vadd.s32 %v1599, %v1589
      %v1601 = vadd.s32 %v1600, %v1591
      %v1602 = vmul.u32 %v1557, %v1548
      %v1603 = vadd.s32 %v1579, %v1598
      %vm1604 = vc.u32 %v1579, %v1598
      %v1605 = vadd.s32 %v1601, 1
      %v1606 = vsel %vm1604, %v1605, %v1601
      %v1607 = vadd.s32 %v1602, %v1606
      %v1608 = vadd.s32 %v1607, 536870912
      %v1609 = vshrl.u32 %v1608, 30
      %v1610 = vshll.u32 %v1609, 30
      %v1611 = vsub.s32 %v1607, %v1610
      %vm1612 = vcmp.lt.s32.totalorder %v1611, 0
      %v1613 = vsub.s32 0, %v1611
      %v1614 = vsel %vm1612, %v1613, %v1611
      %v1615 = vclz %v1614
      %v1616 = vsub.s32 %v1615, 2
      %vm1617 = vcmp.gt.s32.totalorder 0, %v1616
      %v1618 = vsel %vm1617, 0, %v1616
      %v1619 = vsub.s32 32, %v1618
      %v1620 = vshll.u32 %v1611, %v1618
      %v1621 = vshrl.u32 %v1603, %v1619
      %v1622 = vor.u32 %v1620, %v1621
      %v1623 = vsub.s32 4294967266, %v1618
      %v1624 = vadd.s32 %v1623, 127
      %v1625 = vshll.u32 %v1624, 23
      %v1626 = vor.u32 4788187, %v1625
      %v1627 = vand.u32 2147483647, %v1626
      %v1629 = vcvt.s32.f32 %v1622
      %v1630 = vmul.f32 %v1629, %v1627
      %v1631 = vxor.u32 %v1630, 2147483648
      %v1632 = vsel %vm1511, %v1631, %v1630
      %v1633 = vsub.s32 4, %v1609
      %v1634 = vsel %vm1511, %v1633, %v1609
      %v1635 = vsel %vm1510, %v347, %v1632
      %v1636 = vsel %vm1510, 0, %v1634
      %v1637 = vmul.f32 %v1635, %v1635
      %v1638 = vmul.f32 %v1637, -0.001358992
      %v1639 = vadd.f32 %v1638, 0.041655596
      %v1640 = vmul.f32 %v1637, %v1639
      %v1641 = vadd.f32 %v1640, -0.4999988
      %v1642 = vmul.f32 %v1637, %v1641
      %v1643 = vadd.f32 1.0, %v1642
      %v1644 = vmul.f32 %v1635, %v1635
      %v1645 = vmul.f32 %v1644, -0.00019511016
      %v1646 = vadd.f32 %v1645, 0.008332121
      %v1647 = vmul.f32 %v1644, %v1646
      %v1648 = vadd.f32 %v1647, -0.16666654
      %v1649 = vmul.f32 %v1644, %v1648
      %v1650 = vadd.f32 %v1649, 1.0
      %v1651 = vmul.f32 %v1650, %v1635
      %vm1652 = vweird.f32 %v347
      %v1653 = vadd.s32 %v1636, 3
      %v1654 = vand.u32 %v1653, 3
      %vm1655 = vcmp.lt.s32.totalorder %v1654, 2
      %vm1656 = vcmp.eq.s32.totalorder %v1654, 0
      %v1657 = vxor.u32 %v1651, 2147483648
      %v1658 = vsel %vm1656, %v1643, %v1657
      %vm1659 = vcmp.eq.s32.totalorder %v1654, 2
      %v1660 = vxor.u32 %v1643, 2147483648
      %v1661 = vsel %vm1659, %v1660, %v1651
      %v1662 = vsel %vm1655, %v1658, %v1661
      %v1663 = vsel %vm1652, nan, %v1662
      %v1664 = vand.u32 2147483647, %v350
      %vm1665 = vcmp.le.f32.partialorder %v1664, 0.7853982
      %vm1666 = vcmp.lt.s32.totalorder %v350, 0
      %v1667 = vand.u32 %v350, 2139095040
      %v1668 = vshrl.u32 %v1667, 23
      %v1669 = vsub.s32 %v1668, 127
      %v1670 = vand.u32 2147483647, %v350
      %v1671 = vand.u32 %v1670, 8388607
      %v1672 = vor.u32 %v1671, 8388608
      %v1673 = vsub.s32 0, %v1672
      %v1674 = vadd.s32 %v1669, 1
      %vm1675 = vcmp.gt.s32.totalorder %v1674, 0
      %v1676 = vsel %vm1675, %v1674, 0
      %v1677 = vshrl.u32 %v1676, 5
      %v1678 = vand.u32 %v1676, 31
      %v1679 = vsub.s32 32, %v1678
      %v1680 = vshrl.u32 683565275, %v1679
      %v1681 = vshll.u32 683565275, %v1678
      %v1682 = vshrl.u32 2475754826, %v1679
      %v1683 = vor.u32 %v1681, %v1682
      %v1684 = vshll.u32 2475754826, %v1678
      %v1685 = vshrl.u32 2131351028, %v1679
      %v1686 = vor.u32 %v1684, %v1685
      %v1687 = vshll.u32 2131351028, %v1678
      %v1688 = vshrl.u32 2102212464, %v1679
      %v1689 = vor.u32 %v1687, %v1688
      %v1690 = vshll.u32 2102212464, %v1678
      %v1691 = vshrl.u32 920167782, %v1679
      %v1692 = vor.u32 %v1690, %v1691
      %v1693 = vshll.u32 920167782, %v1678
      %v1694 = vshrl.u32 1326507024, %v1679
      %v1695 = vor.u32 %v1693, %v1694
      %vm1696 = vcmp.lt.s32.totalorder %v1677, 1
      %vm1697 = vcmp.lt.s32.totalorder %v1677, 2
      %vm1698 = vcmp.lt.s32.totalorder %v1677, 3
      %vm1699 = vcmp.lt.s32.totalorder %v1677, 4
      %v1700 = vsel %vm1696, %v1680, %v1683
      %v1701 = vsel %vm1699, %v1689, 2102212464
      %v1702 = vsel %vm1698, %v1686, %v1701
      %v1703 = vsel %vm1697, %v1700, %v1702
      %v1704 = vsel %vm1696, %v1683, %v1686
      %v1705 = vsel %vm1699, %v1692, 920167782
      %v1706 = vsel %vm1698, %v1689, %v1705
      %v1707 = vsel %vm1697, %v1704, %v1706
      %v1708 = vsel %vm1696, %v1686, %v1689
      %v1709 = vsel %vm1699, %v1695, 1326507024
      %v1710 = vsel %vm1698, %v1692, %v1709
      %v1711 = vsel %vm1697, %v1708, %v1710
      %v1712 = vshll.u32 %v1672, 8
      %v1713 = vand.u32 %v1712, 65535
      %v1714 = vshrl.u32 %v1712, 16
      %v1715 = vand.u32 %v1711, 65535
      %v1716 = vshrl.u32 %v1711, 16
      %v1717 = vmul.u32 %v1713, %v1715
      %v1718 = vmul.u32 %v1713, %v1716
      %v1719 = vmul.u32 %v1714, %v1715
      %v1720 = vmul.u32 %v1714, %v1716
      %v1721 = vshll.u32 %v1718, 16
      %v1722 = vshrl.u32 %v1718, 16
      %v1723 = vshll.u32 %v1719, 16
      %v1724 = vshrl.u32 %v1719, 16
      %vm1725 = vc.u32 %v1717, %v1721
      %v1726 = vsel %vm1725, 1, 0
      %v1727 = vadd.s32 %v1717, %v1721
      %v1728 = vadd.s32 %v1720, %v1726
      %vm1729 = vc.u32 %v1727, %v1723
      %v1730 = vsel %vm1729, 1, 0
      %v1731 = vadd.s32 %v1727, %v1723
      %v1732 = vadd.s32 %v1728, %v1730
      %v1733 = vadd.s32 %v1732, %v1722
      %v1734 = vadd.s32 %v1733, %v1724
      %v1735 = vand.u32 %v1712, 65535
      %v1736 = vshrl.u32 %v1712, 16
      %v1737 = vand.u32 %v1707, 65535
      %v1738 = vshrl.u32 %v1707, 16
      %v1739 = vmul.u32 %v1735, %v1737
      %v1740 = vmul.u32 %v1735, %v1738
      %v1741 = vmul.u32 %v1736, %v1737
      %v1742 = vmul.u32 %v1736, %v1738
      %v1743 = vshll.u32 %v1740, 16
      %v1744 = vshrl.u32 %v1740, 16
      %v1745 = vshll.u32 %v1741, 16
      %v1746 = vshrl.u32 %v1741, 16
      %vm1747 = vc.u32 %v1739, %v1743
      %v1748 = vsel %vm1747, 1, 0
      %v1749 = vadd.s32 %v1739, %v1743
      %v1750 = vadd.s32 %v1742, %v1748
      %vm1751 = vc.u32 %v1749, %v1745
      %v1752 = vsel %vm1751, 1, 0
      %v1753 = vadd.s32 %v1749, %v1745
      %v1754 = vadd.s32 %v1750, %v1752
      %v1755 = vadd.s32 %v1754, %v1744
      %v1756 = vadd.s32 %v1755, %v1746
      %v1757 = vmul.u32 %v1712, %v1703
      %v1758 = vadd.s32 %v1734, %v1753
      %vm1759 = vc.u32 %v1734, %v1753
      %v1760 = vadd.s32 %v1756, 1
      %v1761 = vsel %vm1759, %v1760, %v1756
      %v1762 = vadd.s32 %v1757, %v1761
      %v1763 = vadd.s32 %v1762, 536870912
      %v1764 = vshrl.u32 %v1763, 30
      %v1765 = vshll.u32 %v1764, 30
      %v1766 = vsub.s32 %v1762, %v1765
      %vm1767 = vcmp.lt.s32.totalorder %v1766, 0
      %v1768 = vsub.s32 0, %v1766
      %v1769 = vsel %vm1767, %v1768, %v1766
      %v1770 = vclz %v1769
      %v1771 = vsub.s32 %v1770, 2
      %vm1772 = vcmp.gt.s32.totalorder 0, %v1771
      %v1773 = vsel %vm1772, 0, %v1771
      %v1774 = vsub.s32 32, %v1773
      %v1775 = vshll.u32 %v1766, %v1773
      %v1776 = vshrl.u32 %v1758, %v1774
      %v1777 = vor.u32 %v1775, %v1776
      %v1778 = vsub.s32 4294967266, %v1773
      %v1779 = vadd.s32 %v1778, 127
      %v1780 = vshll.u32 %v1779, 23
      %v1781 = vor.u32 4788187, %v1780
      %v1782 = vand.u32 2147483647, %v1781
      %v1784 = vcvt.s32.f32 %v1777
      %v1785 = vmul.f32 %v1784, %v1782
      %v1786 = vxor.u32 %v1785, 2147483648
      %v1787 = vsel %vm1666, %v1786, %v1785
      %v1788 = vsub.s32 4, %v1764
      %v1789 = vsel %vm1666, %v1788, %v1764
      %v1790 = vsel %vm1665, %v350, %v1787
      %v1791 = vsel %vm1665, 0, %v1789
      %v1792 = vmul.f32 %v1790, %v1790
      %v1793 = vmul.f32 %v1792, -0.001358992
      %v1794 = vadd.f32 %v1793, 0.041655596
      %v1795 = vmul.f32 %v1792, %v1794
      %v1796 = vadd.f32 %v1795, -0.4999988
      %v1797 = vmul.f32 %v1792, %v1796
      %v1798 = vadd.f32 1.0, %v1797
      %v1799 = vmul.f32 %v1790, %v1790
      %v1800 = vmul.f32 %v1799, -0.00019511016
      %v1801 = vadd.f32 %v1800, 0.008332121
      %v1802 = vmul.f32 %v1799, %v1801
      %v1803 = vadd.f32 %v1802, -0.16666654
      %v1804 = vmul.f32 %v1799, %v1803
      %v1805 = vadd.f32 %v1804, 1.0
      %v1806 = vmul.f32 %v1805, %v1790
      %vm1807 = vweird.f32 %v350
      %v1808 = vadd.s32 %v1791, 3
      %v1809 = vand.u32 %v1808, 3
      %vm1810 = vcmp.lt.s32.totalorder %v1809, 2
      %vm1811 = vcmp.eq.s32.totalorder %v1809, 0
      %v1812 = vxor.u32 %v1806, 2147483648
      %v1813 = vsel %vm1811, %v1798, %v1812
      %vm1814 = vcmp.eq.s32.totalorder %v1809, 2
      %v1815 = vxor.u32 %v1798, 2147483648
      %v1816 = vsel %vm1814, %v1815, %v1806
      %v1817 = vsel %vm1810, %v1813, %v1816
      %v1818 = vsel %vm1807, nan, %v1817
      %v1819 = vand.u32 2147483647, %v353
      %vm1820 = vcmp.le.f32.partialorder %v1819, 0.7853982
      %vm1821 = vcmp.lt.s32.totalorder %v353, 0
      %v1822 = vand.u32 %v353, 2139095040
      %v1823 = vshrl.u32 %v1822, 23
      %v1824 = vsub.s32 %v1823, 127
      %v1825 = vand.u32 2147483647, %v353
      %v1826 = vand.u32 %v1825, 8388607
      %v1827 = vor.u32 %v1826, 8388608
      %v1828 = vsub.s32 0, %v1827
      %v1829 = vadd.s32 %v1824, 1
      %vm1830 = vcmp.gt.s32.totalorder %v1829, 0
      %v1831 = vsel %vm1830, %v1829, 0
      %v1832 = vshrl.u32 %v1831, 5
      %v1833 = vand.u32 %v1831, 31
      %v1834 = vsub.s32 32, %v1833
      %v1835 = vshrl.u32 683565275, %v1834
      %v1836 = vshll.u32 683565275, %v1833
      %v1837 = vshrl.u32 2475754826, %v1834
      %v1838 = vor.u32 %v1836, %v1837
      %v1839 = vshll.u32 2475754826, %v1833
      %v1840 = vshrl.u32 2131351028, %v1834
      %v1841 = vor.u32 %v1839, %v1840
      %v1842 = vshll.u32 2131351028, %v1833
      %v1843 = vshrl.u32 2102212464, %v1834
      %v1844 = vor.u32 %v1842, %v1843
      %v1845 = vshll.u32 2102212464, %v1833
      %v1846 = vshrl.u32 920167782, %v1834
      %v1847 = vor.u32 %v1845, %v1846
      %v1848 = vshll.u32 920167782, %v1833
      %v1849 = vshrl.u32 1326507024, %v1834
      %v1850 = vor.u32 %v1848, %v1849
      %vm1851 = vcmp.lt.s32.totalorder %v1832, 1
      %vm1852 = vcmp.lt.s32.totalorder %v1832, 2
      %vm1853 = vcmp.lt.s32.totalorder %v1832, 3
      %vm1854 = vcmp.lt.s32.totalorder %v1832, 4
      %v1855 = vsel %vm1851, %v1835, %v1838
      %v1856 = vsel %vm1854, %v1844, 2102212464
      %v1857 = vsel %vm1853, %v1841, %v1856
      %v1858 = vsel %vm1852, %v1855, %v1857
      %v1859 = vsel %vm1851, %v1838, %v1841
      %v1860 = vsel %vm1854, %v1847, 920167782
      %v1861 = vsel %vm1853, %v1844, %v1860
      %v1862 = vsel %vm1852, %v1859, %v1861
      %v1863 = vsel %vm1851, %v1841, %v1844
      %v1864 = vsel %vm1854, %v1850, 1326507024
      %v1865 = vsel %vm1853, %v1847, %v1864
      %v1866 = vsel %vm1852, %v1863, %v1865
      %v1867 = vshll.u32 %v1827, 8
      %v1868 = vand.u32 %v1867, 65535
      %v1869 = vshrl.u32 %v1867, 16
      %v1870 = vand.u32 %v1866, 65535
      %v1871 = vshrl.u32 %v1866, 16
      %v1872 = vmul.u32 %v1868, %v1870
      %v1873 = vmul.u32 %v1868, %v1871
      %v1874 = vmul.u32 %v1869, %v1870
      %v1875 = vmul.u32 %v1869, %v1871
      %v1876 = vshll.u32 %v1873, 16
      %v1877 = vshrl.u32 %v1873, 16
      %v1878 = vshll.u32 %v1874, 16
      %v1879 = vshrl.u32 %v1874, 16
      %vm1880 = vc.u32 %v1872, %v1876
      %v1881 = vsel %vm1880, 1, 0
      %v1882 = vadd.s32 %v1872, %v1876
      %v1883 = vadd.s32 %v1875, %v1881
      %vm1884 = vc.u32 %v1882, %v1878
      %v1885 = vsel %vm1884, 1, 0
      %v1886 = vadd.s32 %v1882, %v1878
      %v1887 = vadd.s32 %v1883, %v1885
      %v1888 = vadd.s32 %v1887, %v1877
      %v1889 = vadd.s32 %v1888, %v1879
      %v1890 = vand.u32 %v1867, 65535
      %v1891 = vshrl.u32 %v1867, 16
      %v1892 = vand.u32 %v1862, 65535
      %v1893 = vshrl.u32 %v1862, 16
      %v1894 = vmul.u32 %v1890, %v1892
      %v1895 = vmul.u32 %v1890, %v1893
      %v1896 = vmul.u32 %v1891, %v1892
      %v1897 = vmul.u32 %v1891, %v1893
      %v1898 = vshll.u32 %v1895, 16
      %v1899 = vshrl.u32 %v1895, 16
      %v1900 = vshll.u32 %v1896, 16
      %v1901 = vshrl.u32 %v1896, 16
      %vm1902 = vc.u32 %v1894, %v1898
      %v1903 = vsel %vm1902, 1, 0
      %v1904 = vadd.s32 %v1894, %v1898
      %v1905 = vadd.s32 %v1897, %v1903
      %vm1906 = vc.u32 %v1904, %v1900
      %v1907 = vsel %vm1906, 1, 0
      %v1908 = vadd.s32 %v1904, %v1900
      %v1909 = vadd.s32 %v1905, %v1907
      %v1910 = vadd.s32 %v1909, %v1899
      %v1911 = vadd.s32 %v1910, %v1901
      %v1912 = vmul.u32 %v1867, %v1858
      %v1913 = vadd.s32 %v1889, %v1908
      %vm1914 = vc.u32 %v1889, %v1908
      %v1915 = vadd.s32 %v1911, 1
      %v1916 = vsel %vm1914, %v1915, %v1911
      %v1917 = vadd.s32 %v1912, %v1916
      %v1918 = vadd.s32 %v1917, 536870912
      %v1919 = vshrl.u32 %v1918, 30
      %v1920 = vshll.u32 %v1919, 30
      %v1921 = vsub.s32 %v1917, %v1920
      %vm1922 = vcmp.lt.s32.totalorder %v1921, 0
      %v1923 = vsub.s32 0, %v1921
      %v1924 = vsel %vm1922, %v1923, %v1921
      %v1925 = vclz %v1924
      %v1926 = vsub.s32 %v1925, 2
      %vm1927 = vcmp.gt.s32.totalorder 0, %v1926
      %v1928 = vsel %vm1927, 0, %v1926
      %v1929 = vsub.s32 32, %v1928
      %v1930 = vshll.u32 %v1921, %v1928
      %v1931 = vshrl.u32 %v1913, %v1929
      %v1932 = vor.u32 %v1930, %v1931
      %v1933 = vsub.s32 4294967266, %v1928
      %v1934 = vadd.s32 %v1933, 127
      %v1935 = vshll.u32 %v1934, 23
      %v1936 = vor.u32 4788187, %v1935
      %v1937 = vand.u32 2147483647, %v1936
      %v1939 = vcvt.s32.f32 %v1932
      %v1940 = vmul.f32 %v1939, %v1937
      %v1941 = vxor.u32 %v1940, 2147483648
      %v1942 = vsel %vm1821, %v1941, %v1940
      %v1943 = vsub.s32 4, %v1919
      %v1944 = vsel %vm1821, %v1943, %v1919
      %v1945 = vsel %vm1820, %v353, %v1942
      %v1946 = vsel %vm1820, 0, %v1944
      %v1947 = vmul.f32 %v1945, %v1945
      %v1948 = vmul.f32 %v1947, -0.001358992
      %v1949 = vadd.f32 %v1948, 0.041655596
      %v1950 = vmul.f32 %v1947, %v1949
      %v1951 = vadd.f32 %v1950, -0.4999988
      %v1952 = vmul.f32 %v1947, %v1951
      %v1953 = vadd.f32 1.0, %v1952
      %v1954 = vmul.f32 %v1945, %v1945
      %v1955 = vmul.f32 %v1954, -0.00019511016
      %v1956 = vadd.f32 %v1955, 0.008332121
      %v1957 = vmul.f32 %v1954, %v1956
      %v1958 = vadd.f32 %v1957, -0.16666654
      %v1959 = vmul.f32 %v1954, %v1958
      %v1960 = vadd.f32 %v1959, 1.0
      %v1961 = vmul.f32 %v1960, %v1945
      %vm1962 = vweird.f32 %v353
      %v1963 = vadd.s32 %v1946, 3
      %v1964 = vand.u32 %v1963, 3
      %vm1965 = vcmp.lt.s32.totalorder %v1964, 2
      %vm1966 = vcmp.eq.s32.totalorder %v1964, 0
      %v1967 = vxor.u32 %v1961, 2147483648
      %v1968 = vsel %vm1966, %v1953, %v1967
      %vm1969 = vcmp.eq.s32.totalorder %v1964, 2
      %v1970 = vxor.u32 %v1953, 2147483648
      %v1971 = vsel %vm1969, %v1970, %v1961
      %v1972 = vsel %vm1965, %v1968, %v1971
      %v1973 = vsel %vm1962, nan, %v1972
      %v1974 = vand.u32 2147483647, %v356
      %vm1975 = vcmp.le.f32.partialorder %v1974, 0.7853982
      %vm1976 = vcmp.lt.s32.totalorder %v356, 0
      %v1977 = vand.u32 %v356, 2139095040
      %v1978 = vshrl.u32 %v1977, 23
      %v1979 = vsub.s32 %v1978, 127
      %v1980 = vand.u32 2147483647, %v356
      %v1981 = vand.u32 %v1980, 8388607
      %v1982 = vor.u32 %v1981, 8388608
      %v1983 = vsub.s32 0, %v1982
      %v1984 = vadd.s32 %v1979, 1
      %vm1985 = vcmp.gt.s32.totalorder %v1984, 0
      %v1986 = vsel %vm1985, %v1984, 0
      %v1987 = vshrl.u32 %v1986, 5
      %v1988 = vand.u32 %v1986, 31
      %v1989 = vsub.s32 32, %v1988
      %v1990 = vshrl.u32 683565275, %v1989
      %v1991 = vshll.u32 683565275, %v1988
      %v1992 = vshrl.u32 2475754826, %v1989
      %v1993 = vor.u32 %v1991, %v1992
      %v1994 = vshll.u32 2475754826, %v1988
      %v1995 = vshrl.u32 2131351028, %v1989
      %v1996 = vor.u32 %v1994, %v1995
      %v1997 = vshll.u32 2131351028, %v1988
      %v1998 = vshrl.u32 2102212464, %v1989
      %v1999 = vor.u32 %v1997, %v1998
      %v2000 = vshll.u32 2102212464, %v1988
      %v2001 = vshrl.u32 920167782, %v1989
      %v2002 = vor.u32 %v2000, %v2001
      %v2003 = vshll.u32 920167782, %v1988
      %v2004 = vshrl.u32 1326507024, %v1989
      %v2005 = vor.u32 %v2003, %v2004
      %vm2006 = vcmp.lt.s32.totalorder %v1987, 1
      %vm2007 = vcmp.lt.s32.totalorder %v1987, 2
      %vm2008 = vcmp.lt.s32.totalorder %v1987, 3
      %vm2009 = vcmp.lt.s32.totalorder %v1987, 4
      %v2010 = vsel %vm2006, %v1990, %v1993
      %v2011 = vsel %vm2009, %v1999, 2102212464
      %v2012 = vsel %vm2008, %v1996, %v2011
      %v2013 = vsel %vm2007, %v2010, %v2012
      %v2014 = vsel %vm2006, %v1993, %v1996
      %v2015 = vsel %vm2009, %v2002, 920167782
      %v2016 = vsel %vm2008, %v1999, %v2015
      %v2017 = vsel %vm2007, %v2014, %v2016
      %v2018 = vsel %vm2006, %v1996, %v1999
      %v2019 = vsel %vm2009, %v2005, 1326507024
      %v2020 = vsel %vm2008, %v2002, %v2019
      %v2021 = vsel %vm2007, %v2018, %v2020
      %v2022 = vshll.u32 %v1982, 8
      %v2023 = vand.u32 %v2022, 65535
      %v2024 = vshrl.u32 %v2022, 16
      %v2025 = vand.u32 %v2021, 65535
      %v2026 = vshrl.u32 %v2021, 16
      %v2027 = vmul.u32 %v2023, %v2025
      %v2028 = vmul.u32 %v2023, %v2026
      %v2029 = vmul.u32 %v2024, %v2025
      %v2030 = vmul.u32 %v2024, %v2026
      %v2031 = vshll.u32 %v2028, 16
      %v2032 = vshrl.u32 %v2028, 16
      %v2033 = vshll.u32 %v2029, 16
      %v2034 = vshrl.u32 %v2029, 16
      %vm2035 = vc.u32 %v2027, %v2031
      %v2036 = vsel %vm2035, 1, 0
      %v2037 = vadd.s32 %v2027, %v2031
      %v2038 = vadd.s32 %v2030, %v2036
      %vm2039 = vc.u32 %v2037, %v2033
      %v2040 = vsel %vm2039, 1, 0
      %v2041 = vadd.s32 %v2037, %v2033
      %v2042 = vadd.s32 %v2038, %v2040
      %v2043 = vadd.s32 %v2042, %v2032
      %v2044 = vadd.s32 %v2043, %v2034
      %v2045 = vand.u32 %v2022, 65535
      %v2046 = vshrl.u32 %v2022, 16
      %v2047 = vand.u32 %v2017, 65535
      %v2048 = vshrl.u32 %v2017, 16
      %v2049 = vmul.u32 %v2045, %v2047
      %v2050 = vmul.u32 %v2045, %v2048
      %v2051 = vmul.u32 %v2046, %v2047
      %v2052 = vmul.u32 %v2046, %v2048
      %v2053 = vshll.u32 %v2050, 16
      %v2054 = vshrl.u32 %v2050, 16
      %v2055 = vshll.u32 %v2051, 16
      %v2056 = vshrl.u32 %v2051, 16
      %vm2057 = vc.u32 %v2049, %v2053
      %v2058 = vsel %vm2057, 1, 0
      %v2059 = vadd.s32 %v2049, %v2053
      %v2060 = vadd.s32 %v2052, %v2058
      %vm2061 = vc.u32 %v2059, %v2055
      %v2062 = vsel %vm2061, 1, 0
      %v2063 = vadd.s32 %v2059, %v2055
      %v2064 = vadd.s32 %v2060, %v2062
      %v2065 = vadd.s32 %v2064, %v2054
      %v2066 = vadd.s32 %v2065, %v2056
      %v2067 = vmul.u32 %v2022, %v2013
      %v2068 = vadd.s32 %v2044, %v2063
      %vm2069 = vc.u32 %v2044, %v2063
      %v2070 = vadd.s32 %v2066, 1
      %v2071 = vsel %vm2069, %v2070, %v2066
      %v2072 = vadd.s32 %v2067, %v2071
      %v2073 = vadd.s32 %v2072, 536870912
      %v2074 = vshrl.u32 %v2073, 30
      %v2075 = vshll.u32 %v2074, 30
      %v2076 = vsub.s32 %v2072, %v2075
      %vm2077 = vcmp.lt.s32.totalorder %v2076, 0
      %v2078 = vsub.s32 0, %v2076
      %v2079 = vsel %vm2077, %v2078, %v2076
      %v2080 = vclz %v2079
      %v2081 = vsub.s32 %v2080, 2
      %vm2082 = vcmp.gt.s32.totalorder 0, %v2081
      %v2083 = vsel %vm2082, 0, %v2081
      %v2084 = vsub.s32 32, %v2083
      %v2085 = vshll.u32 %v2076, %v2083
      %v2086 = vshrl.u32 %v2068, %v2084
      %v2087 = vor.u32 %v2085, %v2086
      %v2088 = vsub.s32 4294967266, %v2083
      %v2089 = vadd.s32 %v2088, 127
      %v2090 = vshll.u32 %v2089, 23
      %v2091 = vor.u32 4788187, %v2090
      %v2092 = vand.u32 2147483647, %v2091
      %v2094 = vcvt.s32.f32 %v2087
      %v2095 = vmul.f32 %v2094, %v2092
      %v2096 = vxor.u32 %v2095, 2147483648
      %v2097 = vsel %vm1976, %v2096, %v2095
      %v2098 = vsub.s32 4, %v2074
      %v2099 = vsel %vm1976, %v2098, %v2074
      %v2100 = vsel %vm1975, %v356, %v2097
      %v2101 = vsel %vm1975, 0, %v2099
      %v2102 = vmul.f32 %v2100, %v2100
      %v2103 = vmul.f32 %v2102, -0.001358992
      %v2104 = vadd.f32 %v2103, 0.041655596
      %v2105 = vmul.f32 %v2102, %v2104
      %v2106 = vadd.f32 %v2105, -0.4999988
      %v2107 = vmul.f32 %v2102, %v2106
      %v2108 = vadd.f32 1.0, %v2107
      %v2109 = vmul.f32 %v2100, %v2100
      %v2110 = vmul.f32 %v2109, -0.00019511016
      %v2111 = vadd.f32 %v2110, 0.008332121
      %v2112 = vmul.f32 %v2109, %v2111
      %v2113 = vadd.f32 %v2112, -0.16666654
      %v2114 = vmul.f32 %v2109, %v2113
      %v2115 = vadd.f32 %v2114, 1.0
      %v2116 = vmul.f32 %v2115, %v2100
      %vm2117 = vweird.f32 %v356
      %v2118 = vadd.s32 %v2101, 3
      %v2119 = vand.u32 %v2118, 3
      %vm2120 = vcmp.lt.s32.totalorder %v2119, 2
      %vm2121 = vcmp.eq.s32.totalorder %v2119, 0
      %v2122 = vxor.u32 %v2116, 2147483648
      %v2123 = vsel %vm2121, %v2108, %v2122
      %vm2124 = vcmp.eq.s32.totalorder %v2119, 2
      %v2125 = vxor.u32 %v2108, 2147483648
      %v2126 = vsel %vm2124, %v2125, %v2116
      %v2127 = vsel %vm2120, %v2123, %v2126
      %v2128 = vsel %vm2117, nan, %v2127
      %v2129 = vand.u32 2147483647, %v359
      %vm2130 = vcmp.le.f32.partialorder %v2129, 0.7853982
      %vm2131 = vcmp.lt.s32.totalorder %v359, 0
      %v2132 = vand.u32 %v359, 2139095040
      %v2133 = vshrl.u32 %v2132, 23
      %v2134 = vsub.s32 %v2133, 127
      %v2135 = vand.u32 2147483647, %v359
      %v2136 = vand.u32 %v2135, 8388607
      %v2137 = vor.u32 %v2136, 8388608
      %v2138 = vsub.s32 0, %v2137
      %v2139 = vadd.s32 %v2134, 1
      %vm2140 = vcmp.gt.s32.totalorder %v2139, 0
      %v2141 = vsel %vm2140, %v2139, 0
      %v2142 = vshrl.u32 %v2141, 5
      %v2143 = vand.u32 %v2141, 31
      %v2144 = vsub.s32 32, %v2143
      %v2145 = vshrl.u32 683565275, %v2144
      %v2146 = vshll.u32 683565275, %v2143
      %v2147 = vshrl.u32 2475754826, %v2144
      %v2148 = vor.u32 %v2146, %v2147
      %v2149 = vshll.u32 2475754826, %v2143
      %v2150 = vshrl.u32 2131351028, %v2144
      %v2151 = vor.u32 %v2149, %v2150
      %v2152 = vshll.u32 2131351028, %v2143
      %v2153 = vshrl.u32 2102212464, %v2144
      %v2154 = vor.u32 %v2152, %v2153
      %v2155 = vshll.u32 2102212464, %v2143
      %v2156 = vshrl.u32 920167782, %v2144
      %v2157 = vor.u32 %v2155, %v2156
      %v2158 = vshll.u32 920167782, %v2143
      %v2159 = vshrl.u32 1326507024, %v2144
      %v2160 = vor.u32 %v2158, %v2159
      %vm2161 = vcmp.lt.s32.totalorder %v2142, 1
      %vm2162 = vcmp.lt.s32.totalorder %v2142, 2
      %vm2163 = vcmp.lt.s32.totalorder %v2142, 3
      %vm2164 = vcmp.lt.s32.totalorder %v2142, 4
      %v2165 = vsel %vm2161, %v2145, %v2148
      %v2166 = vsel %vm2164, %v2154, 2102212464
      %v2167 = vsel %vm2163, %v2151, %v2166
      %v2168 = vsel %vm2162, %v2165, %v2167
      %v2169 = vsel %vm2161, %v2148, %v2151
      %v2170 = vsel %vm2164, %v2157, 920167782
      %v2171 = vsel %vm2163, %v2154, %v2170
      %v2172 = vsel %vm2162, %v2169, %v2171
      %v2173 = vsel %vm2161, %v2151, %v2154
      %v2174 = vsel %vm2164, %v2160, 1326507024
      %v2175 = vsel %vm2163, %v2157, %v2174
      %v2176 = vsel %vm2162, %v2173, %v2175
      %v2177 = vshll.u32 %v2137, 8
      %v2178 = vand.u32 %v2177, 65535
      %v2179 = vshrl.u32 %v2177, 16
      %v2180 = vand.u32 %v2176, 65535
      %v2181 = vshrl.u32 %v2176, 16
      %v2182 = vmul.u32 %v2178, %v2180
      %v2183 = vmul.u32 %v2178, %v2181
      %v2184 = vmul.u32 %v2179, %v2180
      %v2185 = vmul.u32 %v2179, %v2181
      %v2186 = vshll.u32 %v2183, 16
      %v2187 = vshrl.u32 %v2183, 16
      %v2188 = vshll.u32 %v2184, 16
      %v2189 = vshrl.u32 %v2184, 16
      %vm2190 = vc.u32 %v2182, %v2186
      %v2191 = vsel %vm2190, 1, 0
      %v2192 = vadd.s32 %v2182, %v2186
      %v2193 = vadd.s32 %v2185, %v2191
      %vm2194 = vc.u32 %v2192, %v2188
      %v2195 = vsel %vm2194, 1, 0
      %v2196 = vadd.s32 %v2192, %v2188
      %v2197 = vadd.s32 %v2193, %v2195
      %v2198 = vadd.s32 %v2197, %v2187
      %v2199 = vadd.s32 %v2198, %v2189
      %v2200 = vand.u32 %v2177, 65535
      %v2201 = vshrl.u32 %v2177, 16
      %v2202 = vand.u32 %v2172, 65535
      %v2203 = vshrl.u32 %v2172, 16
      %v2204 = vmul.u32 %v2200, %v2202
      %v2205 = vmul.u32 %v2200, %v2203
      %v2206 = vmul.u32 %v2201, %v2202
      %v2207 = vmul.u32 %v2201, %v2203
      %v2208 = vshll.u32 %v2205, 16
      %v2209 = vshrl.u32 %v2205, 16
      %v2210 = vshll.u32 %v2206, 16
      %v2211 = vshrl.u32 %v2206, 16
      %vm2212 = vc.u32 %v2204, %v2208
      %v2213 = vsel %vm2212, 1, 0
      %v2214 = vadd.s32 %v2204, %v2208
      %v2215 = vadd.s32 %v2207, %v2213
      %vm2216 = vc.u32 %v2214, %v2210
      %v2217 = vsel %vm2216, 1, 0
      %v2218 = vadd.s32 %v2214, %v2210
      %v2219 = vadd.s32 %v2215, %v2217
      %v2220 = vadd.s32 %v2219, %v2209
      %v2221 = vadd.s32 %v2220, %v2211
      %v2222 = vmul.u32 %v2177, %v2168
      %v2223 = vadd.s32 %v2199, %v2218
      %vm2224 = vc.u32 %v2199, %v2218
      %v2225 = vadd.s32 %v2221, 1
      %v2226 = vsel %vm2224, %v2225, %v2221
      %v2227 = vadd.s32 %v2222, %v2226
      %v2228 = vadd.s32 %v2227, 536870912
      %v2229 = vshrl.u32 %v2228, 30
      %v2230 = vshll.u32 %v2229, 30
      %v2231 = vsub.s32 %v2227, %v2230
      %vm2232 = vcmp.lt.s32.totalorder %v2231, 0
      %v2233 = vsub.s32 0, %v2231
      %v2234 = vsel %vm2232, %v2233, %v2231
      %v2235 = vclz %v2234
      %v2236 = vsub.s32 %v2235, 2
      %vm2237 = vcmp.gt.s32.totalorder 0, %v2236
      %v2238 = vsel %vm2237, 0, %v2236
      %v2239 = vsub.s32 32, %v2238
      %v2240 = vshll.u32 %v2231, %v2238
      %v2241 = vshrl.u32 %v2223, %v2239
      %v2242 = vor.u32 %v2240, %v2241
      %v2243 = vsub.s32 4294967266, %v2238
      %v2244 = vadd.s32 %v2243, 127
      %v2245 = vshll.u32 %v2244, 23
      %v2246 = vor.u32 4788187, %v2245
      %v2247 = vand.u32 2147483647, %v2246
      %v2249 = vcvt.s32.f32 %v2242
      %v2250 = vmul.f32 %v2249, %v2247
      %v2251 = vxor.u32 %v2250, 2147483648
      %v2252 = vsel %vm2131, %v2251, %v2250
      %v2253 = vsub.s32 4, %v2229
      %v2254 = vsel %vm2131, %v2253, %v2229
      %v2255 = vsel %vm2130, %v359, %v2252
      %v2256 = vsel %vm2130, 0, %v2254
      %v2257 = vmul.f32 %v2255, %v2255
      %v2258 = vmul.f32 %v2257, -0.001358992
      %v2259 = vadd.f32 %v2258, 0.041655596
      %v2260 = vmul.f32 %v2257, %v2259
      %v2261 = vadd.f32 %v2260, -0.4999988
      %v2262 = vmul.f32 %v2257, %v2261
      %v2263 = vadd.f32 1.0, %v2262
      %v2264 = vmul.f32 %v2255, %v2255
      %v2265 = vmul.f32 %v2264, -0.00019511016
      %v2266 = vadd.f32 %v2265, 0.008332121
      %v2267 = vmul.f32 %v2264, %v2266
      %v2268 = vadd.f32 %v2267, -0.16666654
      %v2269 = vmul.f32 %v2264, %v2268
      %v2270 = vadd.f32 %v2269, 1.0
      %v2271 = vmul.f32 %v2270, %v2255
      %vm2272 = vweird.f32 %v359
      %v2273 = vadd.s32 %v2256, 3
      %v2274 = vand.u32 %v2273, 3
      %vm2275 = vcmp.lt.s32.totalorder %v2274, 2
      %vm2276 = vcmp.eq.s32.totalorder %v2274, 0
      %v2277 = vxor.u32 %v2271, 2147483648
      %v2278 = vsel %vm2276, %v2263, %v2277
      %vm2279 = vcmp.eq.s32.totalorder %v2274, 2
      %v2280 = vxor.u32 %v2263, 2147483648
      %v2281 = vsel %vm2279, %v2280, %v2271
      %v2282 = vsel %vm2275, %v2278, %v2281
      %v2283 = vsel %vm2272, nan, %v2282
      %v2284 = vand.u32 2147483647, %v362
      %vm2285 = vcmp.le.f32.partialorder %v2284, 0.7853982
      %vm2286 = vcmp.lt.s32.totalorder %v362, 0
      %v2287 = vand.u32 %v362, 2139095040
      %v2288 = vshrl.u32 %v2287, 23
      %v2289 = vsub.s32 %v2288, 127
      %v2290 = vand.u32 2147483647, %v362
      %v2291 = vand.u32 %v2290, 8388607
      %v2292 = vor.u32 %v2291, 8388608
      %v2293 = vsub.s32 0, %v2292
      %v2294 = vadd.s32 %v2289, 1
      %vm2295 = vcmp.gt.s32.totalorder %v2294, 0
      %v2296 = vsel %vm2295, %v2294, 0
      %v2297 = vshrl.u32 %v2296, 5
      %v2298 = vand.u32 %v2296, 31
      %v2299 = vsub.s32 32, %v2298
      %v2300 = vshrl.u32 683565275, %v2299
      %v2301 = vshll.u32 683565275, %v2298
      %v2302 = vshrl.u32 2475754826, %v2299
      %v2303 = vor.u32 %v2301, %v2302
      %v2304 = vshll.u32 2475754826, %v2298
      %v2305 = vshrl.u32 2131351028, %v2299
      %v2306 = vor.u32 %v2304, %v2305
      %v2307 = vshll.u32 2131351028, %v2298
      %v2308 = vshrl.u32 2102212464, %v2299
      %v2309 = vor.u32 %v2307, %v2308
      %v2310 = vshll.u32 2102212464, %v2298
      %v2311 = vshrl.u32 920167782, %v2299
      %v2312 = vor.u32 %v2310, %v2311
      %v2313 = vshll.u32 920167782, %v2298
      %v2314 = vshrl.u32 1326507024, %v2299
      %v2315 = vor.u32 %v2313, %v2314
      %vm2316 = vcmp.lt.s32.totalorder %v2297, 1
      %vm2317 = vcmp.lt.s32.totalorder %v2297, 2
      %vm2318 = vcmp.lt.s32.totalorder %v2297, 3
      %vm2319 = vcmp.lt.s32.totalorder %v2297, 4
      %v2320 = vsel %vm2316, %v2300, %v2303
      %v2321 = vsel %vm2319, %v2309, 2102212464
      %v2322 = vsel %vm2318, %v2306, %v2321
      %v2323 = vsel %vm2317, %v2320, %v2322
      %v2324 = vsel %vm2316, %v2303, %v2306
      %v2325 = vsel %vm2319, %v2312, 920167782
      %v2326 = vsel %vm2318, %v2309, %v2325
      %v2327 = vsel %vm2317, %v2324, %v2326
      %v2328 = vsel %vm2316, %v2306, %v2309
      %v2329 = vsel %vm2319, %v2315, 1326507024
      %v2330 = vsel %vm2318, %v2312, %v2329
      %v2331 = vsel %vm2317, %v2328, %v2330
      %v2332 = vshll.u32 %v2292, 8
      %v2333 = vand.u32 %v2332, 65535
      %v2334 = vshrl.u32 %v2332, 16
      %v2335 = vand.u32 %v2331, 65535
      %v2336 = vshrl.u32 %v2331, 16
      %v2337 = vmul.u32 %v2333, %v2335
      %v2338 = vmul.u32 %v2333, %v2336
      %v2339 = vmul.u32 %v2334, %v2335
      %v2340 = vmul.u32 %v2334, %v2336
      %v2341 = vshll.u32 %v2338, 16
      %v2342 = vshrl.u32 %v2338, 16
      %v2343 = vshll.u32 %v2339, 16
      %v2344 = vshrl.u32 %v2339, 16
      %vm2345 = vc.u32 %v2337, %v2341
      %v2346 = vsel %vm2345, 1, 0
      %v2347 = vadd.s32 %v2337, %v2341
      %v2348 = vadd.s32 %v2340, %v2346
      %vm2349 = vc.u32 %v2347, %v2343
      %v2350 = vsel %vm2349, 1, 0
      %v2351 = vadd.s32 %v2347, %v2343
      %v2352 = vadd.s32 %v2348, %v2350
      %v2353 = vadd.s32 %v2352, %v2342
      %v2354 = vadd.s32 %v2353, %v2344
      %v2355 = vand.u32 %v2332, 65535
      %v2356 = vshrl.u32 %v2332, 16
      %v2357 = vand.u32 %v2327, 65535
      %v2358 = vshrl.u32 %v2327, 16
      %v2359 = vmul.u32 %v2355, %v2357
      %v2360 = vmul.u32 %v2355, %v2358
      %v2361 = vmul.u32 %v2356, %v2357
      %v2362 = vmul.u32 %v2356, %v2358
      %v2363 = vshll.u32 %v2360, 16
      %v2364 = vshrl.u32 %v2360, 16
      %v2365 = vshll.u32 %v2361, 16
      %v2366 = vshrl.u32 %v2361, 16
      %vm2367 = vc.u32 %v2359, %v2363
      %v2368 = vsel %vm2367, 1, 0
      %v2369 = vadd.s32 %v2359, %v2363
      %v2370 = vadd.s32 %v2362, %v2368
      %vm2371 = vc.u32 %v2369, %v2365
      %v2372 = vsel %vm2371, 1, 0
      %v2373 = vadd.s32 %v2369, %v2365
      %v2374 = vadd.s32 %v2370, %v2372
      %v2375 = vadd.s32 %v2374, %v2364
      %v2376 = vadd.s32 %v2375, %v2366
      %v2377 = vmul.u32 %v2332, %v2323
      %v2378 = vadd.s32 %v2354, %v2373
      %vm2379 = vc.u32 %v2354, %v2373
      %v2380 = vadd.s32 %v2376, 1
      %v2381 = vsel %vm2379, %v2380, %v2376
      %v2382 = vadd.s32 %v2377, %v2381
      %v2383 = vadd.s32 %v2382, 536870912
      %v2384 = vshrl.u32 %v2383, 30
      %v2385 = vshll.u32 %v2384, 30
      %v2386 = vsub.s32 %v2382, %v2385
      %vm2387 = vcmp.lt.s32.totalorder %v2386, 0
      %v2388 = vsub.s32 0, %v2386
      %v2389 = vsel %vm2387, %v2388, %v2386
      %v2390 = vclz %v2389
      %v2391 = vsub.s32 %v2390, 2
      %vm2392 = vcmp.gt.s32.totalorder 0, %v2391
      %v2393 = vsel %vm2392, 0, %v2391
      %v2394 = vsub.s32 32, %v2393
      %v2395 = vshll.u32 %v2386, %v2393
      %v2396 = vshrl.u32 %v2378, %v2394
      %v2397 = vor.u32 %v2395, %v2396
      %v2398 = vsub.s32 4294967266, %v2393
      %v2399 = vadd.s32 %v2398, 127
      %v2400 = vshll.u32 %v2399, 23
      %v2401 = vor.u32 4788187, %v2400
      %v2402 = vand.u32 2147483647, %v2401
      %v2404 = vcvt.s32.f32 %v2397
      %v2405 = vmul.f32 %v2404, %v2402
      %v2406 = vxor.u32 %v2405, 2147483648
      %v2407 = vsel %vm2286, %v2406, %v2405
      %v2408 = vsub.s32 4, %v2384
      %v2409 = vsel %vm2286, %v2408, %v2384
      %v2410 = vsel %vm2285, %v362, %v2407
      %v2411 = vsel %vm2285, 0, %v2409
      %v2412 = vmul.f32 %v2410, %v2410
      %v2413 = vmul.f32 %v2412, -0.001358992
      %v2414 = vadd.f32 %v2413, 0.041655596
      %v2415 = vmul.f32 %v2412, %v2414
      %v2416 = vadd.f32 %v2415, -0.4999988
      %v2417 = vmul.f32 %v2412, %v2416
      %v2418 = vadd.f32 1.0, %v2417
      %v2419 = vmul.f32 %v2410, %v2410
      %v2420 = vmul.f32 %v2419, -0.00019511016
      %v2421 = vadd.f32 %v2420, 0.008332121
      %v2422 = vmul.f32 %v2419, %v2421
      %v2423 = vadd.f32 %v2422, -0.16666654
      %v2424 = vmul.f32 %v2419, %v2423
      %v2425 = vadd.f32 %v2424, 1.0
      %v2426 = vmul.f32 %v2425, %v2410
      %vm2427 = vweird.f32 %v362
      %v2428 = vadd.s32 %v2411, 3
      %v2429 = vand.u32 %v2428, 3
      %vm2430 = vcmp.lt.s32.totalorder %v2429, 2
      %vm2431 = vcmp.eq.s32.totalorder %v2429, 0
      %v2432 = vxor.u32 %v2426, 2147483648
      %v2433 = vsel %vm2431, %v2418, %v2432
      %vm2434 = vcmp.eq.s32.totalorder %v2429, 2
      %v2435 = vxor.u32 %v2418, 2147483648
      %v2436 = vsel %vm2434, %v2435, %v2426
      %v2437 = vsel %vm2430, %v2433, %v2436
      %v2438 = vsel %vm2427, nan, %v2437
      %v2439 = vand.u32 2147483647, %v365
      %vm2440 = vcmp.le.f32.partialorder %v2439, 0.7853982
      %vm2441 = vcmp.lt.s32.totalorder %v365, 0
      %v2442 = vand.u32 %v365, 2139095040
      %v2443 = vshrl.u32 %v2442, 23
      %v2444 = vsub.s32 %v2443, 127
      %v2445 = vand.u32 2147483647, %v365
      %v2446 = vand.u32 %v2445, 8388607
      %v2447 = vor.u32 %v2446, 8388608
      %v2448 = vsub.s32 0, %v2447
      %v2449 = vadd.s32 %v2444, 1
      %vm2450 = vcmp.gt.s32.totalorder %v2449, 0
      %v2451 = vsel %vm2450, %v2449, 0
      %v2452 = vshrl.u32 %v2451, 5
      %v2453 = vand.u32 %v2451, 31
      %v2454 = vsub.s32 32, %v2453
      %v2455 = vshrl.u32 683565275, %v2454
      %v2456 = vshll.u32 683565275, %v2453
      %v2457 = vshrl.u32 2475754826, %v2454
      %v2458 = vor.u32 %v2456, %v2457
      %v2459 = vshll.u32 2475754826, %v2453
      %v2460 = vshrl.u32 2131351028, %v2454
      %v2461 = vor.u32 %v2459, %v2460
      %v2462 = vshll.u32 2131351028, %v2453
      %v2463 = vshrl.u32 2102212464, %v2454
      %v2464 = vor.u32 %v2462, %v2463
      %v2465 = vshll.u32 2102212464, %v2453
      %v2466 = vshrl.u32 920167782, %v2454
      %v2467 = vor.u32 %v2465, %v2466
      %v2468 = vshll.u32 920167782, %v2453
      %v2469 = vshrl.u32 1326507024, %v2454
      %v2470 = vor.u32 %v2468, %v2469
      %vm2471 = vcmp.lt.s32.totalorder %v2452, 1
      %vm2472 = vcmp.lt.s32.totalorder %v2452, 2
      %vm2473 = vcmp.lt.s32.totalorder %v2452, 3
      %vm2474 = vcmp.lt.s32.totalorder %v2452, 4
      %v2475 = vsel %vm2471, %v2455, %v2458
      %v2476 = vsel %vm2474, %v2464, 2102212464
      %v2477 = vsel %vm2473, %v2461, %v2476
      %v2478 = vsel %vm2472, %v2475, %v2477
      %v2479 = vsel %vm2471, %v2458, %v2461
      %v2480 = vsel %vm2474, %v2467, 920167782
      %v2481 = vsel %vm2473, %v2464, %v2480
      %v2482 = vsel %vm2472, %v2479, %v2481
      %v2483 = vsel %vm2471, %v2461, %v2464
      %v2484 = vsel %vm2474, %v2470, 1326507024
      %v2485 = vsel %vm2473, %v2467, %v2484
      %v2486 = vsel %vm2472, %v2483, %v2485
      %v2487 = vshll.u32 %v2447, 8
      %v2488 = vand.u32 %v2487, 65535
      %v2489 = vshrl.u32 %v2487, 16
      %v2490 = vand.u32 %v2486, 65535
      %v2491 = vshrl.u32 %v2486, 16
      %v2492 = vmul.u32 %v2488, %v2490
      %v2493 = vmul.u32 %v2488, %v2491
      %v2494 = vmul.u32 %v2489, %v2490
      %v2495 = vmul.u32 %v2489, %v2491
      %v2496 = vshll.u32 %v2493, 16
      %v2497 = vshrl.u32 %v2493, 16
      %v2498 = vshll.u32 %v2494, 16
      %v2499 = vshrl.u32 %v2494, 16
      %vm2500 = vc.u32 %v2492, %v2496
      %v2501 = vsel %vm2500, 1, 0
      %v2502 = vadd.s32 %v2492, %v2496
      %v2503 = vadd.s32 %v2495, %v2501
      %vm2504 = vc.u32 %v2502, %v2498
      %v2505 = vsel %vm2504, 1, 0
      %v2506 = vadd.s32 %v2502, %v2498
      %v2507 = vadd.s32 %v2503, %v2505
      %v2508 = vadd.s32 %v2507, %v2497
      %v2509 = vadd.s32 %v2508, %v2499
      %v2510 = vand.u32 %v2487, 65535
      %v2511 = vshrl.u32 %v2487, 16
      %v2512 = vand.u32 %v2482, 65535
      %v2513 = vshrl.u32 %v2482, 16
      %v2514 = vmul.u32 %v2510, %v2512
      %v2515 = vmul.u32 %v2510, %v2513
      %v2516 = vmul.u32 %v2511, %v2512
      %v2517 = vmul.u32 %v2511, %v2513
      %v2518 = vshll.u32 %v2515, 16
      %v2519 = vshrl.u32 %v2515, 16
      %v2520 = vshll.u32 %v2516, 16
      %v2521 = vshrl.u32 %v2516, 16
      %vm2522 = vc.u32 %v2514, %v2518
      %v2523 = vsel %vm2522, 1, 0
      %v2524 = vadd.s32 %v2514, %v2518
      %v2525 = vadd.s32 %v2517, %v2523
      %vm2526 = vc.u32 %v2524, %v2520
      %v2527 = vsel %vm2526, 1, 0
      %v2528 = vadd.s32 %v2524, %v2520
      %v2529 = vadd.s32 %v2525, %v2527
      %v2530 = vadd.s32 %v2529, %v2519
      %v2531 = vadd.s32 %v2530, %v2521
      %v2532 = vmul.u32 %v2487, %v2478
      %v2533 = vadd.s32 %v2509, %v2528
      %vm2534 = vc.u32 %v2509, %v2528
      %v2535 = vadd.s32 %v2531, 1
      %v2536 = vsel %vm2534, %v2535, %v2531
      %v2537 = vadd.s32 %v2532, %v2536
      %v2538 = vadd.s32 %v2537, 536870912
      %v2539 = vshrl.u32 %v2538, 30
      %v2540 = vshll.u32 %v2539, 30
      %v2541 = vsub.s32 %v2537, %v2540
      %vm2542 = vcmp.lt.s32.totalorder %v2541, 0
      %v2543 = vsub.s32 0, %v2541
      %v2544 = vsel %vm2542, %v2543, %v2541
      %v2545 = vclz %v2544
      %v2546 = vsub.s32 %v2545, 2
      %vm2547 = vcmp.gt.s32.totalorder 0, %v2546
      %v2548 = vsel %vm2547, 0, %v2546
      %v2549 = vsub.s32 32, %v2548
      %v2550 = vshll.u32 %v2541, %v2548
      %v2551 = vshrl.u32 %v2533, %v2549
      %v2552 = vor.u32 %v2550, %v2551
      %v2553 = vsub.s32 4294967266, %v2548
      %v2554 = vadd.s32 %v2553, 127
      %v2555 = vshll.u32 %v2554, 23
      %v2556 = vor.u32 4788187, %v2555
      %v2557 = vand.u32 2147483647, %v2556
      %v2559 = vcvt.s32.f32 %v2552
      %v2560 = vmul.f32 %v2559, %v2557
      %v2561 = vxor.u32 %v2560, 2147483648
      %v2562 = vsel %vm2441, %v2561, %v2560
      %v2563 = vsub.s32 4, %v2539
      %v2564 = vsel %vm2441, %v2563, %v2539
      %v2565 = vsel %vm2440, %v365, %v2562
      %v2566 = vsel %vm2440, 0, %v2564
      %v2567 = vmul.f32 %v2565, %v2565
      %v2568 = vmul.f32 %v2567, -0.001358992
      %v2569 = vadd.f32 %v2568, 0.041655596
      %v2570 = vmul.f32 %v2567, %v2569
      %v2571 = vadd.f32 %v2570, -0.4999988
      %v2572 = vmul.f32 %v2567, %v2571
      %v2573 = vadd.f32 1.0, %v2572
      %v2574 = vmul.f32 %v2565, %v2565
      %v2575 = vmul.f32 %v2574, -0.00019511016
      %v2576 = vadd.f32 %v2575, 0.008332121
      %v2577 = vmul.f32 %v2574, %v2576
      %v2578 = vadd.f32 %v2577, -0.16666654
      %v2579 = vmul.f32 %v2574, %v2578
      %v2580 = vadd.f32 %v2579, 1.0
      %v2581 = vmul.f32 %v2580, %v2565
      %vm2582 = vweird.f32 %v365
      %v2583 = vadd.s32 %v2566, 3
      %v2584 = vand.u32 %v2583, 3
      %vm2585 = vcmp.lt.s32.totalorder %v2584, 2
      %vm2586 = vcmp.eq.s32.totalorder %v2584, 0
      %v2587 = vxor.u32 %v2581, 2147483648
      %v2588 = vsel %vm2586, %v2573, %v2587
      %vm2589 = vcmp.eq.s32.totalorder %v2584, 2
      %v2590 = vxor.u32 %v2573, 2147483648
      %v2591 = vsel %vm2589, %v2590, %v2581
      %v2592 = vsel %vm2585, %v2588, %v2591
      %v2593 = vsel %vm2582, nan, %v2592
      %v2594 = vand.u32 2147483647, %v368
      %vm2595 = vcmp.le.f32.partialorder %v2594, 0.7853982
      %vm2596 = vcmp.lt.s32.totalorder %v368, 0
      %v2597 = vand.u32 %v368, 2139095040
      %v2598 = vshrl.u32 %v2597, 23
      %v2599 = vsub.s32 %v2598, 127
      %v2600 = vand.u32 2147483647, %v368
      %v2601 = vand.u32 %v2600, 8388607
      %v2602 = vor.u32 %v2601, 8388608
      %v2603 = vsub.s32 0, %v2602
      %v2604 = vadd.s32 %v2599, 1
      %vm2605 = vcmp.gt.s32.totalorder %v2604, 0
      %v2606 = vsel %vm2605, %v2604, 0
      %v2607 = vshrl.u32 %v2606, 5
      %v2608 = vand.u32 %v2606, 31
      %v2609 = vsub.s32 32, %v2608
      %v2610 = vshrl.u32 683565275, %v2609
      %v2611 = vshll.u32 683565275, %v2608
      %v2612 = vshrl.u32 2475754826, %v2609
      %v2613 = vor.u32 %v2611, %v2612
      %v2614 = vshll.u32 2475754826, %v2608
      %v2615 = vshrl.u32 2131351028, %v2609
      %v2616 = vor.u32 %v2614, %v2615
      %v2617 = vshll.u32 2131351028, %v2608
      %v2618 = vshrl.u32 2102212464, %v2609
      %v2619 = vor.u32 %v2617, %v2618
      %v2620 = vshll.u32 2102212464, %v2608
      %v2621 = vshrl.u32 920167782, %v2609
      %v2622 = vor.u32 %v2620, %v2621
      %v2623 = vshll.u32 920167782, %v2608
      %v2624 = vshrl.u32 1326507024, %v2609
      %v2625 = vor.u32 %v2623, %v2624
      %vm2626 = vcmp.lt.s32.totalorder %v2607, 1
      %vm2627 = vcmp.lt.s32.totalorder %v2607, 2
      %vm2628 = vcmp.lt.s32.totalorder %v2607, 3
      %vm2629 = vcmp.lt.s32.totalorder %v2607, 4
      %v2630 = vsel %vm2626, %v2610, %v2613
      %v2631 = vsel %vm2629, %v2619, 2102212464
      %v2632 = vsel %vm2628, %v2616, %v2631
      %v2633 = vsel %vm2627, %v2630, %v2632
      %v2634 = vsel %vm2626, %v2613, %v2616
      %v2635 = vsel %vm2629, %v2622, 920167782
      %v2636 = vsel %vm2628, %v2619, %v2635
      %v2637 = vsel %vm2627, %v2634, %v2636
      %v2638 = vsel %vm2626, %v2616, %v2619
      %v2639 = vsel %vm2629, %v2625, 1326507024
      %v2640 = vsel %vm2628, %v2622, %v2639
      %v2641 = vsel %vm2627, %v2638, %v2640
      %v2642 = vshll.u32 %v2602, 8
      %v2643 = vand.u32 %v2642, 65535
      %v2644 = vshrl.u32 %v2642, 16
      %v2645 = vand.u32 %v2641, 65535
      %v2646 = vshrl.u32 %v2641, 16
      %v2647 = vmul.u32 %v2643, %v2645
      %v2648 = vmul.u32 %v2643, %v2646
      %v2649 = vmul.u32 %v2644, %v2645
      %v2650 = vmul.u32 %v2644, %v2646
      %v2651 = vshll.u32 %v2648, 16
      %v2652 = vshrl.u32 %v2648, 16
      %v2653 = vshll.u32 %v2649, 16
      %v2654 = vshrl.u32 %v2649, 16
      %vm2655 = vc.u32 %v2647, %v2651
      %v2656 = vsel %vm2655, 1, 0
      %v2657 = vadd.s32 %v2647, %v2651
      %v2658 = vadd.s32 %v2650, %v2656
      %vm2659 = vc.u32 %v2657, %v2653
      %v2660 = vsel %vm2659, 1, 0
      %v2661 = vadd.s32 %v2657, %v2653
      %v2662 = vadd.s32 %v2658, %v2660
      %v2663 = vadd.s32 %v2662, %v2652
      %v2664 = vadd.s32 %v2663, %v2654
      %v2665 = vand.u32 %v2642, 65535
      %v2666 = vshrl.u32 %v2642, 16
      %v2667 = vand.u32 %v2637, 65535
      %v2668 = vshrl.u32 %v2637, 16
      %v2669 = vmul.u32 %v2665, %v2667
      %v2670 = vmul.u32 %v2665, %v2668
      %v2671 = vmul.u32 %v2666, %v2667
      %v2672 = vmul.u32 %v2666, %v2668
      %v2673 = vshll.u32 %v2670, 16
      %v2674 = vshrl.u32 %v2670, 16
      %v2675 = vshll.u32 %v2671, 16
      %v2676 = vshrl.u32 %v2671, 16
      %vm2677 = vc.u32 %v2669, %v2673
      %v2678 = vsel %vm2677, 1, 0
      %v2679 = vadd.s32 %v2669, %v2673
      %v2680 = vadd.s32 %v2672, %v2678
      %vm2681 = vc.u32 %v2679, %v2675
      %v2682 = vsel %vm2681, 1, 0
      %v2683 = vadd.s32 %v2679, %v2675
      %v2684 = vadd.s32 %v2680, %v2682
      %v2685 = vadd.s32 %v2684, %v2674
      %v2686 = vadd.s32 %v2685, %v2676
      %v2687 = vmul.u32 %v2642, %v2633
      %v2688 = vadd.s32 %v2664, %v2683
      %vm2689 = vc.u32 %v2664, %v2683
      %v2690 = vadd.s32 %v2686, 1
      %v2691 = vsel %vm2689, %v2690, %v2686
      %v2692 = vadd.s32 %v2687, %v2691
      %v2693 = vadd.s32 %v2692, 536870912
      %v2694 = vshrl.u32 %v2693, 30
      %v2695 = vshll.u32 %v2694, 30
      %v2696 = vsub.s32 %v2692, %v2695
      %vm2697 = vcmp.lt.s32.totalorder %v2696, 0
      %v2698 = vsub.s32 0, %v2696
      %v2699 = vsel %vm2697, %v2698, %v2696
      %v2700 = vclz %v2699
      %v2701 = vsub.s32 %v2700, 2
      %vm2702 = vcmp.gt.s32.totalorder 0, %v2701
      %v2703 = vsel %vm2702, 0, %v2701
      %v2704 = vsub.s32 32, %v2703
      %v2705 = vshll.u32 %v2696, %v2703
      %v2706 = vshrl.u32 %v2688, %v2704
      %v2707 = vor.u32 %v2705, %v2706
      %v2708 = vsub.s32 4294967266, %v2703
      %v2709 = vadd.s32 %v2708, 127
      %v2710 = vshll.u32 %v2709, 23
      %v2711 = vor.u32 4788187, %v2710
      %v2712 = vand.u32 2147483647, %v2711
      %v2714 = vcvt.s32.f32 %v2707
      %v2715 = vmul.f32 %v2714, %v2712
      %v2716 = vxor.u32 %v2715, 2147483648
      %v2717 = vsel %vm2596, %v2716, %v2715
      %v2718 = vsub.s32 4, %v2694
      %v2719 = vsel %vm2596, %v2718, %v2694
      %v2720 = vsel %vm2595, %v368, %v2717
      %v2721 = vsel %vm2595, 0, %v2719
      %v2722 = vmul.f32 %v2720, %v2720
      %v2723 = vmul.f32 %v2722, -0.001358992
      %v2724 = vadd.f32 %v2723, 0.041655596
      %v2725 = vmul.f32 %v2722, %v2724
      %v2726 = vadd.f32 %v2725, -0.4999988
      %v2727 = vmul.f32 %v2722, %v2726
      %v2728 = vadd.f32 1.0, %v2727
      %v2729 = vmul.f32 %v2720, %v2720
      %v2730 = vmul.f32 %v2729, -0.00019511016
      %v2731 = vadd.f32 %v2730, 0.008332121
      %v2732 = vmul.f32 %v2729, %v2731
      %v2733 = vadd.f32 %v2732, -0.16666654
      %v2734 = vmul.f32 %v2729, %v2733
      %v2735 = vadd.f32 %v2734, 1.0
      %v2736 = vmul.f32 %v2735, %v2720
      %vm2737 = vweird.f32 %v368
      %v2738 = vadd.s32 %v2721, 3
      %v2739 = vand.u32 %v2738, 3
      %vm2740 = vcmp.lt.s32.totalorder %v2739, 2
      %vm2741 = vcmp.eq.s32.totalorder %v2739, 0
      %v2742 = vxor.u32 %v2736, 2147483648
      %v2743 = vsel %vm2741, %v2728, %v2742
      %vm2744 = vcmp.eq.s32.totalorder %v2739, 2
      %v2745 = vxor.u32 %v2728, 2147483648
      %v2746 = vsel %vm2744, %v2745, %v2736
      %v2747 = vsel %vm2740, %v2743, %v2746
      %v2748 = vsel %vm2737, nan, %v2747
      %v2749 = vand.u32 2147483647, %v371
      %vm2750 = vcmp.le.f32.partialorder %v2749, 0.7853982
      %vm2751 = vcmp.lt.s32.totalorder %v371, 0
      %v2752 = vand.u32 %v371, 2139095040
      %v2753 = vshrl.u32 %v2752, 23
      %v2754 = vsub.s32 %v2753, 127
      %v2755 = vand.u32 2147483647, %v371
      %v2756 = vand.u32 %v2755, 8388607
      %v2757 = vor.u32 %v2756, 8388608
      %v2758 = vsub.s32 0, %v2757
      %v2759 = vadd.s32 %v2754, 1
      %vm2760 = vcmp.gt.s32.totalorder %v2759, 0
      %v2761 = vsel %vm2760, %v2759, 0
      %v2762 = vshrl.u32 %v2761, 5
      %v2763 = vand.u32 %v2761, 31
      %v2764 = vsub.s32 32, %v2763
      %v2765 = vshrl.u32 683565275, %v2764
      %v2766 = vshll.u32 683565275, %v2763
      %v2767 = vshrl.u32 2475754826, %v2764
      %v2768 = vor.u32 %v2766, %v2767
      %v2769 = vshll.u32 2475754826, %v2763
      %v2770 = vshrl.u32 2131351028, %v2764
      %v2771 = vor.u32 %v2769, %v2770
      %v2772 = vshll.u32 2131351028, %v2763
      %v2773 = vshrl.u32 2102212464, %v2764
      %v2774 = vor.u32 %v2772, %v2773
      %v2775 = vshll.u32 2102212464, %v2763
      %v2776 = vshrl.u32 920167782, %v2764
      %v2777 = vor.u32 %v2775, %v2776
      %v2778 = vshll.u32 920167782, %v2763
      %v2779 = vshrl.u32 1326507024, %v2764
      %v2780 = vor.u32 %v2778, %v2779
      %vm2781 = vcmp.lt.s32.totalorder %v2762, 1
      %vm2782 = vcmp.lt.s32.totalorder %v2762, 2
      %vm2783 = vcmp.lt.s32.totalorder %v2762, 3
      %vm2784 = vcmp.lt.s32.totalorder %v2762, 4
      %v2785 = vsel %vm2781, %v2765, %v2768
      %v2786 = vsel %vm2784, %v2774, 2102212464
      %v2787 = vsel %vm2783, %v2771, %v2786
      %v2788 = vsel %vm2782, %v2785, %v2787
      %v2789 = vsel %vm2781, %v2768, %v2771
      %v2790 = vsel %vm2784, %v2777, 920167782
      %v2791 = vsel %vm2783, %v2774, %v2790
      %v2792 = vsel %vm2782, %v2789, %v2791
      %v2793 = vsel %vm2781, %v2771, %v2774
      %v2794 = vsel %vm2784, %v2780, 1326507024
      %v2795 = vsel %vm2783, %v2777, %v2794
      %v2796 = vsel %vm2782, %v2793, %v2795
      %v2797 = vshll.u32 %v2757, 8
      %v2798 = vand.u32 %v2797, 65535
      %v2799 = vshrl.u32 %v2797, 16
      %v2800 = vand.u32 %v2796, 65535
      %v2801 = vshrl.u32 %v2796, 16
      %v2802 = vmul.u32 %v2798, %v2800
      %v2803 = vmul.u32 %v2798, %v2801
      %v2804 = vmul.u32 %v2799, %v2800
      %v2805 = vmul.u32 %v2799, %v2801
      %v2806 = vshll.u32 %v2803, 16
      %v2807 = vshrl.u32 %v2803, 16
      %v2808 = vshll.u32 %v2804, 16
      %v2809 = vshrl.u32 %v2804, 16
      %vm2810 = vc.u32 %v2802, %v2806
      %v2811 = vsel %vm2810, 1, 0
      %v2812 = vadd.s32 %v2802, %v2806
      %v2813 = vadd.s32 %v2805, %v2811
      %vm2814 = vc.u32 %v2812, %v2808
      %v2815 = vsel %vm2814, 1, 0
      %v2816 = vadd.s32 %v2812, %v2808
      %v2817 = vadd.s32 %v2813, %v2815
      %v2818 = vadd.s32 %v2817, %v2807
      %v2819 = vadd.s32 %v2818, %v2809
      %v2820 = vand.u32 %v2797, 65535
      %v2821 = vshrl.u32 %v2797, 16
      %v2822 = vand.u32 %v2792, 65535
      %v2823 = vshrl.u32 %v2792, 16
      %v2824 = vmul.u32 %v2820, %v2822
      %v2825 = vmul.u32 %v2820, %v2823
      %v2826 = vmul.u32 %v2821, %v2822
      %v2827 = vmul.u32 %v2821, %v2823
      %v2828 = vshll.u32 %v2825, 16
      %v2829 = vshrl.u32 %v2825, 16
      %v2830 = vshll.u32 %v2826, 16
      %v2831 = vshrl.u32 %v2826, 16
      %vm2832 = vc.u32 %v2824, %v2828
      %v2833 = vsel %vm2832, 1, 0
      %v2834 = vadd.s32 %v2824, %v2828
      %v2835 = vadd.s32 %v2827, %v2833
      %vm2836 = vc.u32 %v2834, %v2830
      %v2837 = vsel %vm2836, 1, 0
      %v2838 = vadd.s32 %v2834, %v2830
      %v2839 = vadd.s32 %v2835, %v2837
      %v2840 = vadd.s32 %v2839, %v2829
      %v2841 = vadd.s32 %v2840, %v2831
      %v2842 = vmul.u32 %v2797, %v2788
      %v2843 = vadd.s32 %v2819, %v2838
      %vm2844 = vc.u32 %v2819, %v2838
      %v2845 = vadd.s32 %v2841, 1
      %v2846 = vsel %vm2844, %v2845, %v2841
      %v2847 = vadd.s32 %v2842, %v2846
      %v2848 = vadd.s32 %v2847, 536870912
      %v2849 = vshrl.u32 %v2848, 30
      %v2850 = vshll.u32 %v2849, 30
      %v2851 = vsub.s32 %v2847, %v2850
      %vm2852 = vcmp.lt.s32.totalorder %v2851, 0
      %v2853 = vsub.s32 0, %v2851
      %v2854 = vsel %vm2852, %v2853, %v2851
      %v2855 = vclz %v2854
      %v2856 = vsub.s32 %v2855, 2
      %vm2857 = vcmp.gt.s32.totalorder 0, %v2856
      %v2858 = vsel %vm2857, 0, %v2856
      %v2859 = vsub.s32 32, %v2858
      %v2860 = vshll.u32 %v2851, %v2858
      %v2861 = vshrl.u32 %v2843, %v2859
      %v2862 = vor.u32 %v2860, %v2861
      %v2863 = vsub.s32 4294967266, %v2858
      %v2864 = vadd.s32 %v2863, 127
      %v2865 = vshll.u32 %v2864, 23
      %v2866 = vor.u32 4788187, %v2865
      %v2867 = vand.u32 2147483647, %v2866
      %v2869 = vcvt.s32.f32 %v2862
      %v2870 = vmul.f32 %v2869, %v2867
      %v2871 = vxor.u32 %v2870, 2147483648
      %v2872 = vsel %vm2751, %v2871, %v2870
      %v2873 = vsub.s32 4, %v2849
      %v2874 = vsel %vm2751, %v2873, %v2849
      %v2875 = vsel %vm2750, %v371, %v2872
      %v2876 = vsel %vm2750, 0, %v2874
      %v2877 = vmul.f32 %v2875, %v2875
      %v2878 = vmul.f32 %v2877, -0.001358992
      %v2879 = vadd.f32 %v2878, 0.041655596
      %v2880 = vmul.f32 %v2877, %v2879
      %v2881 = vadd.f32 %v2880, -0.4999988
      %v2882 = vmul.f32 %v2877, %v2881
      %v2883 = vadd.f32 1.0, %v2882
      %v2884 = vmul.f32 %v2875, %v2875
      %v2885 = vmul.f32 %v2884, -0.00019511016
      %v2886 = vadd.f32 %v2885, 0.008332121
      %v2887 = vmul.f32 %v2884, %v2886
      %v2888 = vadd.f32 %v2887, -0.16666654
      %v2889 = vmul.f32 %v2884, %v2888
      %v2890 = vadd.f32 %v2889, 1.0
      %v2891 = vmul.f32 %v2890, %v2875
      %vm2892 = vweird.f32 %v371
      %v2893 = vadd.s32 %v2876, 3
      %v2894 = vand.u32 %v2893, 3
      %vm2895 = vcmp.lt.s32.totalorder %v2894, 2
      %vm2896 = vcmp.eq.s32.totalorder %v2894, 0
      %v2897 = vxor.u32 %v2891, 2147483648
      %v2898 = vsel %vm2896, %v2883, %v2897
      %vm2899 = vcmp.eq.s32.totalorder %v2894, 2
      %v2900 = vxor.u32 %v2883, 2147483648
      %v2901 = vsel %vm2899, %v2900, %v2891
      %v2902 = vsel %vm2895, %v2898, %v2901
      %v2903 = vsel %vm2892, nan, %v2902
      %v2904 = vand.u32 2147483647, %v374
      %vm2905 = vcmp.le.f32.partialorder %v2904, 0.7853982
      %vm2906 = vcmp.lt.s32.totalorder %v374, 0
      %v2907 = vand.u32 %v374, 2139095040
      %v2908 = vshrl.u32 %v2907, 23
      %v2909 = vsub.s32 %v2908, 127
      %v2910 = vand.u32 2147483647, %v374
      %v2911 = vand.u32 %v2910, 8388607
      %v2912 = vor.u32 %v2911, 8388608
      %v2913 = vsub.s32 0, %v2912
      %v2914 = vadd.s32 %v2909, 1
      %vm2915 = vcmp.gt.s32.totalorder %v2914, 0
      %v2916 = vsel %vm2915, %v2914, 0
      %v2917 = vshrl.u32 %v2916, 5
      %v2918 = vand.u32 %v2916, 31
      %v2919 = vsub.s32 32, %v2918
      %v2920 = vshrl.u32 683565275, %v2919
      %v2921 = vshll.u32 683565275, %v2918
      %v2922 = vshrl.u32 2475754826, %v2919
      %v2923 = vor.u32 %v2921, %v2922
      %v2924 = vshll.u32 2475754826, %v2918
      %v2925 = vshrl.u32 2131351028, %v2919
      %v2926 = vor.u32 %v2924, %v2925
      %v2927 = vshll.u32 2131351028, %v2918
      %v2928 = vshrl.u32 2102212464, %v2919
      %v2929 = vor.u32 %v2927, %v2928
      %v2930 = vshll.u32 2102212464, %v2918
      %v2931 = vshrl.u32 920167782, %v2919
      %v2932 = vor.u32 %v2930, %v2931
      %v2933 = vshll.u32 920167782, %v2918
      %v2934 = vshrl.u32 1326507024, %v2919
      %v2935 = vor.u32 %v2933, %v2934
      %vm2936 = vcmp.lt.s32.totalorder %v2917, 1
      %vm2937 = vcmp.lt.s32.totalorder %v2917, 2
      %vm2938 = vcmp.lt.s32.totalorder %v2917, 3
      %vm2939 = vcmp.lt.s32.totalorder %v2917, 4
      %v2940 = vsel %vm2936, %v2920, %v2923
      %v2941 = vsel %vm2939, %v2929, 2102212464
      %v2942 = vsel %vm2938, %v2926, %v2941
      %v2943 = vsel %vm2937, %v2940, %v2942
      %v2944 = vsel %vm2936, %v2923, %v2926
      %v2945 = vsel %vm2939, %v2932, 920167782
      %v2946 = vsel %vm2938, %v2929, %v2945
      %v2947 = vsel %vm2937, %v2944, %v2946
      %v2948 = vsel %vm2936, %v2926, %v2929
      %v2949 = vsel %vm2939, %v2935, 1326507024
      %v2950 = vsel %vm2938, %v2932, %v2949
      %v2951 = vsel %vm2937, %v2948, %v2950
      %v2952 = vshll.u32 %v2912, 8
      %v2953 = vand.u32 %v2952, 65535
      %v2954 = vshrl.u32 %v2952, 16
      %v2955 = vand.u32 %v2951, 65535
      %v2956 = vshrl.u32 %v2951, 16
      %v2957 = vmul.u32 %v2953, %v2955
      %v2958 = vmul.u32 %v2953, %v2956
      %v2959 = vmul.u32 %v2954, %v2955
      %v2960 = vmul.u32 %v2954, %v2956
      %v2961 = vshll.u32 %v2958, 16
      %v2962 = vshrl.u32 %v2958, 16
      %v2963 = vshll.u32 %v2959, 16
      %v2964 = vshrl.u32 %v2959, 16
      %vm2965 = vc.u32 %v2957, %v2961
      %v2966 = vsel %vm2965, 1, 0
      %v2967 = vadd.s32 %v2957, %v2961
      %v2968 = vadd.s32 %v2960, %v2966
      %vm2969 = vc.u32 %v2967, %v2963
      %v2970 = vsel %vm2969, 1, 0
      %v2971 = vadd.s32 %v2967, %v2963
      %v2972 = vadd.s32 %v2968, %v2970
      %v2973 = vadd.s32 %v2972, %v2962
      %v2974 = vadd.s32 %v2973, %v2964
      %v2975 = vand.u32 %v2952, 65535
      %v2976 = vshrl.u32 %v2952, 16
      %v2977 = vand.u32 %v2947, 65535
      %v2978 = vshrl.u32 %v2947, 16
      %v2979 = vmul.u32 %v2975, %v2977
      %v2980 = vmul.u32 %v2975, %v2978
      %v2981 = vmul.u32 %v2976, %v2977
      %v2982 = vmul.u32 %v2976, %v2978
      %v2983 = vshll.u32 %v2980, 16
      %v2984 = vshrl.u32 %v2980, 16
      %v2985 = vshll.u32 %v2981, 16
      %v2986 = vshrl.u32 %v2981, 16
      %vm2987 = vc.u32 %v2979, %v2983
      %v2988 = vsel %vm2987, 1, 0
      %v2989 = vadd.s32 %v2979, %v2983
      %v2990 = vadd.s32 %v2982, %v2988
      %vm2991 = vc.u32 %v2989, %v2985
      %v2992 = vsel %vm2991, 1, 0
      %v2993 = vadd.s32 %v2989, %v2985
      %v2994 = vadd.s32 %v2990, %v2992
      %v2995 = vadd.s32 %v2994, %v2984
      %v2996 = vadd.s32 %v2995, %v2986
      %v2997 = vmul.u32 %v2952, %v2943
      %v2998 = vadd.s32 %v2974, %v2993
      %vm2999 = vc.u32 %v2974, %v2993
      %v3000 = vadd.s32 %v2996, 1
      %v3001 = vsel %vm2999, %v3000, %v2996
      %v3002 = vadd.s32 %v2997, %v3001
      %v3003 = vadd.s32 %v3002, 536870912
      %v3004 = vshrl.u32 %v3003, 30
      %v3005 = vshll.u32 %v3004, 30
      %v3006 = vsub.s32 %v3002, %v3005
      %vm3007 = vcmp.lt.s32.totalorder %v3006, 0
      %v3008 = vsub.s32 0, %v3006
      %v3009 = vsel %vm3007, %v3008, %v3006
      %v3010 = vclz %v3009
      %v3011 = vsub.s32 %v3010, 2
      %vm3012 = vcmp.gt.s32.totalorder 0, %v3011
      %v3013 = vsel %vm3012, 0, %v3011
      %v3014 = vsub.s32 32, %v3013
      %v3015 = vshll.u32 %v3006, %v3013
      %v3016 = vshrl.u32 %v2998, %v3014
      %v3017 = vor.u32 %v3015, %v3016
      %v3018 = vsub.s32 4294967266, %v3013
      %v3019 = vadd.s32 %v3018, 127
      %v3020 = vshll.u32 %v3019, 23
      %v3021 = vor.u32 4788187, %v3020
      %v3022 = vand.u32 2147483647, %v3021
      %v3024 = vcvt.s32.f32 %v3017
      %v3025 = vmul.f32 %v3024, %v3022
      %v3026 = vxor.u32 %v3025, 2147483648
      %v3027 = vsel %vm2906, %v3026, %v3025
      %v3028 = vsub.s32 4, %v3004
      %v3029 = vsel %vm2906, %v3028, %v3004
      %v3030 = vsel %vm2905, %v374, %v3027
      %v3031 = vsel %vm2905, 0, %v3029
      %v3032 = vmul.f32 %v3030, %v3030
      %v3033 = vmul.f32 %v3032, -0.001358992
      %v3034 = vadd.f32 %v3033, 0.041655596
      %v3035 = vmul.f32 %v3032, %v3034
      %v3036 = vadd.f32 %v3035, -0.4999988
      %v3037 = vmul.f32 %v3032, %v3036
      %v3038 = vadd.f32 1.0, %v3037
      %v3039 = vmul.f32 %v3030, %v3030
      %v3040 = vmul.f32 %v3039, -0.00019511016
      %v3041 = vadd.f32 %v3040, 0.008332121
      %v3042 = vmul.f32 %v3039, %v3041
      %v3043 = vadd.f32 %v3042, -0.16666654
      %v3044 = vmul.f32 %v3039, %v3043
      %v3045 = vadd.f32 %v3044, 1.0
      %v3046 = vmul.f32 %v3045, %v3030
      %vm3047 = vweird.f32 %v374
      %v3048 = vadd.s32 %v3031, 3
      %v3049 = vand.u32 %v3048, 3
      %vm3050 = vcmp.lt.s32.totalorder %v3049, 2
      %vm3051 = vcmp.eq.s32.totalorder %v3049, 0
      %v3052 = vxor.u32 %v3046, 2147483648
      %v3053 = vsel %vm3051, %v3038, %v3052
      %vm3054 = vcmp.eq.s32.totalorder %v3049, 2
      %v3055 = vxor.u32 %v3038, 2147483648
      %v3056 = vsel %vm3054, %v3055, %v3046
      %v3057 = vsel %vm3050, %v3053, %v3056
      %v3058 = vsel %vm3047, nan, %v3057
      %v3059 = vand.u32 2147483647, %v377
      %vm3060 = vcmp.le.f32.partialorder %v3059, 0.7853982
      %vm3061 = vcmp.lt.s32.totalorder %v377, 0
      %v3062 = vand.u32 %v377, 2139095040
      %v3063 = vshrl.u32 %v3062, 23
      %v3064 = vsub.s32 %v3063, 127
      %v3065 = vand.u32 2147483647, %v377
      %v3066 = vand.u32 %v3065, 8388607
      %v3067 = vor.u32 %v3066, 8388608
      %v3068 = vsub.s32 0, %v3067
      %v3069 = vadd.s32 %v3064, 1
      %vm3070 = vcmp.gt.s32.totalorder %v3069, 0
      %v3071 = vsel %vm3070, %v3069, 0
      %v3072 = vshrl.u32 %v3071, 5
      %v3073 = vand.u32 %v3071, 31
      %v3074 = vsub.s32 32, %v3073
      %v3075 = vshrl.u32 683565275, %v3074
      %v3076 = vshll.u32 683565275, %v3073
      %v3077 = vshrl.u32 2475754826, %v3074
      %v3078 = vor.u32 %v3076, %v3077
      %v3079 = vshll.u32 2475754826, %v3073
      %v3080 = vshrl.u32 2131351028, %v3074
      %v3081 = vor.u32 %v3079, %v3080
      %v3082 = vshll.u32 2131351028, %v3073
      %v3083 = vshrl.u32 2102212464, %v3074
      %v3084 = vor.u32 %v3082, %v3083
      %v3085 = vshll.u32 2102212464, %v3073
      %v3086 = vshrl.u32 920167782, %v3074
      %v3087 = vor.u32 %v3085, %v3086
      %v3088 = vshll.u32 920167782, %v3073
      %v3089 = vshrl.u32 1326507024, %v3074
      %v3090 = vor.u32 %v3088, %v3089
      %vm3091 = vcmp.lt.s32.totalorder %v3072, 1
      %vm3092 = vcmp.lt.s32.totalorder %v3072, 2
      %vm3093 = vcmp.lt.s32.totalorder %v3072, 3
      %vm3094 = vcmp.lt.s32.totalorder %v3072, 4
      %v3095 = vsel %vm3091, %v3075, %v3078
      %v3096 = vsel %vm3094, %v3084, 2102212464
      %v3097 = vsel %vm3093, %v3081, %v3096
      %v3098 = vsel %vm3092, %v3095, %v3097
      %v3099 = vsel %vm3091, %v3078, %v3081
      %v3100 = vsel %vm3094, %v3087, 920167782
      %v3101 = vsel %vm3093, %v3084, %v3100
      %v3102 = vsel %vm3092, %v3099, %v3101
      %v3103 = vsel %vm3091, %v3081, %v3084
      %v3104 = vsel %vm3094, %v3090, 1326507024
      %v3105 = vsel %vm3093, %v3087, %v3104
      %v3106 = vsel %vm3092, %v3103, %v3105
      %v3107 = vshll.u32 %v3067, 8
      %v3108 = vand.u32 %v3107, 65535
      %v3109 = vshrl.u32 %v3107, 16
      %v3110 = vand.u32 %v3106, 65535
      %v3111 = vshrl.u32 %v3106, 16
      %v3112 = vmul.u32 %v3108, %v3110
      %v3113 = vmul.u32 %v3108, %v3111
      %v3114 = vmul.u32 %v3109, %v3110
      %v3115 = vmul.u32 %v3109, %v3111
      %v3116 = vshll.u32 %v3113, 16
      %v3117 = vshrl.u32 %v3113, 16
      %v3118 = vshll.u32 %v3114, 16
      %v3119 = vshrl.u32 %v3114, 16
      %vm3120 = vc.u32 %v3112, %v3116
      %v3121 = vsel %vm3120, 1, 0
      %v3122 = vadd.s32 %v3112, %v3116
      %v3123 = vadd.s32 %v3115, %v3121
      %vm3124 = vc.u32 %v3122, %v3118
      %v3125 = vsel %vm3124, 1, 0
      %v3126 = vadd.s32 %v3122, %v3118
      %v3127 = vadd.s32 %v3123, %v3125
      %v3128 = vadd.s32 %v3127, %v3117
      %v3129 = vadd.s32 %v3128, %v3119
      %v3130 = vand.u32 %v3107, 65535
      %v3131 = vshrl.u32 %v3107, 16
      %v3132 = vand.u32 %v3102, 65535
      %v3133 = vshrl.u32 %v3102, 16
      %v3134 = vmul.u32 %v3130, %v3132
      %v3135 = vmul.u32 %v3130, %v3133
      %v3136 = vmul.u32 %v3131, %v3132
      %v3137 = vmul.u32 %v3131, %v3133
      %v3138 = vshll.u32 %v3135, 16
      %v3139 = vshrl.u32 %v3135, 16
      %v3140 = vshll.u32 %v3136, 16
      %v3141 = vshrl.u32 %v3136, 16
      %vm3142 = vc.u32 %v3134, %v3138
      %v3143 = vsel %vm3142, 1, 0
      %v3144 = vadd.s32 %v3134, %v3138
      %v3145 = vadd.s32 %v3137, %v3143
      %vm3146 = vc.u32 %v3144, %v3140
      %v3147 = vsel %vm3146, 1, 0
      %v3148 = vadd.s32 %v3144, %v3140
      %v3149 = vadd.s32 %v3145, %v3147
      %v3150 = vadd.s32 %v3149, %v3139
      %v3151 = vadd.s32 %v3150, %v3141
      %v3152 = vmul.u32 %v3107, %v3098
      %v3153 = vadd.s32 %v3129, %v3148
      %vm3154 = vc.u32 %v3129, %v3148
      %v3155 = vadd.s32 %v3151, 1
      %v3156 = vsel %vm3154, %v3155, %v3151
      %v3157 = vadd.s32 %v3152, %v3156
      %v3158 = vadd.s32 %v3157, 536870912
      %v3159 = vshrl.u32 %v3158, 30
      %v3160 = vshll.u32 %v3159, 30
      %v3161 = vsub.s32 %v3157, %v3160
      %vm3162 = vcmp.lt.s32.totalorder %v3161, 0
      %v3163 = vsub.s32 0, %v3161
      %v3164 = vsel %vm3162, %v3163, %v3161
      %v3165 = vclz %v3164
      %v3166 = vsub.s32 %v3165, 2
      %vm3167 = vcmp.gt.s32.totalorder 0, %v3166
      %v3168 = vsel %vm3167, 0, %v3166
      %v3169 = vsub.s32 32, %v3168
      %v3170 = vshll.u32 %v3161, %v3168
      %v3171 = vshrl.u32 %v3153, %v3169
      %v3172 = vor.u32 %v3170, %v3171
      %v3173 = vsub.s32 4294967266, %v3168
      %v3174 = vadd.s32 %v3173, 127
      %v3175 = vshll.u32 %v3174, 23
      %v3176 = vor.u32 4788187, %v3175
      %v3177 = vand.u32 2147483647, %v3176
      %v3179 = vcvt.s32.f32 %v3172
      %v3180 = vmul.f32 %v3179, %v3177
      %v3181 = vxor.u32 %v3180, 2147483648
      %v3182 = vsel %vm3061, %v3181, %v3180
      %v3183 = vsub.s32 4, %v3159
      %v3184 = vsel %vm3061, %v3183, %v3159
      %v3185 = vsel %vm3060, %v377, %v3182
      %v3186 = vsel %vm3060, 0, %v3184
      %v3187 = vmul.f32 %v3185, %v3185
      %v3188 = vmul.f32 %v3187, -0.001358992
      %v3189 = vadd.f32 %v3188, 0.041655596
      %v3190 = vmul.f32 %v3187, %v3189
      %v3191 = vadd.f32 %v3190, -0.4999988
      %v3192 = vmul.f32 %v3187, %v3191
      %v3193 = vadd.f32 1.0, %v3192
      %v3194 = vmul.f32 %v3185, %v3185
      %v3195 = vmul.f32 %v3194, -0.00019511016
      %v3196 = vadd.f32 %v3195, 0.008332121
      %v3197 = vmul.f32 %v3194, %v3196
      %v3198 = vadd.f32 %v3197, -0.16666654
      %v3199 = vmul.f32 %v3194, %v3198
      %v3200 = vadd.f32 %v3199, 1.0
      %v3201 = vmul.f32 %v3200, %v3185
      %vm3202 = vweird.f32 %v377
      %v3203 = vadd.s32 %v3186, 3
      %v3204 = vand.u32 %v3203, 3
      %vm3205 = vcmp.lt.s32.totalorder %v3204, 2
      %vm3206 = vcmp.eq.s32.totalorder %v3204, 0
      %v3207 = vxor.u32 %v3201, 2147483648
      %v3208 = vsel %vm3206, %v3193, %v3207
      %vm3209 = vcmp.eq.s32.totalorder %v3204, 2
      %v3210 = vxor.u32 %v3193, 2147483648
      %v3211 = vsel %vm3209, %v3210, %v3201
      %v3212 = vsel %vm3205, %v3208, %v3211
      %v3213 = vsel %vm3202, nan, %v3212
      %v3214 = vand.u32 2147483647, %v380
      %vm3215 = vcmp.le.f32.partialorder %v3214, 0.7853982
      %vm3216 = vcmp.lt.s32.totalorder %v380, 0
      %v3217 = vand.u32 %v380, 2139095040
      %v3218 = vshrl.u32 %v3217, 23
      %v3219 = vsub.s32 %v3218, 127
      %v3220 = vand.u32 2147483647, %v380
      %v3221 = vand.u32 %v3220, 8388607
      %v3222 = vor.u32 %v3221, 8388608
      %v3223 = vsub.s32 0, %v3222
      %v3224 = vadd.s32 %v3219, 1
      %vm3225 = vcmp.gt.s32.totalorder %v3224, 0
      %v3226 = vsel %vm3225, %v3224, 0
      %v3227 = vshrl.u32 %v3226, 5
      %v3228 = vand.u32 %v3226, 31
      %v3229 = vsub.s32 32, %v3228
      %v3230 = vshrl.u32 683565275, %v3229
      %v3231 = vshll.u32 683565275, %v3228
      %v3232 = vshrl.u32 2475754826, %v3229
      %v3233 = vor.u32 %v3231, %v3232
      %v3234 = vshll.u32 2475754826, %v3228
      %v3235 = vshrl.u32 2131351028, %v3229
      %v3236 = vor.u32 %v3234, %v3235
      %v3237 = vshll.u32 2131351028, %v3228
      %v3238 = vshrl.u32 2102212464, %v3229
      %v3239 = vor.u32 %v3237, %v3238
      %v3240 = vshll.u32 2102212464, %v3228
      %v3241 = vshrl.u32 920167782, %v3229
      %v3242 = vor.u32 %v3240, %v3241
      %v3243 = vshll.u32 920167782, %v3228
      %v3244 = vshrl.u32 1326507024, %v3229
      %v3245 = vor.u32 %v3243, %v3244
      %vm3246 = vcmp.lt.s32.totalorder %v3227, 1
      %vm3247 = vcmp.lt.s32.totalorder %v3227, 2
      %vm3248 = vcmp.lt.s32.totalorder %v3227, 3
      %vm3249 = vcmp.lt.s32.totalorder %v3227, 4
      %v3250 = vsel %vm3246, %v3230, %v3233
      %v3251 = vsel %vm3249, %v3239, 2102212464
      %v3252 = vsel %vm3248, %v3236, %v3251
      %v3253 = vsel %vm3247, %v3250, %v3252
      %v3254 = vsel %vm3246, %v3233, %v3236
      %v3255 = vsel %vm3249, %v3242, 920167782
      %v3256 = vsel %vm3248, %v3239, %v3255
      %v3257 = vsel %vm3247, %v3254, %v3256
      %v3258 = vsel %vm3246, %v3236, %v3239
      %v3259 = vsel %vm3249, %v3245, 1326507024
      %v3260 = vsel %vm3248, %v3242, %v3259
      %v3261 = vsel %vm3247, %v3258, %v3260
      %v3262 = vshll.u32 %v3222, 8
      %v3263 = vand.u32 %v3262, 65535
      %v3264 = vshrl.u32 %v3262, 16
      %v3265 = vand.u32 %v3261, 65535
      %v3266 = vshrl.u32 %v3261, 16
      %v3267 = vmul.u32 %v3263, %v3265
      %v3268 = vmul.u32 %v3263, %v3266
      %v3269 = vmul.u32 %v3264, %v3265
      %v3270 = vmul.u32 %v3264, %v3266
      %v3271 = vshll.u32 %v3268, 16
      %v3272 = vshrl.u32 %v3268, 16
      %v3273 = vshll.u32 %v3269, 16
      %v3274 = vshrl.u32 %v3269, 16
      %vm3275 = vc.u32 %v3267, %v3271
      %v3276 = vsel %vm3275, 1, 0
      %v3277 = vadd.s32 %v3267, %v3271
      %v3278 = vadd.s32 %v3270, %v3276
      %vm3279 = vc.u32 %v3277, %v3273
      %v3280 = vsel %vm3279, 1, 0
      %v3281 = vadd.s32 %v3277, %v3273
      %v3282 = vadd.s32 %v3278, %v3280
      %v3283 = vadd.s32 %v3282, %v3272
      %v3284 = vadd.s32 %v3283, %v3274
      %v3285 = vand.u32 %v3262, 65535
      %v3286 = vshrl.u32 %v3262, 16
      %v3287 = vand.u32 %v3257, 65535
      %v3288 = vshrl.u32 %v3257, 16
      %v3289 = vmul.u32 %v3285, %v3287
      %v3290 = vmul.u32 %v3285, %v3288
      %v3291 = vmul.u32 %v3286, %v3287
      %v3292 = vmul.u32 %v3286, %v3288
      %v3293 = vshll.u32 %v3290, 16
      %v3294 = vshrl.u32 %v3290, 16
      %v3295 = vshll.u32 %v3291, 16
      %v3296 = vshrl.u32 %v3291, 16
      %vm3297 = vc.u32 %v3289, %v3293
      %v3298 = vsel %vm3297, 1, 0
      %v3299 = vadd.s32 %v3289, %v3293
      %v3300 = vadd.s32 %v3292, %v3298
      %vm3301 = vc.u32 %v3299, %v3295
      %v3302 = vsel %vm3301, 1, 0
      %v3303 = vadd.s32 %v3299, %v3295
      %v3304 = vadd.s32 %v3300, %v3302
      %v3305 = vadd.s32 %v3304, %v3294
      %v3306 = vadd.s32 %v3305, %v3296
      %v3307 = vmul.u32 %v3262, %v3253
      %v3308 = vadd.s32 %v3284, %v3303
      %vm3309 = vc.u32 %v3284, %v3303
      %v3310 = vadd.s32 %v3306, 1
      %v3311 = vsel %vm3309, %v3310, %v3306
      %v3312 = vadd.s32 %v3307, %v3311
      %v3313 = vadd.s32 %v3312, 536870912
      %v3314 = vshrl.u32 %v3313, 30
      %v3315 = vshll.u32 %v3314, 30
      %v3316 = vsub.s32 %v3312, %v3315
      %vm3317 = vcmp.lt.s32.totalorder %v3316, 0
      %v3318 = vsub.s32 0, %v3316
      %v3319 = vsel %vm3317, %v3318, %v3316
      %v3320 = vclz %v3319
      %v3321 = vsub.s32 %v3320, 2
      %vm3322 = vcmp.gt.s32.totalorder 0, %v3321
      %v3323 = vsel %vm3322, 0, %v3321
      %v3324 = vsub.s32 32, %v3323
      %v3325 = vshll.u32 %v3316, %v3323
      %v3326 = vshrl.u32 %v3308, %v3324
      %v3327 = vor.u32 %v3325, %v3326
      %v3328 = vsub.s32 4294967266, %v3323
      %v3329 = vadd.s32 %v3328, 127
      %v3330 = vshll.u32 %v3329, 23
      %v3331 = vor.u32 4788187, %v3330
      %v3332 = vand.u32 2147483647, %v3331
      %v3334 = vcvt.s32.f32 %v3327
      %v3335 = vmul.f32 %v3334, %v3332
      %v3336 = vxor.u32 %v3335, 2147483648
      %v3337 = vsel %vm3216, %v3336, %v3335
      %v3338 = vsub.s32 4, %v3314
      %v3339 = vsel %vm3216, %v3338, %v3314
      %v3340 = vsel %vm3215, %v380, %v3337
      %v3341 = vsel %vm3215, 0, %v3339
      %v3342 = vmul.f32 %v3340, %v3340
      %v3343 = vmul.f32 %v3342, -0.001358992
      %v3344 = vadd.f32 %v3343, 0.041655596
      %v3345 = vmul.f32 %v3342, %v3344
      %v3346 = vadd.f32 %v3345, -0.4999988
      %v3347 = vmul.f32 %v3342, %v3346
      %v3348 = vadd.f32 1.0, %v3347
      %v3349 = vmul.f32 %v3340, %v3340
      %v3350 = vmul.f32 %v3349, -0.00019511016
      %v3351 = vadd.f32 %v3350, 0.008332121
      %v3352 = vmul.f32 %v3349, %v3351
      %v3353 = vadd.f32 %v3352, -0.16666654
      %v3354 = vmul.f32 %v3349, %v3353
      %v3355 = vadd.f32 %v3354, 1.0
      %v3356 = vmul.f32 %v3355, %v3340
      %vm3357 = vweird.f32 %v380
      %v3358 = vadd.s32 %v3341, 3
      %v3359 = vand.u32 %v3358, 3
      %vm3360 = vcmp.lt.s32.totalorder %v3359, 2
      %vm3361 = vcmp.eq.s32.totalorder %v3359, 0
      %v3362 = vxor.u32 %v3356, 2147483648
      %v3363 = vsel %vm3361, %v3348, %v3362
      %vm3364 = vcmp.eq.s32.totalorder %v3359, 2
      %v3365 = vxor.u32 %v3348, 2147483648
      %v3366 = vsel %vm3364, %v3365, %v3356
      %v3367 = vsel %vm3360, %v3363, %v3366
      %v3368 = vsel %vm3357, nan, %v3367
      %v3369 = vand.u32 2147483647, %v383
      %vm3370 = vcmp.le.f32.partialorder %v3369, 0.7853982
      %vm3371 = vcmp.lt.s32.totalorder %v383, 0
      %v3372 = vand.u32 %v383, 2139095040
      %v3373 = vshrl.u32 %v3372, 23
      %v3374 = vsub.s32 %v3373, 127
      %v3375 = vand.u32 2147483647, %v383
      %v3376 = vand.u32 %v3375, 8388607
      %v3377 = vor.u32 %v3376, 8388608
      %v3378 = vsub.s32 0, %v3377
      %v3379 = vadd.s32 %v3374, 1
      %vm3380 = vcmp.gt.s32.totalorder %v3379, 0
      %v3381 = vsel %vm3380, %v3379, 0
      %v3382 = vshrl.u32 %v3381, 5
      %v3383 = vand.u32 %v3381, 31
      %v3384 = vsub.s32 32, %v3383
      %v3385 = vshrl.u32 683565275, %v3384
      %v3386 = vshll.u32 683565275, %v3383
      %v3387 = vshrl.u32 2475754826, %v3384
      %v3388 = vor.u32 %v3386, %v3387
      %v3389 = vshll.u32 2475754826, %v3383
      %v3390 = vshrl.u32 2131351028, %v3384
      %v3391 = vor.u32 %v3389, %v3390
      %v3392 = vshll.u32 2131351028, %v3383
      %v3393 = vshrl.u32 2102212464, %v3384
      %v3394 = vor.u32 %v3392, %v3393
      %v3395 = vshll.u32 2102212464, %v3383
      %v3396 = vshrl.u32 920167782, %v3384
      %v3397 = vor.u32 %v3395, %v3396
      %v3398 = vshll.u32 920167782, %v3383
      %v3399 = vshrl.u32 1326507024, %v3384
      %v3400 = vor.u32 %v3398, %v3399
      %vm3401 = vcmp.lt.s32.totalorder %v3382, 1
      %vm3402 = vcmp.lt.s32.totalorder %v3382, 2
      %vm3403 = vcmp.lt.s32.totalorder %v3382, 3
      %vm3404 = vcmp.lt.s32.totalorder %v3382, 4
      %v3405 = vsel %vm3401, %v3385, %v3388
      %v3406 = vsel %vm3404, %v3394, 2102212464
      %v3407 = vsel %vm3403, %v3391, %v3406
      %v3408 = vsel %vm3402, %v3405, %v3407
      %v3409 = vsel %vm3401, %v3388, %v3391
      %v3410 = vsel %vm3404, %v3397, 920167782
      %v3411 = vsel %vm3403, %v3394, %v3410
      %v3412 = vsel %vm3402, %v3409, %v3411
      %v3413 = vsel %vm3401, %v3391, %v3394
      %v3414 = vsel %vm3404, %v3400, 1326507024
      %v3415 = vsel %vm3403, %v3397, %v3414
      %v3416 = vsel %vm3402, %v3413, %v3415
      %v3417 = vshll.u32 %v3377, 8
      %v3418 = vand.u32 %v3417, 65535
      %v3419 = vshrl.u32 %v3417, 16
      %v3420 = vand.u32 %v3416, 65535
      %v3421 = vshrl.u32 %v3416, 16
      %v3422 = vmul.u32 %v3418, %v3420
      %v3423 = vmul.u32 %v3418, %v3421
      %v3424 = vmul.u32 %v3419, %v3420
      %v3425 = vmul.u32 %v3419, %v3421
      %v3426 = vshll.u32 %v3423, 16
      %v3427 = vshrl.u32 %v3423, 16
      %v3428 = vshll.u32 %v3424, 16
      %v3429 = vshrl.u32 %v3424, 16
      %vm3430 = vc.u32 %v3422, %v3426
      %v3431 = vsel %vm3430, 1, 0
      %v3432 = vadd.s32 %v3422, %v3426
      %v3433 = vadd.s32 %v3425, %v3431
      %vm3434 = vc.u32 %v3432, %v3428
      %v3435 = vsel %vm3434, 1, 0
      %v3436 = vadd.s32 %v3432, %v3428
      %v3437 = vadd.s32 %v3433, %v3435
      %v3438 = vadd.s32 %v3437, %v3427
      %v3439 = vadd.s32 %v3438, %v3429
      %v3440 = vand.u32 %v3417, 65535
      %v3441 = vshrl.u32 %v3417, 16
      %v3442 = vand.u32 %v3412, 65535
      %v3443 = vshrl.u32 %v3412, 16
      %v3444 = vmul.u32 %v3440, %v3442
      %v3445 = vmul.u32 %v3440, %v3443
      %v3446 = vmul.u32 %v3441, %v3442
      %v3447 = vmul.u32 %v3441, %v3443
      %v3448 = vshll.u32 %v3445, 16
      %v3449 = vshrl.u32 %v3445, 16
      %v3450 = vshll.u32 %v3446, 16
      %v3451 = vshrl.u32 %v3446, 16
      %vm3452 = vc.u32 %v3444, %v3448
      %v3453 = vsel %vm3452, 1, 0
      %v3454 = vadd.s32 %v3444, %v3448
      %v3455 = vadd.s32 %v3447, %v3453
      %vm3456 = vc.u32 %v3454, %v3450
      %v3457 = vsel %vm3456, 1, 0
      %v3458 = vadd.s32 %v3454, %v3450
      %v3459 = vadd.s32 %v3455, %v3457
      %v3460 = vadd.s32 %v3459, %v3449
      %v3461 = vadd.s32 %v3460, %v3451
      %v3462 = vmul.u32 %v3417, %v3408
      %v3463 = vadd.s32 %v3439, %v3458
      %vm3464 = vc.u32 %v3439, %v3458
      %v3465 = vadd.s32 %v3461, 1
      %v3466 = vsel %vm3464, %v3465, %v3461
      %v3467 = vadd.s32 %v3462, %v3466
      %v3468 = vadd.s32 %v3467, 536870912
      %v3469 = vshrl.u32 %v3468, 30
      %v3470 = vshll.u32 %v3469, 30
      %v3471 = vsub.s32 %v3467, %v3470
      %vm3472 = vcmp.lt.s32.totalorder %v3471, 0
      %v3473 = vsub.s32 0, %v3471
      %v3474 = vsel %vm3472, %v3473, %v3471
      %v3475 = vclz %v3474
      %v3476 = vsub.s32 %v3475, 2
      %vm3477 = vcmp.gt.s32.totalorder 0, %v3476
      %v3478 = vsel %vm3477, 0, %v3476
      %v3479 = vsub.s32 32, %v3478
      %v3480 = vshll.u32 %v3471, %v3478
      %v3481 = vshrl.u32 %v3463, %v3479
      %v3482 = vor.u32 %v3480, %v3481
      %v3483 = vsub.s32 4294967266, %v3478
      %v3484 = vadd.s32 %v3483, 127
      %v3485 = vshll.u32 %v3484, 23
      %v3486 = vor.u32 4788187, %v3485
      %v3487 = vand.u32 2147483647, %v3486
      %v3489 = vcvt.s32.f32 %v3482
      %v3490 = vmul.f32 %v3489, %v3487
      %v3491 = vxor.u32 %v3490, 2147483648
      %v3492 = vsel %vm3371, %v3491, %v3490
      %v3493 = vsub.s32 4, %v3469
      %v3494 = vsel %vm3371, %v3493, %v3469
      %v3495 = vsel %vm3370, %v383, %v3492
      %v3496 = vsel %vm3370, 0, %v3494
      %v3497 = vmul.f32 %v3495, %v3495
      %v3498 = vmul.f32 %v3497, -0.001358992
      %v3499 = vadd.f32 %v3498, 0.041655596
      %v3500 = vmul.f32 %v3497, %v3499
      %v3501 = vadd.f32 %v3500, -0.4999988
      %v3502 = vmul.f32 %v3497, %v3501
      %v3503 = vadd.f32 1.0, %v3502
      %v3504 = vmul.f32 %v3495, %v3495
      %v3505 = vmul.f32 %v3504, -0.00019511016
      %v3506 = vadd.f32 %v3505, 0.008332121
      %v3507 = vmul.f32 %v3504, %v3506
      %v3508 = vadd.f32 %v3507, -0.16666654
      %v3509 = vmul.f32 %v3504, %v3508
      %v3510 = vadd.f32 %v3509, 1.0
      %v3511 = vmul.f32 %v3510, %v3495
      %vm3512 = vweird.f32 %v383
      %v3513 = vadd.s32 %v3496, 3
      %v3514 = vand.u32 %v3513, 3
      %vm3515 = vcmp.lt.s32.totalorder %v3514, 2
      %vm3516 = vcmp.eq.s32.totalorder %v3514, 0
      %v3517 = vxor.u32 %v3511, 2147483648
      %v3518 = vsel %vm3516, %v3503, %v3517
      %vm3519 = vcmp.eq.s32.totalorder %v3514, 2
      %v3520 = vxor.u32 %v3503, 2147483648
      %v3521 = vsel %vm3519, %v3520, %v3511
      %v3522 = vsel %vm3515, %v3518, %v3521
      %v3523 = vsel %vm3512, nan, %v3522
      %v3524 = vand.u32 2147483647, %v386
      %vm3525 = vcmp.le.f32.partialorder %v3524, 0.7853982
      %vm3526 = vcmp.lt.s32.totalorder %v386, 0
      %v3527 = vand.u32 %v386, 2139095040
      %v3528 = vshrl.u32 %v3527, 23
      %v3529 = vsub.s32 %v3528, 127
      %v3530 = vand.u32 2147483647, %v386
      %v3531 = vand.u32 %v3530, 8388607
      %v3532 = vor.u32 %v3531, 8388608
      %v3533 = vsub.s32 0, %v3532
      %v3534 = vadd.s32 %v3529, 1
      %vm3535 = vcmp.gt.s32.totalorder %v3534, 0
      %v3536 = vsel %vm3535, %v3534, 0
      %v3537 = vshrl.u32 %v3536, 5
      %v3538 = vand.u32 %v3536, 31
      %v3539 = vsub.s32 32, %v3538
      %v3540 = vshrl.u32 683565275, %v3539
      %v3541 = vshll.u32 683565275, %v3538
      %v3542 = vshrl.u32 2475754826, %v3539
      %v3543 = vor.u32 %v3541, %v3542
      %v3544 = vshll.u32 2475754826, %v3538
      %v3545 = vshrl.u32 2131351028, %v3539
      %v3546 = vor.u32 %v3544, %v3545
      %v3547 = vshll.u32 2131351028, %v3538
      %v3548 = vshrl.u32 2102212464, %v3539
      %v3549 = vor.u32 %v3547, %v3548
      %v3550 = vshll.u32 2102212464, %v3538
      %v3551 = vshrl.u32 920167782, %v3539
      %v3552 = vor.u32 %v3550, %v3551
      %v3553 = vshll.u32 920167782, %v3538
      %v3554 = vshrl.u32 1326507024, %v3539
      %v3555 = vor.u32 %v3553, %v3554
      %vm3556 = vcmp.lt.s32.totalorder %v3537, 1
      %vm3557 = vcmp.lt.s32.totalorder %v3537, 2
      %vm3558 = vcmp.lt.s32.totalorder %v3537, 3
      %vm3559 = vcmp.lt.s32.totalorder %v3537, 4
      %v3560 = vsel %vm3556, %v3540, %v3543
      %v3561 = vsel %vm3559, %v3549, 2102212464
      %v3562 = vsel %vm3558, %v3546, %v3561
      %v3563 = vsel %vm3557, %v3560, %v3562
      %v3564 = vsel %vm3556, %v3543, %v3546
      %v3565 = vsel %vm3559, %v3552, 920167782
      %v3566 = vsel %vm3558, %v3549, %v3565
      %v3567 = vsel %vm3557, %v3564, %v3566
      %v3568 = vsel %vm3556, %v3546, %v3549
      %v3569 = vsel %vm3559, %v3555, 1326507024
      %v3570 = vsel %vm3558, %v3552, %v3569
      %v3571 = vsel %vm3557, %v3568, %v3570
      %v3572 = vshll.u32 %v3532, 8
      %v3573 = vand.u32 %v3572, 65535
      %v3574 = vshrl.u32 %v3572, 16
      %v3575 = vand.u32 %v3571, 65535
      %v3576 = vshrl.u32 %v3571, 16
      %v3577 = vmul.u32 %v3573, %v3575
      %v3578 = vmul.u32 %v3573, %v3576
      %v3579 = vmul.u32 %v3574, %v3575
      %v3580 = vmul.u32 %v3574, %v3576
      %v3581 = vshll.u32 %v3578, 16
      %v3582 = vshrl.u32 %v3578, 16
      %v3583 = vshll.u32 %v3579, 16
      %v3584 = vshrl.u32 %v3579, 16
      %vm3585 = vc.u32 %v3577, %v3581
      %v3586 = vsel %vm3585, 1, 0
      %v3587 = vadd.s32 %v3577, %v3581
      %v3588 = vadd.s32 %v3580, %v3586
      %vm3589 = vc.u32 %v3587, %v3583
      %v3590 = vsel %vm3589, 1, 0
      %v3591 = vadd.s32 %v3587, %v3583
      %v3592 = vadd.s32 %v3588, %v3590
      %v3593 = vadd.s32 %v3592, %v3582
      %v3594 = vadd.s32 %v3593, %v3584
      %v3595 = vand.u32 %v3572, 65535
      %v3596 = vshrl.u32 %v3572, 16
      %v3597 = vand.u32 %v3567, 65535
      %v3598 = vshrl.u32 %v3567, 16
      %v3599 = vmul.u32 %v3595, %v3597
      %v3600 = vmul.u32 %v3595, %v3598
      %v3601 = vmul.u32 %v3596, %v3597
      %v3602 = vmul.u32 %v3596, %v3598
      %v3603 = vshll.u32 %v3600, 16
      %v3604 = vshrl.u32 %v3600, 16
      %v3605 = vshll.u32 %v3601, 16
      %v3606 = vshrl.u32 %v3601, 16
      %vm3607 = vc.u32 %v3599, %v3603
      %v3608 = vsel %vm3607, 1, 0
      %v3609 = vadd.s32 %v3599, %v3603
      %v3610 = vadd.s32 %v3602, %v3608
      %vm3611 = vc.u32 %v3609, %v3605
      %v3612 = vsel %vm3611, 1, 0
      %v3613 = vadd.s32 %v3609, %v3605
      %v3614 = vadd.s32 %v3610, %v3612
      %v3615 = vadd.s32 %v3614, %v3604
      %v3616 = vadd.s32 %v3615, %v3606
      %v3617 = vmul.u32 %v3572, %v3563
      %v3618 = vadd.s32 %v3594, %v3613
      %vm3619 = vc.u32 %v3594, %v3613
      %v3620 = vadd.s32 %v3616, 1
      %v3621 = vsel %vm3619, %v3620, %v3616
      %v3622 = vadd.s32 %v3617, %v3621
      %v3623 = vadd.s32 %v3622, 536870912
      %v3624 = vshrl.u32 %v3623, 30
      %v3625 = vshll.u32 %v3624, 30
      %v3626 = vsub.s32 %v3622, %v3625
      %vm3627 = vcmp.lt.s32.totalorder %v3626, 0
      %v3628 = vsub.s32 0, %v3626
      %v3629 = vsel %vm3627, %v3628, %v3626
      %v3630 = vclz %v3629
      %v3631 = vsub.s32 %v3630, 2
      %vm3632 = vcmp.gt.s32.totalorder 0, %v3631
      %v3633 = vsel %vm3632, 0, %v3631
      %v3634 = vsub.s32 32, %v3633
      %v3635 = vshll.u32 %v3626, %v3633
      %v3636 = vshrl.u32 %v3618, %v3634
      %v3637 = vor.u32 %v3635, %v3636
      %v3638 = vsub.s32 4294967266, %v3633
      %v3639 = vadd.s32 %v3638, 127
      %v3640 = vshll.u32 %v3639, 23
      %v3641 = vor.u32 4788187, %v3640
      %v3642 = vand.u32 2147483647, %v3641
      %v3644 = vcvt.s32.f32 %v3637
      %v3645 = vmul.f32 %v3644, %v3642
      %v3646 = vxor.u32 %v3645, 2147483648
      %v3647 = vsel %vm3526, %v3646, %v3645
      %v3648 = vsub.s32 4, %v3624
      %v3649 = vsel %vm3526, %v3648, %v3624
      %v3650 = vsel %vm3525, %v386, %v3647
      %v3651 = vsel %vm3525, 0, %v3649
      %v3652 = vmul.f32 %v3650, %v3650
      %v3653 = vmul.f32 %v3652, -0.001358992
      %v3654 = vadd.f32 %v3653, 0.041655596
      %v3655 = vmul.f32 %v3652, %v3654
      %v3656 = vadd.f32 %v3655, -0.4999988
      %v3657 = vmul.f32 %v3652, %v3656
      %v3658 = vadd.f32 1.0, %v3657
      %v3659 = vmul.f32 %v3650, %v3650
      %v3660 = vmul.f32 %v3659, -0.00019511016
      %v3661 = vadd.f32 %v3660, 0.008332121
      %v3662 = vmul.f32 %v3659, %v3661
      %v3663 = vadd.f32 %v3662, -0.16666654
      %v3664 = vmul.f32 %v3659, %v3663
      %v3665 = vadd.f32 %v3664, 1.0
      %v3666 = vmul.f32 %v3665, %v3650
      %vm3667 = vweird.f32 %v386
      %v3668 = vadd.s32 %v3651, 3
      %v3669 = vand.u32 %v3668, 3
      %vm3670 = vcmp.lt.s32.totalorder %v3669, 2
      %vm3671 = vcmp.eq.s32.totalorder %v3669, 0
      %v3672 = vxor.u32 %v3666, 2147483648
      %v3673 = vsel %vm3671, %v3658, %v3672
      %vm3674 = vcmp.eq.s32.totalorder %v3669, 2
      %v3675 = vxor.u32 %v3658, 2147483648
      %v3676 = vsel %vm3674, %v3675, %v3666
      %v3677 = vsel %vm3670, %v3673, %v3676
      %v3678 = vsel %vm3667, nan, %v3677
      %v3679 = vand.u32 2147483647, %v389
      %vm3680 = vcmp.le.f32.partialorder %v3679, 0.7853982
      %vm3681 = vcmp.lt.s32.totalorder %v389, 0
      %v3682 = vand.u32 %v389, 2139095040
      %v3683 = vshrl.u32 %v3682, 23
      %v3684 = vsub.s32 %v3683, 127
      %v3685 = vand.u32 2147483647, %v389
      %v3686 = vand.u32 %v3685, 8388607
      %v3687 = vor.u32 %v3686, 8388608
      %v3688 = vsub.s32 0, %v3687
      %v3689 = vadd.s32 %v3684, 1
      %vm3690 = vcmp.gt.s32.totalorder %v3689, 0
      %v3691 = vsel %vm3690, %v3689, 0
      %v3692 = vshrl.u32 %v3691, 5
      %v3693 = vand.u32 %v3691, 31
      %v3694 = vsub.s32 32, %v3693
      %v3695 = vshrl.u32 683565275, %v3694
      %v3696 = vshll.u32 683565275, %v3693
      %v3697 = vshrl.u32 2475754826, %v3694
      %v3698 = vor.u32 %v3696, %v3697
      %v3699 = vshll.u32 2475754826, %v3693
      %v3700 = vshrl.u32 2131351028, %v3694
      %v3701 = vor.u32 %v3699, %v3700
      %v3702 = vshll.u32 2131351028, %v3693
      %v3703 = vshrl.u32 2102212464, %v3694
      %v3704 = vor.u32 %v3702, %v3703
      %v3705 = vshll.u32 2102212464, %v3693
      %v3706 = vshrl.u32 920167782, %v3694
      %v3707 = vor.u32 %v3705, %v3706
      %v3708 = vshll.u32 920167782, %v3693
      %v3709 = vshrl.u32 1326507024, %v3694
      %v3710 = vor.u32 %v3708, %v3709
      %vm3711 = vcmp.lt.s32.totalorder %v3692, 1
      %vm3712 = vcmp.lt.s32.totalorder %v3692, 2
      %vm3713 = vcmp.lt.s32.totalorder %v3692, 3
      %vm3714 = vcmp.lt.s32.totalorder %v3692, 4
      %v3715 = vsel %vm3711, %v3695, %v3698
      %v3716 = vsel %vm3714, %v3704, 2102212464
      %v3717 = vsel %vm3713, %v3701, %v3716
      %v3718 = vsel %vm3712, %v3715, %v3717
      %v3719 = vsel %vm3711, %v3698, %v3701
      %v3720 = vsel %vm3714, %v3707, 920167782
      %v3721 = vsel %vm3713, %v3704, %v3720
      %v3722 = vsel %vm3712, %v3719, %v3721
      %v3723 = vsel %vm3711, %v3701, %v3704
      %v3724 = vsel %vm3714, %v3710, 1326507024
      %v3725 = vsel %vm3713, %v3707, %v3724
      %v3726 = vsel %vm3712, %v3723, %v3725
      %v3727 = vshll.u32 %v3687, 8
      %v3728 = vand.u32 %v3727, 65535
      %v3729 = vshrl.u32 %v3727, 16
      %v3730 = vand.u32 %v3726, 65535
      %v3731 = vshrl.u32 %v3726, 16
      %v3732 = vmul.u32 %v3728, %v3730
      %v3733 = vmul.u32 %v3728, %v3731
      %v3734 = vmul.u32 %v3729, %v3730
      %v3735 = vmul.u32 %v3729, %v3731
      %v3736 = vshll.u32 %v3733, 16
      %v3737 = vshrl.u32 %v3733, 16
      %v3738 = vshll.u32 %v3734, 16
      %v3739 = vshrl.u32 %v3734, 16
      %vm3740 = vc.u32 %v3732, %v3736
      %v3741 = vsel %vm3740, 1, 0
      %v3742 = vadd.s32 %v3732, %v3736
      %v3743 = vadd.s32 %v3735, %v3741
      %vm3744 = vc.u32 %v3742, %v3738
      %v3745 = vsel %vm3744, 1, 0
      %v3746 = vadd.s32 %v3742, %v3738
      %v3747 = vadd.s32 %v3743, %v3745
      %v3748 = vadd.s32 %v3747, %v3737
      %v3749 = vadd.s32 %v3748, %v3739
      %v3750 = vand.u32 %v3727, 65535
      %v3751 = vshrl.u32 %v3727, 16
      %v3752 = vand.u32 %v3722, 65535
      %v3753 = vshrl.u32 %v3722, 16
      %v3754 = vmul.u32 %v3750, %v3752
      %v3755 = vmul.u32 %v3750, %v3753
      %v3756 = vmul.u32 %v3751, %v3752
      %v3757 = vmul.u32 %v3751, %v3753
      %v3758 = vshll.u32 %v3755, 16
      %v3759 = vshrl.u32 %v3755, 16
      %v3760 = vshll.u32 %v3756, 16
      %v3761 = vshrl.u32 %v3756, 16
      %vm3762 = vc.u32 %v3754, %v3758
      %v3763 = vsel %vm3762, 1, 0
      %v3764 = vadd.s32 %v3754, %v3758
      %v3765 = vadd.s32 %v3757, %v3763
      %vm3766 = vc.u32 %v3764, %v3760
      %v3767 = vsel %vm3766, 1, 0
      %v3768 = vadd.s32 %v3764, %v3760
      %v3769 = vadd.s32 %v3765, %v3767
      %v3770 = vadd.s32 %v3769, %v3759
      %v3771 = vadd.s32 %v3770, %v3761
      %v3772 = vmul.u32 %v3727, %v3718
      %v3773 = vadd.s32 %v3749, %v3768
      %vm3774 = vc.u32 %v3749, %v3768
      %v3775 = vadd.s32 %v3771, 1
      %v3776 = vsel %vm3774, %v3775, %v3771
      %v3777 = vadd.s32 %v3772, %v3776
      %v3778 = vadd.s32 %v3777, 536870912
      %v3779 = vshrl.u32 %v3778, 30
      %v3780 = vshll.u32 %v3779, 30
      %v3781 = vsub.s32 %v3777, %v3780
      %vm3782 = vcmp.lt.s32.totalorder %v3781, 0
      %v3783 = vsub.s32 0, %v3781
      %v3784 = vsel %vm3782, %v3783, %v3781
      %v3785 = vclz %v3784
      %v3786 = vsub.s32 %v3785, 2
      %vm3787 = vcmp.gt.s32.totalorder 0, %v3786
      %v3788 = vsel %vm3787, 0, %v3786
      %v3789 = vsub.s32 32, %v3788
      %v3790 = vshll.u32 %v3781, %v3788
      %v3791 = vshrl.u32 %v3773, %v3789
      %v3792 = vor.u32 %v3790, %v3791
      %v3793 = vsub.s32 4294967266, %v3788
      %v3794 = vadd.s32 %v3793, 127
      %v3795 = vshll.u32 %v3794, 23
      %v3796 = vor.u32 4788187, %v3795
      %v3797 = vand.u32 2147483647, %v3796
      %v3799 = vcvt.s32.f32 %v3792
      %v3800 = vmul.f32 %v3799, %v3797
      %v3801 = vxor.u32 %v3800, 2147483648
      %v3802 = vsel %vm3681, %v3801, %v3800
      %v3803 = vsub.s32 4, %v3779
      %v3804 = vsel %vm3681, %v3803, %v3779
      %v3805 = vsel %vm3680, %v389, %v3802
      %v3806 = vsel %vm3680, 0, %v3804
      %v3807 = vmul.f32 %v3805, %v3805
      %v3808 = vmul.f32 %v3807, -0.001358992
      %v3809 = vadd.f32 %v3808, 0.041655596
      %v3810 = vmul.f32 %v3807, %v3809
      %v3811 = vadd.f32 %v3810, -0.4999988
      %v3812 = vmul.f32 %v3807, %v3811
      %v3813 = vadd.f32 1.0, %v3812
      %v3814 = vmul.f32 %v3805, %v3805
      %v3815 = vmul.f32 %v3814, -0.00019511016
      %v3816 = vadd.f32 %v3815, 0.008332121
      %v3817 = vmul.f32 %v3814, %v3816
      %v3818 = vadd.f32 %v3817, -0.16666654
      %v3819 = vmul.f32 %v3814, %v3818
      %v3820 = vadd.f32 %v3819, 1.0
      %v3821 = vmul.f32 %v3820, %v3805
      %vm3822 = vweird.f32 %v389
      %v3823 = vadd.s32 %v3806, 3
      %v3824 = vand.u32 %v3823, 3
      %vm3825 = vcmp.lt.s32.totalorder %v3824, 2
      %vm3826 = vcmp.eq.s32.totalorder %v3824, 0
      %v3827 = vxor.u32 %v3821, 2147483648
      %v3828 = vsel %vm3826, %v3813, %v3827
      %vm3829 = vcmp.eq.s32.totalorder %v3824, 2
      %v3830 = vxor.u32 %v3813, 2147483648
      %v3831 = vsel %vm3829, %v3830, %v3821
      %v3832 = vsel %vm3825, %v3828, %v3831
      %v3833 = vsel %vm3822, nan, %v3832
      %v3834 = vand.u32 2147483647, %v392
      %vm3835 = vcmp.le.f32.partialorder %v3834, 0.7853982
      %vm3836 = vcmp.lt.s32.totalorder %v392, 0
      %v3837 = vand.u32 %v392, 2139095040
      %v3838 = vshrl.u32 %v3837, 23
      %v3839 = vsub.s32 %v3838, 127
      %v3840 = vand.u32 2147483647, %v392
      %v3841 = vand.u32 %v3840, 8388607
      %v3842 = vor.u32 %v3841, 8388608
      %v3843 = vsub.s32 0, %v3842
      %v3844 = vadd.s32 %v3839, 1
      %vm3845 = vcmp.gt.s32.totalorder %v3844, 0
      %v3846 = vsel %vm3845, %v3844, 0
      %v3847 = vshrl.u32 %v3846, 5
      %v3848 = vand.u32 %v3846, 31
      %v3849 = vsub.s32 32, %v3848
      %v3850 = vshrl.u32 683565275, %v3849
      %v3851 = vshll.u32 683565275, %v3848
      %v3852 = vshrl.u32 2475754826, %v3849
      %v3853 = vor.u32 %v3851, %v3852
      %v3854 = vshll.u32 2475754826, %v3848
      %v3855 = vshrl.u32 2131351028, %v3849
      %v3856 = vor.u32 %v3854, %v3855
      %v3857 = vshll.u32 2131351028, %v3848
      %v3858 = vshrl.u32 2102212464, %v3849
      %v3859 = vor.u32 %v3857, %v3858
      %v3860 = vshll.u32 2102212464, %v3848
      %v3861 = vshrl.u32 920167782, %v3849
      %v3862 = vor.u32 %v3860, %v3861
      %v3863 = vshll.u32 920167782, %v3848
      %v3864 = vshrl.u32 1326507024, %v3849
      %v3865 = vor.u32 %v3863, %v3864
      %vm3866 = vcmp.lt.s32.totalorder %v3847, 1
      %vm3867 = vcmp.lt.s32.totalorder %v3847, 2
      %vm3868 = vcmp.lt.s32.totalorder %v3847, 3
      %vm3869 = vcmp.lt.s32.totalorder %v3847, 4
      %v3870 = vsel %vm3866, %v3850, %v3853
      %v3871 = vsel %vm3869, %v3859, 2102212464
      %v3872 = vsel %vm3868, %v3856, %v3871
      %v3873 = vsel %vm3867, %v3870, %v3872
      %v3874 = vsel %vm3866, %v3853, %v3856
      %v3875 = vsel %vm3869, %v3862, 920167782
      %v3876 = vsel %vm3868, %v3859, %v3875
      %v3877 = vsel %vm3867, %v3874, %v3876
      %v3878 = vsel %vm3866, %v3856, %v3859
      %v3879 = vsel %vm3869, %v3865, 1326507024
      %v3880 = vsel %vm3868, %v3862, %v3879
      %v3881 = vsel %vm3867, %v3878, %v3880
      %v3882 = vshll.u32 %v3842, 8
      %v3883 = vand.u32 %v3882, 65535
      %v3884 = vshrl.u32 %v3882, 16
      %v3885 = vand.u32 %v3881, 65535
      %v3886 = vshrl.u32 %v3881, 16
      %v3887 = vmul.u32 %v3883, %v3885
      %v3888 = vmul.u32 %v3883, %v3886
      %v3889 = vmul.u32 %v3884, %v3885
      %v3890 = vmul.u32 %v3884, %v3886
      %v3891 = vshll.u32 %v3888, 16
      %v3892 = vshrl.u32 %v3888, 16
      %v3893 = vshll.u32 %v3889, 16
      %v3894 = vshrl.u32 %v3889, 16
      %vm3895 = vc.u32 %v3887, %v3891
      %v3896 = vsel %vm3895, 1, 0
      %v3897 = vadd.s32 %v3887, %v3891
      %v3898 = vadd.s32 %v3890, %v3896
      %vm3899 = vc.u32 %v3897, %v3893
      %v3900 = vsel %vm3899, 1, 0
      %v3901 = vadd.s32 %v3897, %v3893
      %v3902 = vadd.s32 %v3898, %v3900
      %v3903 = vadd.s32 %v3902, %v3892
      %v3904 = vadd.s32 %v3903, %v3894
      %v3905 = vand.u32 %v3882, 65535
      %v3906 = vshrl.u32 %v3882, 16
      %v3907 = vand.u32 %v3877, 65535
      %v3908 = vshrl.u32 %v3877, 16
      %v3909 = vmul.u32 %v3905, %v3907
      %v3910 = vmul.u32 %v3905, %v3908
      %v3911 = vmul.u32 %v3906, %v3907
      %v3912 = vmul.u32 %v3906, %v3908
      %v3913 = vshll.u32 %v3910, 16
      %v3914 = vshrl.u32 %v3910, 16
      %v3915 = vshll.u32 %v3911, 16
      %v3916 = vshrl.u32 %v3911, 16
      %vm3917 = vc.u32 %v3909, %v3913
      %v3918 = vsel %vm3917, 1, 0
      %v3919 = vadd.s32 %v3909, %v3913
      %v3920 = vadd.s32 %v3912, %v3918
      %vm3921 = vc.u32 %v3919, %v3915
      %v3922 = vsel %vm3921, 1, 0
      %v3923 = vadd.s32 %v3919, %v3915
      %v3924 = vadd.s32 %v3920, %v3922
      %v3925 = vadd.s32 %v3924, %v3914
      %v3926 = vadd.s32 %v3925, %v3916
      %v3927 = vmul.u32 %v3882, %v3873
      %v3928 = vadd.s32 %v3904, %v3923
      %vm3929 = vc.u32 %v3904, %v3923
      %v3930 = vadd.s32 %v3926, 1
      %v3931 = vsel %vm3929, %v3930, %v3926
      %v3932 = vadd.s32 %v3927, %v3931
      %v3933 = vadd.s32 %v3932, 536870912
      %v3934 = vshrl.u32 %v3933, 30
      %v3935 = vshll.u32 %v3934, 30
      %v3936 = vsub.s32 %v3932, %v3935
      %vm3937 = vcmp.lt.s32.totalorder %v3936, 0
      %v3938 = vsub.s32 0, %v3936
      %v3939 = vsel %vm3937, %v3938, %v3936
      %v3940 = vclz %v3939
      %v3941 = vsub.s32 %v3940, 2
      %vm3942 = vcmp.gt.s32.totalorder 0, %v3941
      %v3943 = vsel %vm3942, 0, %v3941
      %v3944 = vsub.s32 32, %v3943
      %v3945 = vshll.u32 %v3936, %v3943
      %v3946 = vshrl.u32 %v3928, %v3944
      %v3947 = vor.u32 %v3945, %v3946
      %v3948 = vsub.s32 4294967266, %v3943
      %v3949 = vadd.s32 %v3948, 127
      %v3950 = vshll.u32 %v3949, 23
      %v3951 = vor.u32 4788187, %v3950
      %v3952 = vand.u32 2147483647, %v3951
      %v3954 = vcvt.s32.f32 %v3947
      %v3955 = vmul.f32 %v3954, %v3952
      %v3956 = vxor.u32 %v3955, 2147483648
      %v3957 = vsel %vm3836, %v3956, %v3955
      %v3958 = vsub.s32 4, %v3934
      %v3959 = vsel %vm3836, %v3958, %v3934
      %v3960 = vsel %vm3835, %v392, %v3957
      %v3961 = vsel %vm3835, 0, %v3959
      %v3962 = vmul.f32 %v3960, %v3960
      %v3963 = vmul.f32 %v3962, -0.001358992
      %v3964 = vadd.f32 %v3963, 0.041655596
      %v3965 = vmul.f32 %v3962, %v3964
      %v3966 = vadd.f32 %v3965, -0.4999988
      %v3967 = vmul.f32 %v3962, %v3966
      %v3968 = vadd.f32 1.0, %v3967
      %v3969 = vmul.f32 %v3960, %v3960
      %v3970 = vmul.f32 %v3969, -0.00019511016
      %v3971 = vadd.f32 %v3970, 0.008332121
      %v3972 = vmul.f32 %v3969, %v3971
      %v3973 = vadd.f32 %v3972, -0.16666654
      %v3974 = vmul.f32 %v3969, %v3973
      %v3975 = vadd.f32 %v3974, 1.0
      %v3976 = vmul.f32 %v3975, %v3960
      %vm3977 = vweird.f32 %v392
      %v3978 = vadd.s32 %v3961, 3
      %v3979 = vand.u32 %v3978, 3
      %vm3980 = vcmp.lt.s32.totalorder %v3979, 2
      %vm3981 = vcmp.eq.s32.totalorder %v3979, 0
      %v3982 = vxor.u32 %v3976, 2147483648
      %v3983 = vsel %vm3981, %v3968, %v3982
      %vm3984 = vcmp.eq.s32.totalorder %v3979, 2
      %v3985 = vxor.u32 %v3968, 2147483648
      %v3986 = vsel %vm3984, %v3985, %v3976
      %v3987 = vsel %vm3980, %v3983, %v3986
      %v3988 = vsel %vm3977, nan, %v3987
      %v3989 = vand.u32 2147483647, %v395
      %vm3990 = vcmp.le.f32.partialorder %v3989, 0.7853982
      %vm3991 = vcmp.lt.s32.totalorder %v395, 0
      %v3992 = vand.u32 %v395, 2139095040
      %v3993 = vshrl.u32 %v3992, 23
      %v3994 = vsub.s32 %v3993, 127
      %v3995 = vand.u32 2147483647, %v395
      %v3996 = vand.u32 %v3995, 8388607
      %v3997 = vor.u32 %v3996, 8388608
      %v3998 = vsub.s32 0, %v3997
      %v3999 = vadd.s32 %v3994, 1
      %vm4000 = vcmp.gt.s32.totalorder %v3999, 0
      %v4001 = vsel %vm4000, %v3999, 0
      %v4002 = vshrl.u32 %v4001, 5
      %v4003 = vand.u32 %v4001, 31
      %v4004 = vsub.s32 32, %v4003
      %v4005 = vshrl.u32 683565275, %v4004
      %v4006 = vshll.u32 683565275, %v4003
      %v4007 = vshrl.u32 2475754826, %v4004
      %v4008 = vor.u32 %v4006, %v4007
      %v4009 = vshll.u32 2475754826, %v4003
      %v4010 = vshrl.u32 2131351028, %v4004
      %v4011 = vor.u32 %v4009, %v4010
      %v4012 = vshll.u32 2131351028, %v4003
      %v4013 = vshrl.u32 2102212464, %v4004
      %v4014 = vor.u32 %v4012, %v4013
      %v4015 = vshll.u32 2102212464, %v4003
      %v4016 = vshrl.u32 920167782, %v4004
      %v4017 = vor.u32 %v4015, %v4016
      %v4018 = vshll.u32 920167782, %v4003
      %v4019 = vshrl.u32 1326507024, %v4004
      %v4020 = vor.u32 %v4018, %v4019
      %vm4021 = vcmp.lt.s32.totalorder %v4002, 1
      %vm4022 = vcmp.lt.s32.totalorder %v4002, 2
      %vm4023 = vcmp.lt.s32.totalorder %v4002, 3
      %vm4024 = vcmp.lt.s32.totalorder %v4002, 4
      %v4025 = vsel %vm4021, %v4005, %v4008
      %v4026 = vsel %vm4024, %v4014, 2102212464
      %v4027 = vsel %vm4023, %v4011, %v4026
      %v4028 = vsel %vm4022, %v4025, %v4027
      %v4029 = vsel %vm4021, %v4008, %v4011
      %v4030 = vsel %vm4024, %v4017, 920167782
      %v4031 = vsel %vm4023, %v4014, %v4030
      %v4032 = vsel %vm4022, %v4029, %v4031
      %v4033 = vsel %vm4021, %v4011, %v4014
      %v4034 = vsel %vm4024, %v4020, 1326507024
      %v4035 = vsel %vm4023, %v4017, %v4034
      %v4036 = vsel %vm4022, %v4033, %v4035
      %v4037 = vshll.u32 %v3997, 8
      %v4038 = vand.u32 %v4037, 65535
      %v4039 = vshrl.u32 %v4037, 16
      %v4040 = vand.u32 %v4036, 65535
      %v4041 = vshrl.u32 %v4036, 16
      %v4042 = vmul.u32 %v4038, %v4040
      %v4043 = vmul.u32 %v4038, %v4041
      %v4044 = vmul.u32 %v4039, %v4040
      %v4045 = vmul.u32 %v4039, %v4041
      %v4046 = vshll.u32 %v4043, 16
      %v4047 = vshrl.u32 %v4043, 16
      %v4048 = vshll.u32 %v4044, 16
      %v4049 = vshrl.u32 %v4044, 16
      %vm4050 = vc.u32 %v4042, %v4046
      %v4051 = vsel %vm4050, 1, 0
      %v4052 = vadd.s32 %v4042, %v4046
      %v4053 = vadd.s32 %v4045, %v4051
      %vm4054 = vc.u32 %v4052, %v4048
      %v4055 = vsel %vm4054, 1, 0
      %v4056 = vadd.s32 %v4052, %v4048
      %v4057 = vadd.s32 %v4053, %v4055
      %v4058 = vadd.s32 %v4057, %v4047
      %v4059 = vadd.s32 %v4058, %v4049
      %v4060 = vand.u32 %v4037, 65535
      %v4061 = vshrl.u32 %v4037, 16
      %v4062 = vand.u32 %v4032, 65535
      %v4063 = vshrl.u32 %v4032, 16
      %v4064 = vmul.u32 %v4060, %v4062
      %v4065 = vmul.u32 %v4060, %v4063
      %v4066 = vmul.u32 %v4061, %v4062
      %v4067 = vmul.u32 %v4061, %v4063
      %v4068 = vshll.u32 %v4065, 16
      %v4069 = vshrl.u32 %v4065, 16
      %v4070 = vshll.u32 %v4066, 16
      %v4071 = vshrl.u32 %v4066, 16
      %vm4072 = vc.u32 %v4064, %v4068
      %v4073 = vsel %vm4072, 1, 0
      %v4074 = vadd.s32 %v4064, %v4068
      %v4075 = vadd.s32 %v4067, %v4073
      %vm4076 = vc.u32 %v4074, %v4070
      %v4077 = vsel %vm4076, 1, 0
      %v4078 = vadd.s32 %v4074, %v4070
      %v4079 = vadd.s32 %v4075, %v4077
      %v4080 = vadd.s32 %v4079, %v4069
      %v4081 = vadd.s32 %v4080, %v4071
      %v4082 = vmul.u32 %v4037, %v4028
      %v4083 = vadd.s32 %v4059, %v4078
      %vm4084 = vc.u32 %v4059, %v4078
      %v4085 = vadd.s32 %v4081, 1
      %v4086 = vsel %vm4084, %v4085, %v4081
      %v4087 = vadd.s32 %v4082, %v4086
      %v4088 = vadd.s32 %v4087, 536870912
      %v4089 = vshrl.u32 %v4088, 30
      %v4090 = vshll.u32 %v4089, 30
      %v4091 = vsub.s32 %v4087, %v4090
      %vm4092 = vcmp.lt.s32.totalorder %v4091, 0
      %v4093 = vsub.s32 0, %v4091
      %v4094 = vsel %vm4092, %v4093, %v4091
      %v4095 = vclz %v4094
      %v4096 = vsub.s32 %v4095, 2
      %vm4097 = vcmp.gt.s32.totalorder 0, %v4096
      %v4098 = vsel %vm4097, 0, %v4096
      %v4099 = vsub.s32 32, %v4098
      %v4100 = vshll.u32 %v4091, %v4098
      %v4101 = vshrl.u32 %v4083, %v4099
      %v4102 = vor.u32 %v4100, %v4101
      %v4103 = vsub.s32 4294967266, %v4098
      %v4104 = vadd.s32 %v4103, 127
      %v4105 = vshll.u32 %v4104, 23
      %v4106 = vor.u32 4788187, %v4105
      %v4107 = vand.u32 2147483647, %v4106
      %v4109 = vcvt.s32.f32 %v4102
      %v4110 = vmul.f32 %v4109, %v4107
      %v4111 = vxor.u32 %v4110, 2147483648
      %v4112 = vsel %vm3991, %v4111, %v4110
      %v4113 = vsub.s32 4, %v4089
      %v4114 = vsel %vm3991, %v4113, %v4089
      %v4115 = vsel %vm3990, %v395, %v4112
      %v4116 = vsel %vm3990, 0, %v4114
      %v4117 = vmul.f32 %v4115, %v4115
      %v4118 = vmul.f32 %v4117, -0.001358992
      %v4119 = vadd.f32 %v4118, 0.041655596
      %v4120 = vmul.f32 %v4117, %v4119
      %v4121 = vadd.f32 %v4120, -0.4999988
      %v4122 = vmul.f32 %v4117, %v4121
      %v4123 = vadd.f32 1.0, %v4122
      %v4124 = vmul.f32 %v4115, %v4115
      %v4125 = vmul.f32 %v4124, -0.00019511016
      %v4126 = vadd.f32 %v4125, 0.008332121
      %v4127 = vmul.f32 %v4124, %v4126
      %v4128 = vadd.f32 %v4127, -0.16666654
      %v4129 = vmul.f32 %v4124, %v4128
      %v4130 = vadd.f32 %v4129, 1.0
      %v4131 = vmul.f32 %v4130, %v4115
      %vm4132 = vweird.f32 %v395
      %v4133 = vadd.s32 %v4116, 3
      %v4134 = vand.u32 %v4133, 3
      %vm4135 = vcmp.lt.s32.totalorder %v4134, 2
      %vm4136 = vcmp.eq.s32.totalorder %v4134, 0
      %v4137 = vxor.u32 %v4131, 2147483648
      %v4138 = vsel %vm4136, %v4123, %v4137
      %vm4139 = vcmp.eq.s32.totalorder %v4134, 2
      %v4140 = vxor.u32 %v4123, 2147483648
      %v4141 = vsel %vm4139, %v4140, %v4131
      %v4142 = vsel %vm4135, %v4138, %v4141
      %v4143 = vsel %vm4132, nan, %v4142
      %v4144 = vand.u32 2147483647, %v398
      %vm4145 = vcmp.le.f32.partialorder %v4144, 0.7853982
      %vm4146 = vcmp.lt.s32.totalorder %v398, 0
      %v4147 = vand.u32 %v398, 2139095040
      %v4148 = vshrl.u32 %v4147, 23
      %v4149 = vsub.s32 %v4148, 127
      %v4150 = vand.u32 2147483647, %v398
      %v4151 = vand.u32 %v4150, 8388607
      %v4152 = vor.u32 %v4151, 8388608
      %v4153 = vsub.s32 0, %v4152
      %v4154 = vadd.s32 %v4149, 1
      %vm4155 = vcmp.gt.s32.totalorder %v4154, 0
      %v4156 = vsel %vm4155, %v4154, 0
      %v4157 = vshrl.u32 %v4156, 5
      %v4158 = vand.u32 %v4156, 31
      %v4159 = vsub.s32 32, %v4158
      %v4160 = vshrl.u32 683565275, %v4159
      %v4161 = vshll.u32 683565275, %v4158
      %v4162 = vshrl.u32 2475754826, %v4159
      %v4163 = vor.u32 %v4161, %v4162
      %v4164 = vshll.u32 2475754826, %v4158
      %v4165 = vshrl.u32 2131351028, %v4159
      %v4166 = vor.u32 %v4164, %v4165
      %v4167 = vshll.u32 2131351028, %v4158
      %v4168 = vshrl.u32 2102212464, %v4159
      %v4169 = vor.u32 %v4167, %v4168
      %v4170 = vshll.u32 2102212464, %v4158
      %v4171 = vshrl.u32 920167782, %v4159
      %v4172 = vor.u32 %v4170, %v4171
      %v4173 = vshll.u32 920167782, %v4158
      %v4174 = vshrl.u32 1326507024, %v4159
      %v4175 = vor.u32 %v4173, %v4174
      %vm4176 = vcmp.lt.s32.totalorder %v4157, 1
      %vm4177 = vcmp.lt.s32.totalorder %v4157, 2
      %vm4178 = vcmp.lt.s32.totalorder %v4157, 3
      %vm4179 = vcmp.lt.s32.totalorder %v4157, 4
      %v4180 = vsel %vm4176, %v4160, %v4163
      %v4181 = vsel %vm4179, %v4169, 2102212464
      %v4182 = vsel %vm4178, %v4166, %v4181
      %v4183 = vsel %vm4177, %v4180, %v4182
      %v4184 = vsel %vm4176, %v4163, %v4166
      %v4185 = vsel %vm4179, %v4172, 920167782
      %v4186 = vsel %vm4178, %v4169, %v4185
      %v4187 = vsel %vm4177, %v4184, %v4186
      %v4188 = vsel %vm4176, %v4166, %v4169
      %v4189 = vsel %vm4179, %v4175, 1326507024
      %v4190 = vsel %vm4178, %v4172, %v4189
      %v4191 = vsel %vm4177, %v4188, %v4190
      %v4192 = vshll.u32 %v4152, 8
      %v4193 = vand.u32 %v4192, 65535
      %v4194 = vshrl.u32 %v4192, 16
      %v4195 = vand.u32 %v4191, 65535
      %v4196 = vshrl.u32 %v4191, 16
      %v4197 = vmul.u32 %v4193, %v4195
      %v4198 = vmul.u32 %v4193, %v4196
      %v4199 = vmul.u32 %v4194, %v4195
      %v4200 = vmul.u32 %v4194, %v4196
      %v4201 = vshll.u32 %v4198, 16
      %v4202 = vshrl.u32 %v4198, 16
      %v4203 = vshll.u32 %v4199, 16
      %v4204 = vshrl.u32 %v4199, 16
      %vm4205 = vc.u32 %v4197, %v4201
      %v4206 = vsel %vm4205, 1, 0
      %v4207 = vadd.s32 %v4197, %v4201
      %v4208 = vadd.s32 %v4200, %v4206
      %vm4209 = vc.u32 %v4207, %v4203
      %v4210 = vsel %vm4209, 1, 0
      %v4211 = vadd.s32 %v4207, %v4203
      %v4212 = vadd.s32 %v4208, %v4210
      %v4213 = vadd.s32 %v4212, %v4202
      %v4214 = vadd.s32 %v4213, %v4204
      %v4215 = vand.u32 %v4192, 65535
      %v4216 = vshrl.u32 %v4192, 16
      %v4217 = vand.u32 %v4187, 65535
      %v4218 = vshrl.u32 %v4187, 16
      %v4219 = vmul.u32 %v4215, %v4217
      %v4220 = vmul.u32 %v4215, %v4218
      %v4221 = vmul.u32 %v4216, %v4217
      %v4222 = vmul.u32 %v4216, %v4218
      %v4223 = vshll.u32 %v4220, 16
      %v4224 = vshrl.u32 %v4220, 16
      %v4225 = vshll.u32 %v4221, 16
      %v4226 = vshrl.u32 %v4221, 16
      %vm4227 = vc.u32 %v4219, %v4223
      %v4228 = vsel %vm4227, 1, 0
      %v4229 = vadd.s32 %v4219, %v4223
      %v4230 = vadd.s32 %v4222, %v4228
      %vm4231 = vc.u32 %v4229, %v4225
      %v4232 = vsel %vm4231, 1, 0
      %v4233 = vadd.s32 %v4229, %v4225
      %v4234 = vadd.s32 %v4230, %v4232
      %v4235 = vadd.s32 %v4234, %v4224
      %v4236 = vadd.s32 %v4235, %v4226
      %v4237 = vmul.u32 %v4192, %v4183
      %v4238 = vadd.s32 %v4214, %v4233
      %vm4239 = vc.u32 %v4214, %v4233
      %v4240 = vadd.s32 %v4236, 1
      %v4241 = vsel %vm4239, %v4240, %v4236
      %v4242 = vadd.s32 %v4237, %v4241
      %v4243 = vadd.s32 %v4242, 536870912
      %v4244 = vshrl.u32 %v4243, 30
      %v4245 = vshll.u32 %v4244, 30
      %v4246 = vsub.s32 %v4242, %v4245
      %vm4247 = vcmp.lt.s32.totalorder %v4246, 0
      %v4248 = vsub.s32 0, %v4246
      %v4249 = vsel %vm4247, %v4248, %v4246
      %v4250 = vclz %v4249
      %v4251 = vsub.s32 %v4250, 2
      %vm4252 = vcmp.gt.s32.totalorder 0, %v4251
      %v4253 = vsel %vm4252, 0, %v4251
      %v4254 = vsub.s32 32, %v4253
      %v4255 = vshll.u32 %v4246, %v4253
      %v4256 = vshrl.u32 %v4238, %v4254
      %v4257 = vor.u32 %v4255, %v4256
      %v4258 = vsub.s32 4294967266, %v4253
      %v4259 = vadd.s32 %v4258, 127
      %v4260 = vshll.u32 %v4259, 23
      %v4261 = vor.u32 4788187, %v4260
      %v4262 = vand.u32 2147483647, %v4261
      %v4264 = vcvt.s32.f32 %v4257
      %v4265 = vmul.f32 %v4264, %v4262
      %v4266 = vxor.u32 %v4265, 2147483648
      %v4267 = vsel %vm4146, %v4266, %v4265
      %v4268 = vsub.s32 4, %v4244
      %v4269 = vsel %vm4146, %v4268, %v4244
      %v4270 = vsel %vm4145, %v398, %v4267
      %v4271 = vsel %vm4145, 0, %v4269
      %v4272 = vmul.f32 %v4270, %v4270
      %v4273 = vmul.f32 %v4272, -0.001358992
      %v4274 = vadd.f32 %v4273, 0.041655596
      %v4275 = vmul.f32 %v4272, %v4274
      %v4276 = vadd.f32 %v4275, -0.4999988
      %v4277 = vmul.f32 %v4272, %v4276
      %v4278 = vadd.f32 1.0, %v4277
      %v4279 = vmul.f32 %v4270, %v4270
      %v4280 = vmul.f32 %v4279, -0.00019511016
      %v4281 = vadd.f32 %v4280, 0.008332121
      %v4282 = vmul.f32 %v4279, %v4281
      %v4283 = vadd.f32 %v4282, -0.16666654
      %v4284 = vmul.f32 %v4279, %v4283
      %v4285 = vadd.f32 %v4284, 1.0
      %v4286 = vmul.f32 %v4285, %v4270
      %vm4287 = vweird.f32 %v398
      %v4288 = vadd.s32 %v4271, 3
      %v4289 = vand.u32 %v4288, 3
      %vm4290 = vcmp.lt.s32.totalorder %v4289, 2
      %vm4291 = vcmp.eq.s32.totalorder %v4289, 0
      %v4292 = vxor.u32 %v4286, 2147483648
      %v4293 = vsel %vm4291, %v4278, %v4292
      %vm4294 = vcmp.eq.s32.totalorder %v4289, 2
      %v4295 = vxor.u32 %v4278, 2147483648
      %v4296 = vsel %vm4294, %v4295, %v4286
      %v4297 = vsel %vm4290, %v4293, %v4296
      %v4298 = vsel %vm4287, nan, %v4297
      %v4299 = vand.u32 2147483647, %v401
      %vm4300 = vcmp.le.f32.partialorder %v4299, 0.7853982
      %vm4301 = vcmp.lt.s32.totalorder %v401, 0
      %v4302 = vand.u32 %v401, 2139095040
      %v4303 = vshrl.u32 %v4302, 23
      %v4304 = vsub.s32 %v4303, 127
      %v4305 = vand.u32 2147483647, %v401
      %v4306 = vand.u32 %v4305, 8388607
      %v4307 = vor.u32 %v4306, 8388608
      %v4308 = vsub.s32 0, %v4307
      %v4309 = vadd.s32 %v4304, 1
      %vm4310 = vcmp.gt.s32.totalorder %v4309, 0
      %v4311 = vsel %vm4310, %v4309, 0
      %v4312 = vshrl.u32 %v4311, 5
      %v4313 = vand.u32 %v4311, 31
      %v4314 = vsub.s32 32, %v4313
      %v4315 = vshrl.u32 683565275, %v4314
      %v4316 = vshll.u32 683565275, %v4313
      %v4317 = vshrl.u32 2475754826, %v4314
      %v4318 = vor.u32 %v4316, %v4317
      %v4319 = vshll.u32 2475754826, %v4313
      %v4320 = vshrl.u32 2131351028, %v4314
      %v4321 = vor.u32 %v4319, %v4320
      %v4322 = vshll.u32 2131351028, %v4313
      %v4323 = vshrl.u32 2102212464, %v4314
      %v4324 = vor.u32 %v4322, %v4323
      %v4325 = vshll.u32 2102212464, %v4313
      %v4326 = vshrl.u32 920167782, %v4314
      %v4327 = vor.u32 %v4325, %v4326
      %v4328 = vshll.u32 920167782, %v4313
      %v4329 = vshrl.u32 1326507024, %v4314
      %v4330 = vor.u32 %v4328, %v4329
      %vm4331 = vcmp.lt.s32.totalorder %v4312, 1
      %vm4332 = vcmp.lt.s32.totalorder %v4312, 2
      %vm4333 = vcmp.lt.s32.totalorder %v4312, 3
      %vm4334 = vcmp.lt.s32.totalorder %v4312, 4
      %v4335 = vsel %vm4331, %v4315, %v4318
      %v4336 = vsel %vm4334, %v4324, 2102212464
      %v4337 = vsel %vm4333, %v4321, %v4336
      %v4338 = vsel %vm4332, %v4335, %v4337
      %v4339 = vsel %vm4331, %v4318, %v4321
      %v4340 = vsel %vm4334, %v4327, 920167782
      %v4341 = vsel %vm4333, %v4324, %v4340
      %v4342 = vsel %vm4332, %v4339, %v4341
      %v4343 = vsel %vm4331, %v4321, %v4324
      %v4344 = vsel %vm4334, %v4330, 1326507024
      %v4345 = vsel %vm4333, %v4327, %v4344
      %v4346 = vsel %vm4332, %v4343, %v4345
      %v4347 = vshll.u32 %v4307, 8
      %v4348 = vand.u32 %v4347, 65535
      %v4349 = vshrl.u32 %v4347, 16
      %v4350 = vand.u32 %v4346, 65535
      %v4351 = vshrl.u32 %v4346, 16
      %v4352 = vmul.u32 %v4348, %v4350
      %v4353 = vmul.u32 %v4348, %v4351
      %v4354 = vmul.u32 %v4349, %v4350
      %v4355 = vmul.u32 %v4349, %v4351
      %v4356 = vshll.u32 %v4353, 16
      %v4357 = vshrl.u32 %v4353, 16
      %v4358 = vshll.u32 %v4354, 16
      %v4359 = vshrl.u32 %v4354, 16
      %vm4360 = vc.u32 %v4352, %v4356
      %v4361 = vsel %vm4360, 1, 0
      %v4362 = vadd.s32 %v4352, %v4356
      %v4363 = vadd.s32 %v4355, %v4361
      %vm4364 = vc.u32 %v4362, %v4358
      %v4365 = vsel %vm4364, 1, 0
      %v4366 = vadd.s32 %v4362, %v4358
      %v4367 = vadd.s32 %v4363, %v4365
      %v4368 = vadd.s32 %v4367, %v4357
      %v4369 = vadd.s32 %v4368, %v4359
      %v4370 = vand.u32 %v4347, 65535
      %v4371 = vshrl.u32 %v4347, 16
      %v4372 = vand.u32 %v4342, 65535
      %v4373 = vshrl.u32 %v4342, 16
      %v4374 = vmul.u32 %v4370, %v4372
      %v4375 = vmul.u32 %v4370, %v4373
      %v4376 = vmul.u32 %v4371, %v4372
      %v4377 = vmul.u32 %v4371, %v4373
      %v4378 = vshll.u32 %v4375, 16
      %v4379 = vshrl.u32 %v4375, 16
      %v4380 = vshll.u32 %v4376, 16
      %v4381 = vshrl.u32 %v4376, 16
      %vm4382 = vc.u32 %v4374, %v4378
      %v4383 = vsel %vm4382, 1, 0
      %v4384 = vadd.s32 %v4374, %v4378
      %v4385 = vadd.s32 %v4377, %v4383
      %vm4386 = vc.u32 %v4384, %v4380
      %v4387 = vsel %vm4386, 1, 0
      %v4388 = vadd.s32 %v4384, %v4380
      %v4389 = vadd.s32 %v4385, %v4387
      %v4390 = vadd.s32 %v4389, %v4379
      %v4391 = vadd.s32 %v4390, %v4381
      %v4392 = vmul.u32 %v4347, %v4338
      %v4393 = vadd.s32 %v4369, %v4388
      %vm4394 = vc.u32 %v4369, %v4388
      %v4395 = vadd.s32 %v4391, 1
      %v4396 = vsel %vm4394, %v4395, %v4391
      %v4397 = vadd.s32 %v4392, %v4396
      %v4398 = vadd.s32 %v4397, 536870912
      %v4399 = vshrl.u32 %v4398, 30
      %v4400 = vshll.u32 %v4399, 30
      %v4401 = vsub.s32 %v4397, %v4400
      %vm4402 = vcmp.lt.s32.totalorder %v4401, 0
      %v4403 = vsub.s32 0, %v4401
      %v4404 = vsel %vm4402, %v4403, %v4401
      %v4405 = vclz %v4404
      %v4406 = vsub.s32 %v4405, 2
      %vm4407 = vcmp.gt.s32.totalorder 0, %v4406
      %v4408 = vsel %vm4407, 0, %v4406
      %v4409 = vsub.s32 32, %v4408
      %v4410 = vshll.u32 %v4401, %v4408
      %v4411 = vshrl.u32 %v4393, %v4409
      %v4412 = vor.u32 %v4410, %v4411
      %v4413 = vsub.s32 4294967266, %v4408
      %v4414 = vadd.s32 %v4413, 127
      %v4415 = vshll.u32 %v4414, 23
      %v4416 = vor.u32 4788187, %v4415
      %v4417 = vand.u32 2147483647, %v4416
      %v4419 = vcvt.s32.f32 %v4412
      %v4420 = vmul.f32 %v4419, %v4417
      %v4421 = vxor.u32 %v4420, 2147483648
      %v4422 = vsel %vm4301, %v4421, %v4420
      %v4423 = vsub.s32 4, %v4399
      %v4424 = vsel %vm4301, %v4423, %v4399
      %v4425 = vsel %vm4300, %v401, %v4422
      %v4426 = vsel %vm4300, 0, %v4424
      %v4427 = vmul.f32 %v4425, %v4425
      %v4428 = vmul.f32 %v4427, -0.001358992
      %v4429 = vadd.f32 %v4428, 0.041655596
      %v4430 = vmul.f32 %v4427, %v4429
      %v4431 = vadd.f32 %v4430, -0.4999988
      %v4432 = vmul.f32 %v4427, %v4431
      %v4433 = vadd.f32 1.0, %v4432
      %v4434 = vmul.f32 %v4425, %v4425
      %v4435 = vmul.f32 %v4434, -0.00019511016
      %v4436 = vadd.f32 %v4435, 0.008332121
      %v4437 = vmul.f32 %v4434, %v4436
      %v4438 = vadd.f32 %v4437, -0.16666654
      %v4439 = vmul.f32 %v4434, %v4438
      %v4440 = vadd.f32 %v4439, 1.0
      %v4441 = vmul.f32 %v4440, %v4425
      %vm4442 = vweird.f32 %v401
      %v4443 = vadd.s32 %v4426, 3
      %v4444 = vand.u32 %v4443, 3
      %vm4445 = vcmp.lt.s32.totalorder %v4444, 2
      %vm4446 = vcmp.eq.s32.totalorder %v4444, 0
      %v4447 = vxor.u32 %v4441, 2147483648
      %v4448 = vsel %vm4446, %v4433, %v4447
      %vm4449 = vcmp.eq.s32.totalorder %v4444, 2
      %v4450 = vxor.u32 %v4433, 2147483648
      %v4451 = vsel %vm4449, %v4450, %v4441
      %v4452 = vsel %vm4445, %v4448, %v4451
      %v4453 = vsel %vm4442, nan, %v4452
      %v4454 = vand.u32 2147483647, %v404
      %vm4455 = vcmp.le.f32.partialorder %v4454, 0.7853982
      %vm4456 = vcmp.lt.s32.totalorder %v404, 0
      %v4457 = vand.u32 %v404, 2139095040
      %v4458 = vshrl.u32 %v4457, 23
      %v4459 = vsub.s32 %v4458, 127
      %v4460 = vand.u32 2147483647, %v404
      %v4461 = vand.u32 %v4460, 8388607
      %v4462 = vor.u32 %v4461, 8388608
      %v4463 = vsub.s32 0, %v4462
      %v4464 = vadd.s32 %v4459, 1
      %vm4465 = vcmp.gt.s32.totalorder %v4464, 0
      %v4466 = vsel %vm4465, %v4464, 0
      %v4467 = vshrl.u32 %v4466, 5
      %v4468 = vand.u32 %v4466, 31
      %v4469 = vsub.s32 32, %v4468
      %v4470 = vshrl.u32 683565275, %v4469
      %v4471 = vshll.u32 683565275, %v4468
      %v4472 = vshrl.u32 2475754826, %v4469
      %v4473 = vor.u32 %v4471, %v4472
      %v4474 = vshll.u32 2475754826, %v4468
      %v4475 = vshrl.u32 2131351028, %v4469
      %v4476 = vor.u32 %v4474, %v4475
      %v4477 = vshll.u32 2131351028, %v4468
      %v4478 = vshrl.u32 2102212464, %v4469
      %v4479 = vor.u32 %v4477, %v4478
      %v4480 = vshll.u32 2102212464, %v4468
      %v4481 = vshrl.u32 920167782, %v4469
      %v4482 = vor.u32 %v4480, %v4481
      %v4483 = vshll.u32 920167782, %v4468
      %v4484 = vshrl.u32 1326507024, %v4469
      %v4485 = vor.u32 %v4483, %v4484
      %vm4486 = vcmp.lt.s32.totalorder %v4467, 1
      %vm4487 = vcmp.lt.s32.totalorder %v4467, 2
      %vm4488 = vcmp.lt.s32.totalorder %v4467, 3
      %vm4489 = vcmp.lt.s32.totalorder %v4467, 4
      %v4490 = vsel %vm4486, %v4470, %v4473
      %v4491 = vsel %vm4489, %v4479, 2102212464
      %v4492 = vsel %vm4488, %v4476, %v4491
      %v4493 = vsel %vm4487, %v4490, %v4492
      %v4494 = vsel %vm4486, %v4473, %v4476
      %v4495 = vsel %vm4489, %v4482, 920167782
      %v4496 = vsel %vm4488, %v4479, %v4495
      %v4497 = vsel %vm4487, %v4494, %v4496
      %v4498 = vsel %vm4486, %v4476, %v4479
      %v4499 = vsel %vm4489, %v4485, 1326507024
      %v4500 = vsel %vm4488, %v4482, %v4499
      %v4501 = vsel %vm4487, %v4498, %v4500
      %v4502 = vshll.u32 %v4462, 8
      %v4503 = vand.u32 %v4502, 65535
      %v4504 = vshrl.u32 %v4502, 16
      %v4505 = vand.u32 %v4501, 65535
      %v4506 = vshrl.u32 %v4501, 16
      %v4507 = vmul.u32 %v4503, %v4505
      %v4508 = vmul.u32 %v4503, %v4506
      %v4509 = vmul.u32 %v4504, %v4505
      %v4510 = vmul.u32 %v4504, %v4506
      %v4511 = vshll.u32 %v4508, 16
      %v4512 = vshrl.u32 %v4508, 16
      %v4513 = vshll.u32 %v4509, 16
      %v4514 = vshrl.u32 %v4509, 16
      %vm4515 = vc.u32 %v4507, %v4511
      %v4516 = vsel %vm4515, 1, 0
      %v4517 = vadd.s32 %v4507, %v4511
      %v4518 = vadd.s32 %v4510, %v4516
      %vm4519 = vc.u32 %v4517, %v4513
      %v4520 = vsel %vm4519, 1, 0
      %v4521 = vadd.s32 %v4517, %v4513
      %v4522 = vadd.s32 %v4518, %v4520
      %v4523 = vadd.s32 %v4522, %v4512
      %v4524 = vadd.s32 %v4523, %v4514
      %v4525 = vand.u32 %v4502, 65535
      %v4526 = vshrl.u32 %v4502, 16
      %v4527 = vand.u32 %v4497, 65535
      %v4528 = vshrl.u32 %v4497, 16
      %v4529 = vmul.u32 %v4525, %v4527
      %v4530 = vmul.u32 %v4525, %v4528
      %v4531 = vmul.u32 %v4526, %v4527
      %v4532 = vmul.u32 %v4526, %v4528
      %v4533 = vshll.u32 %v4530, 16
      %v4534 = vshrl.u32 %v4530, 16
      %v4535 = vshll.u32 %v4531, 16
      %v4536 = vshrl.u32 %v4531, 16
      %vm4537 = vc.u32 %v4529, %v4533
      %v4538 = vsel %vm4537, 1, 0
      %v4539 = vadd.s32 %v4529, %v4533
      %v4540 = vadd.s32 %v4532, %v4538
      %vm4541 = vc.u32 %v4539, %v4535
      %v4542 = vsel %vm4541, 1, 0
      %v4543 = vadd.s32 %v4539, %v4535
      %v4544 = vadd.s32 %v4540, %v4542
      %v4545 = vadd.s32 %v4544, %v4534
      %v4546 = vadd.s32 %v4545, %v4536
      %v4547 = vmul.u32 %v4502, %v4493
      %v4548 = vadd.s32 %v4524, %v4543
      %vm4549 = vc.u32 %v4524, %v4543
      %v4550 = vadd.s32 %v4546, 1
      %v4551 = vsel %vm4549, %v4550, %v4546
      %v4552 = vadd.s32 %v4547, %v4551
      %v4553 = vadd.s32 %v4552, 536870912
      %v4554 = vshrl.u32 %v4553, 30
      %v4555 = vshll.u32 %v4554, 30
      %v4556 = vsub.s32 %v4552, %v4555
      %vm4557 = vcmp.lt.s32.totalorder %v4556, 0
      %v4558 = vsub.s32 0, %v4556
      %v4559 = vsel %vm4557, %v4558, %v4556
      %v4560 = vclz %v4559
      %v4561 = vsub.s32 %v4560, 2
      %vm4562 = vcmp.gt.s32.totalorder 0, %v4561
      %v4563 = vsel %vm4562, 0, %v4561
      %v4564 = vsub.s32 32, %v4563
      %v4565 = vshll.u32 %v4556, %v4563
      %v4566 = vshrl.u32 %v4548, %v4564
      %v4567 = vor.u32 %v4565, %v4566
      %v4568 = vsub.s32 4294967266, %v4563
      %v4569 = vadd.s32 %v4568, 127
      %v4570 = vshll.u32 %v4569, 23
      %v4571 = vor.u32 4788187, %v4570
      %v4572 = vand.u32 2147483647, %v4571
      %v4574 = vcvt.s32.f32 %v4567
      %v4575 = vmul.f32 %v4574, %v4572
      %v4576 = vxor.u32 %v4575, 2147483648
      %v4577 = vsel %vm4456, %v4576, %v4575
      %v4578 = vsub.s32 4, %v4554
      %v4579 = vsel %vm4456, %v4578, %v4554
      %v4580 = vsel %vm4455, %v404, %v4577
      %v4581 = vsel %vm4455, 0, %v4579
      %v4582 = vmul.f32 %v4580, %v4580
      %v4583 = vmul.f32 %v4582, -0.001358992
      %v4584 = vadd.f32 %v4583, 0.041655596
      %v4585 = vmul.f32 %v4582, %v4584
      %v4586 = vadd.f32 %v4585, -0.4999988
      %v4587 = vmul.f32 %v4582, %v4586
      %v4588 = vadd.f32 1.0, %v4587
      %v4589 = vmul.f32 %v4580, %v4580
      %v4590 = vmul.f32 %v4589, -0.00019511016
      %v4591 = vadd.f32 %v4590, 0.008332121
      %v4592 = vmul.f32 %v4589, %v4591
      %v4593 = vadd.f32 %v4592, -0.16666654
      %v4594 = vmul.f32 %v4589, %v4593
      %v4595 = vadd.f32 %v4594, 1.0
      %v4596 = vmul.f32 %v4595, %v4580
      %vm4597 = vweird.f32 %v404
      %v4598 = vadd.s32 %v4581, 3
      %v4599 = vand.u32 %v4598, 3
      %vm4600 = vcmp.lt.s32.totalorder %v4599, 2
      %vm4601 = vcmp.eq.s32.totalorder %v4599, 0
      %v4602 = vxor.u32 %v4596, 2147483648
      %v4603 = vsel %vm4601, %v4588, %v4602
      %vm4604 = vcmp.eq.s32.totalorder %v4599, 2
      %v4605 = vxor.u32 %v4588, 2147483648
      %v4606 = vsel %vm4604, %v4605, %v4596
      %v4607 = vsel %vm4600, %v4603, %v4606
      %v4608 = vsel %vm4597, nan, %v4607
      %v4609 = vand.u32 2147483647, %v407
      %vm4610 = vcmp.le.f32.partialorder %v4609, 0.7853982
      %vm4611 = vcmp.lt.s32.totalorder %v407, 0
      %v4612 = vand.u32 %v407, 2139095040
      %v4613 = vshrl.u32 %v4612, 23
      %v4614 = vsub.s32 %v4613, 127
      %v4615 = vand.u32 2147483647, %v407
      %v4616 = vand.u32 %v4615, 8388607
      %v4617 = vor.u32 %v4616, 8388608
      %v4618 = vsub.s32 0, %v4617
      %v4619 = vadd.s32 %v4614, 1
      %vm4620 = vcmp.gt.s32.totalorder %v4619, 0
      %v4621 = vsel %vm4620, %v4619, 0
      %v4622 = vshrl.u32 %v4621, 5
      %v4623 = vand.u32 %v4621, 31
      %v4624 = vsub.s32 32, %v4623
      %v4625 = vshrl.u32 683565275, %v4624
      %v4626 = vshll.u32 683565275, %v4623
      %v4627 = vshrl.u32 2475754826, %v4624
      %v4628 = vor.u32 %v4626, %v4627
      %v4629 = vshll.u32 2475754826, %v4623
      %v4630 = vshrl.u32 2131351028, %v4624
      %v4631 = vor.u32 %v4629, %v4630
      %v4632 = vshll.u32 2131351028, %v4623
      %v4633 = vshrl.u32 2102212464, %v4624
      %v4634 = vor.u32 %v4632, %v4633
      %v4635 = vshll.u32 2102212464, %v4623
      %v4636 = vshrl.u32 920167782, %v4624
      %v4637 = vor.u32 %v4635, %v4636
      %v4638 = vshll.u32 920167782, %v4623
      %v4639 = vshrl.u32 1326507024, %v4624
      %v4640 = vor.u32 %v4638, %v4639
      %vm4641 = vcmp.lt.s32.totalorder %v4622, 1
      %vm4642 = vcmp.lt.s32.totalorder %v4622, 2
      %vm4643 = vcmp.lt.s32.totalorder %v4622, 3
      %vm4644 = vcmp.lt.s32.totalorder %v4622, 4
      %v4645 = vsel %vm4641, %v4625, %v4628
      %v4646 = vsel %vm4644, %v4634, 2102212464
      %v4647 = vsel %vm4643, %v4631, %v4646
      %v4648 = vsel %vm4642, %v4645, %v4647
      %v4649 = vsel %vm4641, %v4628, %v4631
      %v4650 = vsel %vm4644, %v4637, 920167782
      %v4651 = vsel %vm4643, %v4634, %v4650
      %v4652 = vsel %vm4642, %v4649, %v4651
      %v4653 = vsel %vm4641, %v4631, %v4634
      %v4654 = vsel %vm4644, %v4640, 1326507024
      %v4655 = vsel %vm4643, %v4637, %v4654
      %v4656 = vsel %vm4642, %v4653, %v4655
      %v4657 = vshll.u32 %v4617, 8
      %v4658 = vand.u32 %v4657, 65535
      %v4659 = vshrl.u32 %v4657, 16
      %v4660 = vand.u32 %v4656, 65535
      %v4661 = vshrl.u32 %v4656, 16
      %v4662 = vmul.u32 %v4658, %v4660
      %v4663 = vmul.u32 %v4658, %v4661
      %v4664 = vmul.u32 %v4659, %v4660
      %v4665 = vmul.u32 %v4659, %v4661
      %v4666 = vshll.u32 %v4663, 16
      %v4667 = vshrl.u32 %v4663, 16
      %v4668 = vshll.u32 %v4664, 16
      %v4669 = vshrl.u32 %v4664, 16
      %vm4670 = vc.u32 %v4662, %v4666
      %v4671 = vsel %vm4670, 1, 0
      %v4672 = vadd.s32 %v4662, %v4666
      %v4673 = vadd.s32 %v4665, %v4671
      %vm4674 = vc.u32 %v4672, %v4668
      %v4675 = vsel %vm4674, 1, 0
      %v4676 = vadd.s32 %v4672, %v4668
      %v4677 = vadd.s32 %v4673, %v4675
      %v4678 = vadd.s32 %v4677, %v4667
      %v4679 = vadd.s32 %v4678, %v4669
      %v4680 = vand.u32 %v4657, 65535
      %v4681 = vshrl.u32 %v4657, 16
      %v4682 = vand.u32 %v4652, 65535
      %v4683 = vshrl.u32 %v4652, 16
      %v4684 = vmul.u32 %v4680, %v4682
      %v4685 = vmul.u32 %v4680, %v4683
      %v4686 = vmul.u32 %v4681, %v4682
      %v4687 = vmul.u32 %v4681, %v4683
      %v4688 = vshll.u32 %v4685, 16
      %v4689 = vshrl.u32 %v4685, 16
      %v4690 = vshll.u32 %v4686, 16
      %v4691 = vshrl.u32 %v4686, 16
      %vm4692 = vc.u32 %v4684, %v4688
      %v4693 = vsel %vm4692, 1, 0
      %v4694 = vadd.s32 %v4684, %v4688
      %v4695 = vadd.s32 %v4687, %v4693
      %vm4696 = vc.u32 %v4694, %v4690
      %v4697 = vsel %vm4696, 1, 0
      %v4698 = vadd.s32 %v4694, %v4690
      %v4699 = vadd.s32 %v4695, %v4697
      %v4700 = vadd.s32 %v4699, %v4689
      %v4701 = vadd.s32 %v4700, %v4691
      %v4702 = vmul.u32 %v4657, %v4648
      %v4703 = vadd.s32 %v4679, %v4698
      %vm4704 = vc.u32 %v4679, %v4698
      %v4705 = vadd.s32 %v4701, 1
      %v4706 = vsel %vm4704, %v4705, %v4701
      %v4707 = vadd.s32 %v4702, %v4706
      %v4708 = vadd.s32 %v4707, 536870912
      %v4709 = vshrl.u32 %v4708, 30
      %v4710 = vshll.u32 %v4709, 30
      %v4711 = vsub.s32 %v4707, %v4710
      %vm4712 = vcmp.lt.s32.totalorder %v4711, 0
      %v4713 = vsub.s32 0, %v4711
      %v4714 = vsel %vm4712, %v4713, %v4711
      %v4715 = vclz %v4714
      %v4716 = vsub.s32 %v4715, 2
      %vm4717 = vcmp.gt.s32.totalorder 0, %v4716
      %v4718 = vsel %vm4717, 0, %v4716
      %v4719 = vsub.s32 32, %v4718
      %v4720 = vshll.u32 %v4711, %v4718
      %v4721 = vshrl.u32 %v4703, %v4719
      %v4722 = vor.u32 %v4720, %v4721
      %v4723 = vsub.s32 4294967266, %v4718
      %v4724 = vadd.s32 %v4723, 127
      %v4725 = vshll.u32 %v4724, 23
      %v4726 = vor.u32 4788187, %v4725
      %v4727 = vand.u32 2147483647, %v4726
      %v4729 = vcvt.s32.f32 %v4722
      %v4730 = vmul.f32 %v4729, %v4727
      %v4731 = vxor.u32 %v4730, 2147483648
      %v4732 = vsel %vm4611, %v4731, %v4730
      %v4733 = vsub.s32 4, %v4709
      %v4734 = vsel %vm4611, %v4733, %v4709
      %v4735 = vsel %vm4610, %v407, %v4732
      %v4736 = vsel %vm4610, 0, %v4734
      %v4737 = vmul.f32 %v4735, %v4735
      %v4738 = vmul.f32 %v4737, -0.001358992
      %v4739 = vadd.f32 %v4738, 0.041655596
      %v4740 = vmul.f32 %v4737, %v4739
      %v4741 = vadd.f32 %v4740, -0.4999988
      %v4742 = vmul.f32 %v4737, %v4741
      %v4743 = vadd.f32 1.0, %v4742
      %v4744 = vmul.f32 %v4735, %v4735
      %v4745 = vmul.f32 %v4744, -0.00019511016
      %v4746 = vadd.f32 %v4745, 0.008332121
      %v4747 = vmul.f32 %v4744, %v4746
      %v4748 = vadd.f32 %v4747, -0.16666654
      %v4749 = vmul.f32 %v4744, %v4748
      %v4750 = vadd.f32 %v4749, 1.0
      %v4751 = vmul.f32 %v4750, %v4735
      %vm4752 = vweird.f32 %v407
      %v4753 = vadd.s32 %v4736, 3
      %v4754 = vand.u32 %v4753, 3
      %vm4755 = vcmp.lt.s32.totalorder %v4754, 2
      %vm4756 = vcmp.eq.s32.totalorder %v4754, 0
      %v4757 = vxor.u32 %v4751, 2147483648
      %v4758 = vsel %vm4756, %v4743, %v4757
      %vm4759 = vcmp.eq.s32.totalorder %v4754, 2
      %v4760 = vxor.u32 %v4743, 2147483648
      %v4761 = vsel %vm4759, %v4760, %v4751
      %v4762 = vsel %vm4755, %v4758, %v4761
      %v4763 = vsel %vm4752, nan, %v4762
      %v4764 = vand.u32 2147483647, %v410
      %vm4765 = vcmp.le.f32.partialorder %v4764, 0.7853982
      %vm4766 = vcmp.lt.s32.totalorder %v410, 0
      %v4767 = vand.u32 %v410, 2139095040
      %v4768 = vshrl.u32 %v4767, 23
      %v4769 = vsub.s32 %v4768, 127
      %v4770 = vand.u32 2147483647, %v410
      %v4771 = vand.u32 %v4770, 8388607
      %v4772 = vor.u32 %v4771, 8388608
      %v4773 = vsub.s32 0, %v4772
      %v4774 = vadd.s32 %v4769, 1
      %vm4775 = vcmp.gt.s32.totalorder %v4774, 0
      %v4776 = vsel %vm4775, %v4774, 0
      %v4777 = vshrl.u32 %v4776, 5
      %v4778 = vand.u32 %v4776, 31
      %v4779 = vsub.s32 32, %v4778
      %v4780 = vshrl.u32 683565275, %v4779
      %v4781 = vshll.u32 683565275, %v4778
      %v4782 = vshrl.u32 2475754826, %v4779
      %v4783 = vor.u32 %v4781, %v4782
      %v4784 = vshll.u32 2475754826, %v4778
      %v4785 = vshrl.u32 2131351028, %v4779
      %v4786 = vor.u32 %v4784, %v4785
      %v4787 = vshll.u32 2131351028, %v4778
      %v4788 = vshrl.u32 2102212464, %v4779
      %v4789 = vor.u32 %v4787, %v4788
      %v4790 = vshll.u32 2102212464, %v4778
      %v4791 = vshrl.u32 920167782, %v4779
      %v4792 = vor.u32 %v4790, %v4791
      %v4793 = vshll.u32 920167782, %v4778
      %v4794 = vshrl.u32 1326507024, %v4779
      %v4795 = vor.u32 %v4793, %v4794
      %vm4796 = vcmp.lt.s32.totalorder %v4777, 1
      %vm4797 = vcmp.lt.s32.totalorder %v4777, 2
      %vm4798 = vcmp.lt.s32.totalorder %v4777, 3
      %vm4799 = vcmp.lt.s32.totalorder %v4777, 4
      %v4800 = vsel %vm4796, %v4780, %v4783
      %v4801 = vsel %vm4799, %v4789, 2102212464
      %v4802 = vsel %vm4798, %v4786, %v4801
      %v4803 = vsel %vm4797, %v4800, %v4802
      %v4804 = vsel %vm4796, %v4783, %v4786
      %v4805 = vsel %vm4799, %v4792, 920167782
      %v4806 = vsel %vm4798, %v4789, %v4805
      %v4807 = vsel %vm4797, %v4804, %v4806
      %v4808 = vsel %vm4796, %v4786, %v4789
      %v4809 = vsel %vm4799, %v4795, 1326507024
      %v4810 = vsel %vm4798, %v4792, %v4809
      %v4811 = vsel %vm4797, %v4808, %v4810
      %v4812 = vshll.u32 %v4772, 8
      %v4813 = vand.u32 %v4812, 65535
      %v4814 = vshrl.u32 %v4812, 16
      %v4815 = vand.u32 %v4811, 65535
      %v4816 = vshrl.u32 %v4811, 16
      %v4817 = vmul.u32 %v4813, %v4815
      %v4818 = vmul.u32 %v4813, %v4816
      %v4819 = vmul.u32 %v4814, %v4815
      %v4820 = vmul.u32 %v4814, %v4816
      %v4821 = vshll.u32 %v4818, 16
      %v4822 = vshrl.u32 %v4818, 16
      %v4823 = vshll.u32 %v4819, 16
      %v4824 = vshrl.u32 %v4819, 16
      %vm4825 = vc.u32 %v4817, %v4821
      %v4826 = vsel %vm4825, 1, 0
      %v4827 = vadd.s32 %v4817, %v4821
      %v4828 = vadd.s32 %v4820, %v4826
      %vm4829 = vc.u32 %v4827, %v4823
      %v4830 = vsel %vm4829, 1, 0
      %v4831 = vadd.s32 %v4827, %v4823
      %v4832 = vadd.s32 %v4828, %v4830
      %v4833 = vadd.s32 %v4832, %v4822
      %v4834 = vadd.s32 %v4833, %v4824
      %v4835 = vand.u32 %v4812, 65535
      %v4836 = vshrl.u32 %v4812, 16
      %v4837 = vand.u32 %v4807, 65535
      %v4838 = vshrl.u32 %v4807, 16
      %v4839 = vmul.u32 %v4835, %v4837
      %v4840 = vmul.u32 %v4835, %v4838
      %v4841 = vmul.u32 %v4836, %v4837
      %v4842 = vmul.u32 %v4836, %v4838
      %v4843 = vshll.u32 %v4840, 16
      %v4844 = vshrl.u32 %v4840, 16
      %v4845 = vshll.u32 %v4841, 16
      %v4846 = vshrl.u32 %v4841, 16
      %vm4847 = vc.u32 %v4839, %v4843
      %v4848 = vsel %vm4847, 1, 0
      %v4849 = vadd.s32 %v4839, %v4843
      %v4850 = vadd.s32 %v4842, %v4848
      %vm4851 = vc.u32 %v4849, %v4845
      %v4852 = vsel %vm4851, 1, 0
      %v4853 = vadd.s32 %v4849, %v4845
      %v4854 = vadd.s32 %v4850, %v4852
      %v4855 = vadd.s32 %v4854, %v4844
      %v4856 = vadd.s32 %v4855, %v4846
      %v4857 = vmul.u32 %v4812, %v4803
      %v4858 = vadd.s32 %v4834, %v4853
      %vm4859 = vc.u32 %v4834, %v4853
      %v4860 = vadd.s32 %v4856, 1
      %v4861 = vsel %vm4859, %v4860, %v4856
      %v4862 = vadd.s32 %v4857, %v4861
      %v4863 = vadd.s32 %v4862, 536870912
      %v4864 = vshrl.u32 %v4863, 30
      %v4865 = vshll.u32 %v4864, 30
      %v4866 = vsub.s32 %v4862, %v4865
      %vm4867 = vcmp.lt.s32.totalorder %v4866, 0
      %v4868 = vsub.s32 0, %v4866
      %v4869 = vsel %vm4867, %v4868, %v4866
      %v4870 = vclz %v4869
      %v4871 = vsub.s32 %v4870, 2
      %vm4872 = vcmp.gt.s32.totalorder 0, %v4871
      %v4873 = vsel %vm4872, 0, %v4871
      %v4874 = vsub.s32 32, %v4873
      %v4875 = vshll.u32 %v4866, %v4873
      %v4876 = vshrl.u32 %v4858, %v4874
      %v4877 = vor.u32 %v4875, %v4876
      %v4878 = vsub.s32 4294967266, %v4873
      %v4879 = vadd.s32 %v4878, 127
      %v4880 = vshll.u32 %v4879, 23
      %v4881 = vor.u32 4788187, %v4880
      %v4882 = vand.u32 2147483647, %v4881
      %v4884 = vcvt.s32.f32 %v4877
      %v4885 = vmul.f32 %v4884, %v4882
      %v4886 = vxor.u32 %v4885, 2147483648
      %v4887 = vsel %vm4766, %v4886, %v4885
      %v4888 = vsub.s32 4, %v4864
      %v4889 = vsel %vm4766, %v4888, %v4864
      %v4890 = vsel %vm4765, %v410, %v4887
      %v4891 = vsel %vm4765, 0, %v4889
      %v4892 = vmul.f32 %v4890, %v4890
      %v4893 = vmul.f32 %v4892, -0.001358992
      %v4894 = vadd.f32 %v4893, 0.041655596
      %v4895 = vmul.f32 %v4892, %v4894
      %v4896 = vadd.f32 %v4895, -0.4999988
      %v4897 = vmul.f32 %v4892, %v4896
      %v4898 = vadd.f32 1.0, %v4897
      %v4899 = vmul.f32 %v4890, %v4890
      %v4900 = vmul.f32 %v4899, -0.00019511016
      %v4901 = vadd.f32 %v4900, 0.008332121
      %v4902 = vmul.f32 %v4899, %v4901
      %v4903 = vadd.f32 %v4902, -0.16666654
      %v4904 = vmul.f32 %v4899, %v4903
      %v4905 = vadd.f32 %v4904, 1.0
      %v4906 = vmul.f32 %v4905, %v4890
      %vm4907 = vweird.f32 %v410
      %v4908 = vadd.s32 %v4891, 3
      %v4909 = vand.u32 %v4908, 3
      %vm4910 = vcmp.lt.s32.totalorder %v4909, 2
      %vm4911 = vcmp.eq.s32.totalorder %v4909, 0
      %v4912 = vxor.u32 %v4906, 2147483648
      %v4913 = vsel %vm4911, %v4898, %v4912
      %vm4914 = vcmp.eq.s32.totalorder %v4909, 2
      %v4915 = vxor.u32 %v4898, 2147483648
      %v4916 = vsel %vm4914, %v4915, %v4906
      %v4917 = vsel %vm4910, %v4913, %v4916
      %v4918 = vsel %vm4907, nan, %v4917
      %v4919 = vand.u32 2147483647, %v413
      %vm4920 = vcmp.le.f32.partialorder %v4919, 0.7853982
      %vm4921 = vcmp.lt.s32.totalorder %v413, 0
      %v4922 = vand.u32 %v413, 2139095040
      %v4923 = vshrl.u32 %v4922, 23
      %v4924 = vsub.s32 %v4923, 127
      %v4925 = vand.u32 2147483647, %v413
      %v4926 = vand.u32 %v4925, 8388607
      %v4927 = vor.u32 %v4926, 8388608
      %v4928 = vsub.s32 0, %v4927
      %v4929 = vadd.s32 %v4924, 1
      %vm4930 = vcmp.gt.s32.totalorder %v4929, 0
      %v4931 = vsel %vm4930, %v4929, 0
      %v4932 = vshrl.u32 %v4931, 5
      %v4933 = vand.u32 %v4931, 31
      %v4934 = vsub.s32 32, %v4933
      %v4935 = vshrl.u32 683565275, %v4934
      %v4936 = vshll.u32 683565275, %v4933
      %v4937 = vshrl.u32 2475754826, %v4934
      %v4938 = vor.u32 %v4936, %v4937
      %v4939 = vshll.u32 2475754826, %v4933
      %v4940 = vshrl.u32 2131351028, %v4934
      %v4941 = vor.u32 %v4939, %v4940
      %v4942 = vshll.u32 2131351028, %v4933
      %v4943 = vshrl.u32 2102212464, %v4934
      %v4944 = vor.u32 %v4942, %v4943
      %v4945 = vshll.u32 2102212464, %v4933
      %v4946 = vshrl.u32 920167782, %v4934
      %v4947 = vor.u32 %v4945, %v4946
      %v4948 = vshll.u32 920167782, %v4933
      %v4949 = vshrl.u32 1326507024, %v4934
      %v4950 = vor.u32 %v4948, %v4949
      %vm4951 = vcmp.lt.s32.totalorder %v4932, 1
      %vm4952 = vcmp.lt.s32.totalorder %v4932, 2
      %vm4953 = vcmp.lt.s32.totalorder %v4932, 3
      %vm4954 = vcmp.lt.s32.totalorder %v4932, 4
      %v4955 = vsel %vm4951, %v4935, %v4938
      %v4956 = vsel %vm4954, %v4944, 2102212464
      %v4957 = vsel %vm4953, %v4941, %v4956
      %v4958 = vsel %vm4952, %v4955, %v4957
      %v4959 = vsel %vm4951, %v4938, %v4941
      %v4960 = vsel %vm4954, %v4947, 920167782
      %v4961 = vsel %vm4953, %v4944, %v4960
      %v4962 = vsel %vm4952, %v4959, %v4961
      %v4963 = vsel %vm4951, %v4941, %v4944
      %v4964 = vsel %vm4954, %v4950, 1326507024
      %v4965 = vsel %vm4953, %v4947, %v4964
      %v4966 = vsel %vm4952, %v4963, %v4965
      %v4967 = vshll.u32 %v4927, 8
      %v4968 = vand.u32 %v4967, 65535
      %v4969 = vshrl.u32 %v4967, 16
      %v4970 = vand.u32 %v4966, 65535
      %v4971 = vshrl.u32 %v4966, 16
      %v4972 = vmul.u32 %v4968, %v4970
      %v4973 = vmul.u32 %v4968, %v4971
      %v4974 = vmul.u32 %v4969, %v4970
      %v4975 = vmul.u32 %v4969, %v4971
      %v4976 = vshll.u32 %v4973, 16
      %v4977 = vshrl.u32 %v4973, 16
      %v4978 = vshll.u32 %v4974, 16
      %v4979 = vshrl.u32 %v4974, 16
      %vm4980 = vc.u32 %v4972, %v4976
      %v4981 = vsel %vm4980, 1, 0
      %v4982 = vadd.s32 %v4972, %v4976
      %v4983 = vadd.s32 %v4975, %v4981
      %vm4984 = vc.u32 %v4982, %v4978
      %v4985 = vsel %vm4984, 1, 0
      %v4986 = vadd.s32 %v4982, %v4978
      %v4987 = vadd.s32 %v4983, %v4985
      %v4988 = vadd.s32 %v4987, %v4977
      %v4989 = vadd.s32 %v4988, %v4979
      %v4990 = vand.u32 %v4967, 65535
      %v4991 = vshrl.u32 %v4967, 16
      %v4992 = vand.u32 %v4962, 65535
      %v4993 = vshrl.u32 %v4962, 16
      %v4994 = vmul.u32 %v4990, %v4992
      %v4995 = vmul.u32 %v4990, %v4993
      %v4996 = vmul.u32 %v4991, %v4992
      %v4997 = vmul.u32 %v4991, %v4993
      %v4998 = vshll.u32 %v4995, 16
      %v4999 = vshrl.u32 %v4995, 16
      %v5000 = vshll.u32 %v4996, 16
      %v5001 = vshrl.u32 %v4996, 16
      %vm5002 = vc.u32 %v4994, %v4998
      %v5003 = vsel %vm5002, 1, 0
      %v5004 = vadd.s32 %v4994, %v4998
      %v5005 = vadd.s32 %v4997, %v5003
      %vm5006 = vc.u32 %v5004, %v5000
      %v5007 = vsel %vm5006, 1, 0
      %v5008 = vadd.s32 %v5004, %v5000
      %v5009 = vadd.s32 %v5005, %v5007
      %v5010 = vadd.s32 %v5009, %v4999
      %v5011 = vadd.s32 %v5010, %v5001
      %v5012 = vmul.u32 %v4967, %v4958
      %v5013 = vadd.s32 %v4989, %v5008
      %vm5014 = vc.u32 %v4989, %v5008
      %v5015 = vadd.s32 %v5011, 1
      %v5016 = vsel %vm5014, %v5015, %v5011
      %v5017 = vadd.s32 %v5012, %v5016
      %v5018 = vadd.s32 %v5017, 536870912
      %v5019 = vshrl.u32 %v5018, 30
      %v5020 = vshll.u32 %v5019, 30
      %v5021 = vsub.s32 %v5017, %v5020
      %vm5022 = vcmp.lt.s32.totalorder %v5021, 0
      %v5023 = vsub.s32 0, %v5021
      %v5024 = vsel %vm5022, %v5023, %v5021
      %v5025 = vclz %v5024
      %v5026 = vsub.s32 %v5025, 2
      %vm5027 = vcmp.gt.s32.totalorder 0, %v5026
      %v5028 = vsel %vm5027, 0, %v5026
      %v5029 = vsub.s32 32, %v5028
      %v5030 = vshll.u32 %v5021, %v5028
      %v5031 = vshrl.u32 %v5013, %v5029
      %v5032 = vor.u32 %v5030, %v5031
      %v5033 = vsub.s32 4294967266, %v5028
      %v5034 = vadd.s32 %v5033, 127
      %v5035 = vshll.u32 %v5034, 23
      %v5036 = vor.u32 4788187, %v5035
      %v5037 = vand.u32 2147483647, %v5036
      %v5039 = vcvt.s32.f32 %v5032
      %v5040 = vmul.f32 %v5039, %v5037
      %v5041 = vxor.u32 %v5040, 2147483648
      %v5042 = vsel %vm4921, %v5041, %v5040
      %v5043 = vsub.s32 4, %v5019
      %v5044 = vsel %vm4921, %v5043, %v5019
      %v5045 = vsel %vm4920, %v413, %v5042
      %v5046 = vsel %vm4920, 0, %v5044
      %v5047 = vmul.f32 %v5045, %v5045
      %v5048 = vmul.f32 %v5047, -0.001358992
      %v5049 = vadd.f32 %v5048, 0.041655596
      %v5050 = vmul.f32 %v5047, %v5049
      %v5051 = vadd.f32 %v5050, -0.4999988
      %v5052 = vmul.f32 %v5047, %v5051
      %v5053 = vadd.f32 1.0, %v5052
      %v5054 = vmul.f32 %v5045, %v5045
      %v5055 = vmul.f32 %v5054, -0.00019511016
      %v5056 = vadd.f32 %v5055, 0.008332121
      %v5057 = vmul.f32 %v5054, %v5056
      %v5058 = vadd.f32 %v5057, -0.16666654
      %v5059 = vmul.f32 %v5054, %v5058
      %v5060 = vadd.f32 %v5059, 1.0
      %v5061 = vmul.f32 %v5060, %v5045
      %vm5062 = vweird.f32 %v413
      %v5063 = vadd.s32 %v5046, 3
      %v5064 = vand.u32 %v5063, 3
      %vm5065 = vcmp.lt.s32.totalorder %v5064, 2
      %vm5066 = vcmp.eq.s32.totalorder %v5064, 0
      %v5067 = vxor.u32 %v5061, 2147483648
      %v5068 = vsel %vm5066, %v5053, %v5067
      %vm5069 = vcmp.eq.s32.totalorder %v5064, 2
      %v5070 = vxor.u32 %v5053, 2147483648
      %v5071 = vsel %vm5069, %v5070, %v5061
      %v5072 = vsel %vm5065, %v5068, %v5071
      %v5073 = vsel %vm5062, nan, %v5072
      %v5074 = vand.u32 2147483647, %v416
      %vm5075 = vcmp.le.f32.partialorder %v5074, 0.7853982
      %vm5076 = vcmp.lt.s32.totalorder %v416, 0
      %v5077 = vand.u32 %v416, 2139095040
      %v5078 = vshrl.u32 %v5077, 23
      %v5079 = vsub.s32 %v5078, 127
      %v5080 = vand.u32 2147483647, %v416
      %v5081 = vand.u32 %v5080, 8388607
      %v5082 = vor.u32 %v5081, 8388608
      %v5083 = vsub.s32 0, %v5082
      %v5084 = vadd.s32 %v5079, 1
      %vm5085 = vcmp.gt.s32.totalorder %v5084, 0
      %v5086 = vsel %vm5085, %v5084, 0
      %v5087 = vshrl.u32 %v5086, 5
      %v5088 = vand.u32 %v5086, 31
      %v5089 = vsub.s32 32, %v5088
      %v5090 = vshrl.u32 683565275, %v5089
      %v5091 = vshll.u32 683565275, %v5088
      %v5092 = vshrl.u32 2475754826, %v5089
      %v5093 = vor.u32 %v5091, %v5092
      %v5094 = vshll.u32 2475754826, %v5088
      %v5095 = vshrl.u32 2131351028, %v5089
      %v5096 = vor.u32 %v5094, %v5095
      %v5097 = vshll.u32 2131351028, %v5088
      %v5098 = vshrl.u32 2102212464, %v5089
      %v5099 = vor.u32 %v5097, %v5098
      %v5100 = vshll.u32 2102212464, %v5088
      %v5101 = vshrl.u32 920167782, %v5089
      %v5102 = vor.u32 %v5100, %v5101
      %v5103 = vshll.u32 920167782, %v5088
      %v5104 = vshrl.u32 1326507024, %v5089
      %v5105 = vor.u32 %v5103, %v5104
      %vm5106 = vcmp.lt.s32.totalorder %v5087, 1
      %vm5107 = vcmp.lt.s32.totalorder %v5087, 2
      %vm5108 = vcmp.lt.s32.totalorder %v5087, 3
      %vm5109 = vcmp.lt.s32.totalorder %v5087, 4
      %v5110 = vsel %vm5106, %v5090, %v5093
      %v5111 = vsel %vm5109, %v5099, 2102212464
      %v5112 = vsel %vm5108, %v5096, %v5111
      %v5113 = vsel %vm5107, %v5110, %v5112
      %v5114 = vsel %vm5106, %v5093, %v5096
      %v5115 = vsel %vm5109, %v5102, 920167782
      %v5116 = vsel %vm5108, %v5099, %v5115
      %v5117 = vsel %vm5107, %v5114, %v5116
      %v5118 = vsel %vm5106, %v5096, %v5099
      %v5119 = vsel %vm5109, %v5105, 1326507024
      %v5120 = vsel %vm5108, %v5102, %v5119
      %v5121 = vsel %vm5107, %v5118, %v5120
      %v5122 = vshll.u32 %v5082, 8
      %v5123 = vand.u32 %v5122, 65535
      %v5124 = vshrl.u32 %v5122, 16
      %v5125 = vand.u32 %v5121, 65535
      %v5126 = vshrl.u32 %v5121, 16
      %v5127 = vmul.u32 %v5123, %v5125
      %v5128 = vmul.u32 %v5123, %v5126
      %v5129 = vmul.u32 %v5124, %v5125
      %v5130 = vmul.u32 %v5124, %v5126
      %v5131 = vshll.u32 %v5128, 16
      %v5132 = vshrl.u32 %v5128, 16
      %v5133 = vshll.u32 %v5129, 16
      %v5134 = vshrl.u32 %v5129, 16
      %vm5135 = vc.u32 %v5127, %v5131
      %v5136 = vsel %vm5135, 1, 0
      %v5137 = vadd.s32 %v5127, %v5131
      %v5138 = vadd.s32 %v5130, %v5136
      %vm5139 = vc.u32 %v5137, %v5133
      %v5140 = vsel %vm5139, 1, 0
      %v5141 = vadd.s32 %v5137, %v5133
      %v5142 = vadd.s32 %v5138, %v5140
      %v5143 = vadd.s32 %v5142, %v5132
      %v5144 = vadd.s32 %v5143, %v5134
      %v5145 = vand.u32 %v5122, 65535
      %v5146 = vshrl.u32 %v5122, 16
      %v5147 = vand.u32 %v5117, 65535
      %v5148 = vshrl.u32 %v5117, 16
      %v5149 = vmul.u32 %v5145, %v5147
      %v5150 = vmul.u32 %v5145, %v5148
      %v5151 = vmul.u32 %v5146, %v5147
      %v5152 = vmul.u32 %v5146, %v5148
      %v5153 = vshll.u32 %v5150, 16
      %v5154 = vshrl.u32 %v5150, 16
      %v5155 = vshll.u32 %v5151, 16
      %v5156 = vshrl.u32 %v5151, 16
      %vm5157 = vc.u32 %v5149, %v5153
      %v5158 = vsel %vm5157, 1, 0
      %v5159 = vadd.s32 %v5149, %v5153
      %v5160 = vadd.s32 %v5152, %v5158
      %vm5161 = vc.u32 %v5159, %v5155
      %v5162 = vsel %vm5161, 1, 0
      %v5163 = vadd.s32 %v5159, %v5155
      %v5164 = vadd.s32 %v5160, %v5162
      %v5165 = vadd.s32 %v5164, %v5154
      %v5166 = vadd.s32 %v5165, %v5156
      %v5167 = vmul.u32 %v5122, %v5113
      %v5168 = vadd.s32 %v5144, %v5163
      %vm5169 = vc.u32 %v5144, %v5163
      %v5170 = vadd.s32 %v5166, 1
      %v5171 = vsel %vm5169, %v5170, %v5166
      %v5172 = vadd.s32 %v5167, %v5171
      %v5173 = vadd.s32 %v5172, 536870912
      %v5174 = vshrl.u32 %v5173, 30
      %v5175 = vshll.u32 %v5174, 30
      %v5176 = vsub.s32 %v5172, %v5175
      %vm5177 = vcmp.lt.s32.totalorder %v5176, 0
      %v5178 = vsub.s32 0, %v5176
      %v5179 = vsel %vm5177, %v5178, %v5176
      %v5180 = vclz %v5179
      %v5181 = vsub.s32 %v5180, 2
      %vm5182 = vcmp.gt.s32.totalorder 0, %v5181
      %v5183 = vsel %vm5182, 0, %v5181
      %v5184 = vsub.s32 32, %v5183
      %v5185 = vshll.u32 %v5176, %v5183
      %v5186 = vshrl.u32 %v5168, %v5184
      %v5187 = vor.u32 %v5185, %v5186
      %v5188 = vsub.s32 4294967266, %v5183
      %v5189 = vadd.s32 %v5188, 127
      %v5190 = vshll.u32 %v5189, 23
      %v5191 = vor.u32 4788187, %v5190
      %v5192 = vand.u32 2147483647, %v5191
      %v5194 = vcvt.s32.f32 %v5187
      %v5195 = vmul.f32 %v5194, %v5192
      %v5196 = vxor.u32 %v5195, 2147483648
      %v5197 = vsel %vm5076, %v5196, %v5195
      %v5198 = vsub.s32 4, %v5174
      %v5199 = vsel %vm5076, %v5198, %v5174
      %v5200 = vsel %vm5075, %v416, %v5197
      %v5201 = vsel %vm5075, 0, %v5199
      %v5202 = vmul.f32 %v5200, %v5200
      %v5203 = vmul.f32 %v5202, -0.001358992
      %v5204 = vadd.f32 %v5203, 0.041655596
      %v5205 = vmul.f32 %v5202, %v5204
      %v5206 = vadd.f32 %v5205, -0.4999988
      %v5207 = vmul.f32 %v5202, %v5206
      %v5208 = vadd.f32 1.0, %v5207
      %v5209 = vmul.f32 %v5200, %v5200
      %v5210 = vmul.f32 %v5209, -0.00019511016
      %v5211 = vadd.f32 %v5210, 0.008332121
      %v5212 = vmul.f32 %v5209, %v5211
      %v5213 = vadd.f32 %v5212, -0.16666654
      %v5214 = vmul.f32 %v5209, %v5213
      %v5215 = vadd.f32 %v5214, 1.0
      %v5216 = vmul.f32 %v5215, %v5200
      %vm5217 = vweird.f32 %v416
      %v5218 = vadd.s32 %v5201, 3
      %v5219 = vand.u32 %v5218, 3
      %vm5220 = vcmp.lt.s32.totalorder %v5219, 2
      %vm5221 = vcmp.eq.s32.totalorder %v5219, 0
      %v5222 = vxor.u32 %v5216, 2147483648
      %v5223 = vsel %vm5221, %v5208, %v5222
      %vm5224 = vcmp.eq.s32.totalorder %v5219, 2
      %v5225 = vxor.u32 %v5208, 2147483648
      %v5226 = vsel %vm5224, %v5225, %v5216
      %v5227 = vsel %vm5220, %v5223, %v5226
      %v5228 = vsel %vm5217, nan, %v5227
      %v5229 = vand.u32 2147483647, %v419
      %vm5230 = vcmp.le.f32.partialorder %v5229, 0.7853982
      %vm5231 = vcmp.lt.s32.totalorder %v419, 0
      %v5232 = vand.u32 %v419, 2139095040
      %v5233 = vshrl.u32 %v5232, 23
      %v5234 = vsub.s32 %v5233, 127
      %v5235 = vand.u32 2147483647, %v419
      %v5236 = vand.u32 %v5235, 8388607
      %v5237 = vor.u32 %v5236, 8388608
      %v5238 = vsub.s32 0, %v5237
      %v5239 = vadd.s32 %v5234, 1
      %vm5240 = vcmp.gt.s32.totalorder %v5239, 0
      %v5241 = vsel %vm5240, %v5239, 0
      %v5242 = vshrl.u32 %v5241, 5
      %v5243 = vand.u32 %v5241, 31
      %v5244 = vsub.s32 32, %v5243
      %v5245 = vshrl.u32 683565275, %v5244
      %v5246 = vshll.u32 683565275, %v5243
      %v5247 = vshrl.u32 2475754826, %v5244
      %v5248 = vor.u32 %v5246, %v5247
      %v5249 = vshll.u32 2475754826, %v5243
      %v5250 = vshrl.u32 2131351028, %v5244
      %v5251 = vor.u32 %v5249, %v5250
      %v5252 = vshll.u32 2131351028, %v5243
      %v5253 = vshrl.u32 2102212464, %v5244
      %v5254 = vor.u32 %v5252, %v5253
      %v5255 = vshll.u32 2102212464, %v5243
      %v5256 = vshrl.u32 920167782, %v5244
      %v5257 = vor.u32 %v5255, %v5256
      %v5258 = vshll.u32 920167782, %v5243
      %v5259 = vshrl.u32 1326507024, %v5244
      %v5260 = vor.u32 %v5258, %v5259
      %vm5261 = vcmp.lt.s32.totalorder %v5242, 1
      %vm5262 = vcmp.lt.s32.totalorder %v5242, 2
      %vm5263 = vcmp.lt.s32.totalorder %v5242, 3
      %vm5264 = vcmp.lt.s32.totalorder %v5242, 4
      %v5265 = vsel %vm5261, %v5245, %v5248
      %v5266 = vsel %vm5264, %v5254, 2102212464
      %v5267 = vsel %vm5263, %v5251, %v5266
      %v5268 = vsel %vm5262, %v5265, %v5267
      %v5269 = vsel %vm5261, %v5248, %v5251
      %v5270 = vsel %vm5264, %v5257, 920167782
      %v5271 = vsel %vm5263, %v5254, %v5270
      %v5272 = vsel %vm5262, %v5269, %v5271
      %v5273 = vsel %vm5261, %v5251, %v5254
      %v5274 = vsel %vm5264, %v5260, 1326507024
      %v5275 = vsel %vm5263, %v5257, %v5274
      %v5276 = vsel %vm5262, %v5273, %v5275
      %v5277 = vshll.u32 %v5237, 8
      %v5278 = vand.u32 %v5277, 65535
      %v5279 = vshrl.u32 %v5277, 16
      %v5280 = vand.u32 %v5276, 65535
      %v5281 = vshrl.u32 %v5276, 16
      %v5282 = vmul.u32 %v5278, %v5280
      %v5283 = vmul.u32 %v5278, %v5281
      %v5284 = vmul.u32 %v5279, %v5280
      %v5285 = vmul.u32 %v5279, %v5281
      %v5286 = vshll.u32 %v5283, 16
      %v5287 = vshrl.u32 %v5283, 16
      %v5288 = vshll.u32 %v5284, 16
      %v5289 = vshrl.u32 %v5284, 16
      %vm5290 = vc.u32 %v5282, %v5286
      %v5291 = vsel %vm5290, 1, 0
      %v5292 = vadd.s32 %v5282, %v5286
      %v5293 = vadd.s32 %v5285, %v5291
      %vm5294 = vc.u32 %v5292, %v5288
      %v5295 = vsel %vm5294, 1, 0
      %v5296 = vadd.s32 %v5292, %v5288
      %v5297 = vadd.s32 %v5293, %v5295
      %v5298 = vadd.s32 %v5297, %v5287
      %v5299 = vadd.s32 %v5298, %v5289
      %v5300 = vand.u32 %v5277, 65535
      %v5301 = vshrl.u32 %v5277, 16
      %v5302 = vand.u32 %v5272, 65535
      %v5303 = vshrl.u32 %v5272, 16
      %v5304 = vmul.u32 %v5300, %v5302
      %v5305 = vmul.u32 %v5300, %v5303
      %v5306 = vmul.u32 %v5301, %v5302
      %v5307 = vmul.u32 %v5301, %v5303
      %v5308 = vshll.u32 %v5305, 16
      %v5309 = vshrl.u32 %v5305, 16
      %v5310 = vshll.u32 %v5306, 16
      %v5311 = vshrl.u32 %v5306, 16
      %vm5312 = vc.u32 %v5304, %v5308
      %v5313 = vsel %vm5312, 1, 0
      %v5314 = vadd.s32 %v5304, %v5308
      %v5315 = vadd.s32 %v5307, %v5313
      %vm5316 = vc.u32 %v5314, %v5310
      %v5317 = vsel %vm5316, 1, 0
      %v5318 = vadd.s32 %v5314, %v5310
      %v5319 = vadd.s32 %v5315, %v5317
      %v5320 = vadd.s32 %v5319, %v5309
      %v5321 = vadd.s32 %v5320, %v5311
      %v5322 = vmul.u32 %v5277, %v5268
      %v5323 = vadd.s32 %v5299, %v5318
      %vm5324 = vc.u32 %v5299, %v5318
      %v5325 = vadd.s32 %v5321, 1
      %v5326 = vsel %vm5324, %v5325, %v5321
      %v5327 = vadd.s32 %v5322, %v5326
      %v5328 = vadd.s32 %v5327, 536870912
      %v5329 = vshrl.u32 %v5328, 30
      %v5330 = vshll.u32 %v5329, 30
      %v5331 = vsub.s32 %v5327, %v5330
      %vm5332 = vcmp.lt.s32.totalorder %v5331, 0
      %v5333 = vsub.s32 0, %v5331
      %v5334 = vsel %vm5332, %v5333, %v5331
      %v5335 = vclz %v5334
      %v5336 = vsub.s32 %v5335, 2
      %vm5337 = vcmp.gt.s32.totalorder 0, %v5336
      %v5338 = vsel %vm5337, 0, %v5336
      %v5339 = vsub.s32 32, %v5338
      %v5340 = vshll.u32 %v5331, %v5338
      %v5341 = vshrl.u32 %v5323, %v5339
      %v5342 = vor.u32 %v5340, %v5341
      %v5343 = vsub.s32 4294967266, %v5338
      %v5344 = vadd.s32 %v5343, 127
      %v5345 = vshll.u32 %v5344, 23
      %v5346 = vor.u32 4788187, %v5345
      %v5347 = vand.u32 2147483647, %v5346
      %v5349 = vcvt.s32.f32 %v5342
      %v5350 = vmul.f32 %v5349, %v5347
      %v5351 = vxor.u32 %v5350, 2147483648
      %v5352 = vsel %vm5231, %v5351, %v5350
      %v5353 = vsub.s32 4, %v5329
      %v5354 = vsel %vm5231, %v5353, %v5329
      %v5355 = vsel %vm5230, %v419, %v5352
      %v5356 = vsel %vm5230, 0, %v5354
      %v5357 = vmul.f32 %v5355, %v5355
      %v5358 = vmul.f32 %v5357, -0.001358992
      %v5359 = vadd.f32 %v5358, 0.041655596
      %v5360 = vmul.f32 %v5357, %v5359
      %v5361 = vadd.f32 %v5360, -0.4999988
      %v5362 = vmul.f32 %v5357, %v5361
      %v5363 = vadd.f32 1.0, %v5362
      %v5364 = vmul.f32 %v5355, %v5355
      %v5365 = vmul.f32 %v5364, -0.00019511016
      %v5366 = vadd.f32 %v5365, 0.008332121
      %v5367 = vmul.f32 %v5364, %v5366
      %v5368 = vadd.f32 %v5367, -0.16666654
      %v5369 = vmul.f32 %v5364, %v5368
      %v5370 = vadd.f32 %v5369, 1.0
      %v5371 = vmul.f32 %v5370, %v5355
      %vm5372 = vweird.f32 %v419
      %v5373 = vadd.s32 %v5356, 3
      %v5374 = vand.u32 %v5373, 3
      %vm5375 = vcmp.lt.s32.totalorder %v5374, 2
      %vm5376 = vcmp.eq.s32.totalorder %v5374, 0
      %v5377 = vxor.u32 %v5371, 2147483648
      %v5378 = vsel %vm5376, %v5363, %v5377
      %vm5379 = vcmp.eq.s32.totalorder %v5374, 2
      %v5380 = vxor.u32 %v5363, 2147483648
      %v5381 = vsel %vm5379, %v5380, %v5371
      %v5382 = vsel %vm5375, %v5378, %v5381
      %v5383 = vsel %vm5372, nan, %v5382
      %v5384 = vsel %vm423, %v326, %v578
      %v5385 = vsel %vm423, %v329, %v733
      %v5386 = vsel %vm423, %v332, %v888
      %v5387 = vsel %vm423, %v335, %v1043
      %v5388 = vsel %vm423, %v338, %v1198
      %v5389 = vsel %vm423, %v341, %v1353
      %v5390 = vsel %vm423, %v344, %v1508
      %v5391 = vsel %vm423, %v347, %v1663
      %v5392 = vsel %vm423, %v350, %v1818
      %v5393 = vsel %vm423, %v353, %v1973
      %v5394 = vsel %vm423, %v356, %v2128
      %v5395 = vsel %vm423, %v359, %v2283
      %v5396 = vsel %vm423, %v362, %v2438
      %v5397 = vsel %vm423, %v365, %v2593
      %v5398 = vsel %vm423, %v368, %v2748
      %v5399 = vsel %vm423, %v371, %v2903
      %v5400 = vsel %vm423, %v374, %v3058
      %v5401 = vsel %vm423, %v377, %v3213
      %v5402 = vsel %vm423, %v380, %v3368
      %v5403 = vsel %vm423, %v383, %v3523
      %v5404 = vsel %vm423, %v386, %v3678
      %v5405 = vsel %vm423, %v389, %v3833
      %v5406 = vsel %vm423, %v392, %v3988
      %v5407 = vsel %vm423, %v395, %v4143
      %v5408 = vsel %vm423, %v398, %v4298
      %v5409 = vsel %vm423, %v401, %v4453
      %v5410 = vsel %vm423, %v404, %v4608
      %v5411 = vsel %vm423, %v407, %v4763
      %v5412 = vsel %vm423, %v410, %v4918
      %v5413 = vsel %vm423, %v413, %v5073
      %v5414 = vsel %vm423, %v416, %v5228
      %v5415 = vsel %vm423, %v419, %v5383
      %vm5416 = vcmask 515072
      %5417 = vst.msk [vmem:[%s172] sm:$0xff] %vm5416, %v5384
      %5418 = vst.msk [vmem:[%s172 + $0x8] sm:$0xff] %vm5416, %v5385
      %5419 = vst.msk [vmem:[%s172 + $0x10] sm:$0xff] %vm5416, %v5386
      %5420 = vst.msk [vmem:[%s172 + $0x18] sm:$0xff] %vm5416, %v5387
      %5421 = vst.msk [vmem:[%s172 + $0x20] sm:$0xff] %vm5416, %v5388
      %5422 = vst.msk [vmem:[%s172 + $0x28] sm:$0xff] %vm5416, %v5389
      %5423 = vst.msk [vmem:[%s172 + $0x30] sm:$0xff] %vm5416, %v5390
      %5424 = vst.msk [vmem:[%s172 + $0x38] sm:$0xff] %vm5416, %v5391
      %5425 = vst.msk [vmem:[%s172 + $0x40] sm:$0xff] %vm5416, %v5392
      %5426 = vst.msk [vmem:[%s172 + $0x48] sm:$0xff] %vm5416, %v5393
      %5427 = vst.msk [vmem:[%s172 + $0x50] sm:$0xff] %vm5416, %v5394
      %5428 = vst.msk [vmem:[%s172 + $0x58] sm:$0xff] %vm5416, %v5395
      %5429 = vst.msk [vmem:[%s172 + $0x60] sm:$0xff] %vm5416, %v5396
      %5430 = vst.msk [vmem:[%s172 + $0x68] sm:$0xff] %vm5416, %v5397
      %5431 = vst.msk [vmem:[%s172 + $0x70] sm:$0xff] %vm5416, %v5398
      %5432 = vst.msk [vmem:[%s172 + $0x78] sm:$0xff] %vm5416, %v5399
      %5433 = vst.msk [vmem:[%s172 + $0x80] sm:$0xff] %vm5416, %v5400
      %5434 = vst.msk [vmem:[%s172 + $0x88] sm:$0xff] %vm5416, %v5401
      %5435 = vst.msk [vmem:[%s172 + $0x90] sm:$0xff] %vm5416, %v5402
      %5436 = vst.msk [vmem:[%s172 + $0x98] sm:$0xff] %vm5416, %v5403
      %5437 = vst.msk [vmem:[%s172 + $0xa0] sm:$0xff] %vm5416, %v5404
      %5438 = vst.msk [vmem:[%s172 + $0xa8] sm:$0xff] %vm5416, %v5405
      %5439 = vst.msk [vmem:[%s172 + $0xb0] sm:$0xff] %vm5416, %v5406
      %5440 = vst.msk [vmem:[%s172 + $0xb8] sm:$0xff] %vm5416, %v5407
      %5441 = vst.msk [vmem:[%s172 + $0xc0] sm:$0xff] %vm5416, %v5408
      %5442 = vst.msk [vmem:[%s172 + $0xc8] sm:$0xff] %vm5416, %v5409
      %5443 = vst.msk [vmem:[%s172 + $0xd0] sm:$0xff] %vm5416, %v5410
      %5444 = vst.msk [vmem:[%s172 + $0xd8] sm:$0xff] %vm5416, %v5411
      %5445 = vst.msk [vmem:[%s172 + $0xe0] sm:$0xff] %vm5416, %v5412
      %5446 = vst.msk [vmem:[%s172 + $0xe8] sm:$0xff] %vm5416, %v5413
      %5447 = vst.msk [vmem:[%s172 + $0xf0] sm:$0xff] %vm5416, %v5414
      %5448 = vst.msk [vmem:[%s172 + $0xf8] sm:$0xff] %vm5416, %v5415
      %s5449 = smul.u32 32, %s14
      %p5450 = scmp.lt.s32.totalorder %s5449, 127
      %s5451 = scalar_select %p5450, %s5449, 127
      %s5452 = smul.addr %s5451, 8
      %s5453 = scalar_lea.vmem %s3, %s5452
      // Predicated region
      $region33: #{tpu_custom_call.1} parent=31 // pred_check
        %p5454 = pneg %p100
      $region34: #{tpu_custom_call.1} parent=31 // pred_check_branch
        %5456 = sbr.rel (%p5454) target = $region36
      $region35: #{tpu_custom_call.1} parent=31 // pred_region
        %s5457 = smul.u32 32, %s14
      $region36: #{tpu_custom_call.1} parent=31 // pred_fallthru
        _
    $region32: #{tpu_custom_call.1} parent=5 // pred_fallthru
      _
    %p5458 = scmp.le.s32.totalorder 2, %s9
    // Predicated region
    $region37: #{tpu_custom_call.1} parent=5 // pred_check
      %p5459 = pneg %p5458
    $region38: #{tpu_custom_call.1} parent=5 // pred_check_branch
      %5461 = sbr.rel (%p5459) target = $region40
    $region39: #{tpu_custom_call.1} parent=5 // pred_region
      %s5462 = ssub.s32 %s9, 2
      // Predicated region
      $region41: #{tpu_custom_call.1} parent=39 // pred_check
        %p5463 = pneg %p106
      $region42: #{tpu_custom_call.1} parent=39 // pred_check_branch
        %5465 = sbr.rel (%p5463) target = $region44
      $region43: #{tpu_custom_call.1} parent=39 // pred_region
        %s5466 = smul.u32 32, %s15
        %p5467 = scmp.lt.s32.totalorder %s5466, 127
        %s5468 = scalar_select %p5467, %s5466, 127
        %s5469 = smul.addr %s5468, 8
        %s5470 = scalar_lea.vmem %s3, %s5469
      $region44: #{tpu_custom_call.1} parent=39 // pred_fallthru
        _
    $region40: #{tpu_custom_call.1} parent=5 // pred_fallthru
      _
  $region6: #{tpu_custom_call.1} parent=0 // loop_footer
    %s13 = sadd.s32 1, %s9
  $region7: #{tpu_custom_call.1} parent=0 // loop_footer_branch
    %8 = sbr.rel target = $region3
  $region8: #{tpu_custom_call.1} parent=0 // loop_exit
    _

</llo_original>
